<compile_context>
chip_gen: v6e
topology: v6e:2x2x1
jax: 0.10.0
libtpu: 0.0.40
codegen_flags: <defaults>
</compile_context>

<pallas_src>
import functools

import jax
import jax.numpy as jnp
from jax.experimental import pallas as pl
from jax.experimental.pallas import tpu as pltpu


def _sa_kernel(w1_ref, b1_ref, w2_ref, b2_ref, cr_ref, x_ref, o_ref,
               *, K, P, H, W, C, CC):
    # w*_ref: (K*K,) conv weights in SMEM;  b*_ref: (1,) biases in SMEM
    # cr_ref: (2, HW) int32 [col, row*W] per flat position (VMEM)
    # x_ref / o_ref: (1, C, HW) lane-dense blocks for the current batch element
    HW = H * W
    n_chunks = C // CC
    unroll = n_chunks <= 8

    # ---- channel mean (dim=1 in NCHW), streamed over channel chunks ----------
    def _mean_body(i, acc):
        c0 = pl.multiple_of(i * CC, CC)
        chunk = x_ref[0, pl.ds(c0, CC), :].astype(jnp.float32)      # (CC, HW)
        return acc + jnp.sum(chunk, axis=0, keepdims=True)          # (1, HW)

    ssum = jax.lax.fori_loop(0, n_chunks, _mean_body,
                             jnp.zeros((1, HW), jnp.float32), unroll=unroll)
    avg = ssum * (1.0 / C)                                          # (1, HW)

    # ---- edge-validity masks for zero-padded KxK conv in the flat layout -----
    col = cr_ref[0:1, :]        # (1, HW) int32: w-index of each flat position
    row_base = cr_ref[1:2, :]   # (1, HW) int32: h*W of each flat position
    offs = tuple(range(-P, P + 1))
    col_ok = {b: (col >= -b) & (col <= (W - 1) - b) for b in offs}
    row_ok = {a: (row_base >= -a * W) & (row_base <= (HW - W) - a * W)
              for a in offs}

    def conv_kxk(plane, w_ref, b_ref):
        # Zero-padded KxK conv as sum over taps:  out[f] = bias +
        #   sum_{a,b} w[a+P,b+P] * plane[f + a*W + b] * valid(a,b)
        # Each tap is a static lane rotation (XLU) + edge mask + scalar FMA.
        acc = jnp.full((1, HW), b_ref[0], dtype=jnp.float32)
        for ai, a in enumerate(offs):
            for bi, b in enumerate(offs):
                d = a * W + b
                if d == 0:
                    shifted = plane
                else:
                    shifted = pltpu.roll(plane, shift=(-d) % HW, axis=1)
                tap = jnp.where(row_ok[a] & col_ok[b], shifted, 0.0)
                acc = acc + w_ref[ai * K + bi] * tap
        return acc

    h1 = jnp.maximum(conv_kxk(avg, w1_ref, b1_ref), 0.0)            # ReLU
    att = jax.nn.sigmoid(conv_kxk(h1, w2_ref, b2_ref))              # (1, HW)
    scale = att + 1.0                                               # x*y + x = x*(y+1)

    # ---- apply x * (1 + y), streamed per channel chunk (lane-dense stores) ---
    def _apply_body(i, carry):
        c0 = pl.multiple_of(i * CC, CC)
        chunk = x_ref[0, pl.ds(c0, CC), :].astype(jnp.float32)      # (CC, HW)
        o_ref[0, pl.ds(c0, CC), :] = (chunk * scale).astype(o_ref.dtype)
        return carry

    jax.lax.fori_loop(0, n_chunks, _apply_body, 0, unroll=unroll)


def sa_layer(x, w1, b1, w2, b2, *, kernel_size=7):
    """x: (B, C, H, W); w1/w2: (1, 1, K, K); b1/b2: (1,). Returns (B, C, H, W)."""
    assert kernel_size in (3, 7), "kernel size must be 3 or 7"
    K = kernel_size
    P = 3 if K == 7 else 1
    B, C, H, W = x.shape
    HW = H * W

    # Lane-dense layout: flatten spatial dims so the last (lane) dim is H*W.
    x_flat = x.reshape(B, C, HW)

    # Precomputed per-lane column index and row-base (h*W) for the conv masks
    # (avoids in-kernel integer div/mod).
    flat_idx = jnp.arange(HW, dtype=jnp.int32)
    col = flat_idx % W
    colrow = jnp.stack([col, flat_idx - col], axis=0)               # (2, HW)

    # Channel chunk used for streaming inside the kernel (largest divisor <= 8).
    CC = max(d for d in range(1, min(C, 8) + 1) if C % d == 0)

    kernel = functools.partial(_sa_kernel, K=K, P=P, H=H, W=W, C=C, CC=CC)

    smem = pl.BlockSpec(memory_space=pltpu.MemorySpace.SMEM)

    itemsize = jnp.dtype(x.dtype).itemsize
    cost = pl.CostEstimate(
        flops=int(B * HW * (2 * C + 4 * K * K + 1)),
        transcendentals=int(B * HW),
        bytes_accessed=int(2 * B * C * HW * itemsize
                           + B * 2 * HW * 4 + 2 * (K * K + 1) * 4),
    )

    out_flat = pl.pallas_call(
        kernel,
        out_shape=jax.ShapeDtypeStruct((B, C, HW), x.dtype),
        grid_spec=pltpu.PrefetchScalarGridSpec(
            num_scalar_prefetch=0,
            grid=(B,),
            in_specs=[
                smem,                                            # w1 (K*K,)
                smem,                                            # b1 (1,)
                smem,                                            # w2 (K*K,)
                smem,                                            # b2 (1,)
                pl.BlockSpec((2, HW), lambda b: (0, 0)),         # colrow
                pl.BlockSpec((1, C, HW), lambda b: (b, 0, 0)),   # x (lane-dense)
            ],
            out_specs=pl.BlockSpec((1, C, HW), lambda b: (b, 0, 0)),
        ),
        compiler_params=pltpu.CompilerParams(
            dimension_semantics=("parallel",),
            vmem_limit_bytes=32 * 1024 * 1024,
        ),
        cost_estimate=cost,
    )(w1.reshape(K * K), b1, w2.reshape(K * K), b2, colrow, x_flat)

    return out_flat.reshape(B, C, H, W)


def sa_layer_ref(x, w1, b1, w2, b2, *, kernel_size=7):
    P = 3 if kernel_size == 7 else 1
    avg = jnp.mean(x, axis=1, keepdims=True)
    dn = ("NCHW", "OIHW", "NCHW")
    y = jax.lax.conv_general_dilated(avg, w1, (1, 1), [(P, P), (P, P)],
                                     dimension_numbers=dn) + b1.reshape(1, 1, 1, 1)
    y = jnp.maximum(y, 0.0)
    y = jax.lax.conv_general_dilated(y, w2, (1, 1), [(P, P), (P, P)],
                                     dimension_numbers=dn) + b2.reshape(1, 1, 1, 1)
    y = jax.nn.sigmoid(y)
    return x * y + x


if __name__ == "__main__":
    key = jax.random.PRNGKey(0)
    kx, kw1, kb1, kw2, kb2 = jax.random.split(key, 5)

    B, C, H, W = 2, 4, 16, 16
    K = 7

    x = jax.random.normal(kx, (B, C, H, W), dtype=jnp.float32)
    # Deterministic parameter init (Conv2d(1,1,7,7) weight/bias shapes).
    fan_in = 1 * K * K
    bound = 1.0 / (fan_in ** 0.5)
    w1 = jax.random.uniform(kw1, (1, 1, K, K), jnp.float32, -bound, bound)
    b1 = jax.random.uniform(kb1, (1,), jnp.float32, -bound, bound)
    w2 = jax.random.uniform(kw2, (1, 1, K, K), jnp.float32, -bound, bound)
    b2 = jax.random.uniform(kb2, (1,), jnp.float32, -bound, bound)

    out = sa_layer(x, w1, b1, w2, b2, kernel_size=K)
    out = jax.block_until_ready(out)

    ref = sa_layer_ref(x, w1, b1, w2, b2, kernel_size=K)
    assert out.shape == x.shape and out.dtype == x.dtype
    assert jnp.allclose(out, ref, atol=1e-5, rtol=1e-5), "mismatch vs reference"

    print("KERNEL_OK")
</pallas_src>

<mosaic_0001>
module attributes {stable_mosaic.version = 11 : i64} {
  func.func @_sa_kernel(%arg0: i32, %arg1: memref<49xf32, #tpu.memory_space<smem>>, %arg2: memref<1xf32, #tpu.memory_space<smem>>, %arg3: memref<49xf32, #tpu.memory_space<smem>>, %arg4: memref<1xf32, #tpu.memory_space<smem>>, %arg5: memref<2x256xi32, #tpu.memory_space<vmem>>, %arg6: memref<1x4x256xf32, #tpu.memory_space<vmem>>, %arg7: memref<1x4x256xf32, #tpu.memory_space<vmem>>) attributes {dimension_semantics = [#tpu.dimension_semantics<parallel>], iteration_bounds = array<i64: 2>, scalar_prefetch = 0 : i64, scratch_operands = 0 : i64, tpu.core_type = #tpu.core_type<tc>, window_params = [{transform_indices = @transform_0, window_bounds = array<i64: 49>}, {transform_indices = @transform_1, window_bounds = array<i64: 1>}, {transform_indices = @transform_2, window_bounds = array<i64: 49>}, {transform_indices = @transform_3, window_bounds = array<i64: 1>}, {pipeline_mode = #tpu.pipeline_mode<synchronous>, transform_indices = @transform_4, window_bounds = array<i64: 2, 256>}, {transform_indices = @transform_5, window_bounds = array<i64: 1, 4, 256>}, {transform_indices = @transform_6, window_bounds = array<i64: 1, 4, 256>}]} {
    %cst = arith.constant 0.000000e+00 : f32
    %0 = vector.broadcast %cst : f32 to vector<1x256xf32>
    %c0_i32 = arith.constant 0 : i32
    %c4_i32 = arith.constant 4 : i32
    %1 = arith.muli %c0_i32, %c4_i32 : i32
    %2 = tpu.assume_multiple %1, 4 : i32
    %c0 = arith.constant 0 : index
    %3 = arith.index_cast %2 : i32 to index
    %c0_0 = arith.constant 0 : index
    %4 = vector.load %arg6[%c0, %3, %c0_0] : memref<1x4x256xf32, #tpu.memory_space<vmem>>, vector<1x4x256xf32>
    %5 = vector.shape_cast %4 : vector<1x4x256xf32> to vector<4x256xf32>
    %cst_1 = arith.constant dense<0.000000e+00> : vector<256xf32>
    %6 = vector.multi_reduction <add>, %5, %cst_1 [0] : vector<4x256xf32> to vector<256xf32>
    %7 = vector.shape_cast %6 : vector<256xf32> to vector<1x256xf32>
    %8 = arith.addf %0, %7 : vector<1x256xf32>
    %c1_i32 = arith.constant 1 : i32
    %cst_2 = arith.constant 2.500000e-01 : f32
    %9 = vector.broadcast %cst_2 : f32 to vector<1x256xf32>
    %10 = arith.mulf %8, %9 : vector<1x256xf32>
    %c0_3 = arith.constant 0 : index
    %c0_4 = arith.constant 0 : index
    %11 = vector.load %arg5[%c0_3, %c0_4] : memref<2x256xi32, #tpu.memory_space<vmem>>, vector<1x256xi32>
    %c1 = arith.constant 1 : index
    %c0_5 = arith.constant 0 : index
    %12 = vector.load %arg5[%c1, %c0_5] : memref<2x256xi32, #tpu.memory_space<vmem>>, vector<1x256xi32>
    %c3_i32 = arith.constant 3 : i32
    %13 = vector.broadcast %c3_i32 : i32 to vector<1x256xi32>
    %14 = arith.cmpi sge, %11, %13 : vector<1x256xi32>
    %c18_i32 = arith.constant 18 : i32
    %15 = vector.broadcast %c18_i32 : i32 to vector<1x256xi32>
    %16 = arith.cmpi sle, %11, %15 : vector<1x256xi32>
    %17 = arith.andi %14, %16 : vector<1x256xi1>
    %c2_i32 = arith.constant 2 : i32
    %18 = vector.broadcast %c2_i32 : i32 to vector<1x256xi32>
    %19 = arith.cmpi sge, %11, %18 : vector<1x256xi32>
    %c17_i32 = arith.constant 17 : i32
    %20 = vector.broadcast %c17_i32 : i32 to vector<1x256xi32>
    %21 = arith.cmpi sle, %11, %20 : vector<1x256xi32>
    %22 = arith.andi %19, %21 : vector<1x256xi1>
    %c1_i32_6 = arith.constant 1 : i32
    %23 = vector.broadcast %c1_i32_6 : i32 to vector<1x256xi32>
    %24 = arith.cmpi sge, %11, %23 : vector<1x256xi32>
    %c16_i32 = arith.constant 16 : i32
    %25 = vector.broadcast %c16_i32 : i32 to vector<1x256xi32>
    %26 = arith.cmpi sle, %11, %25 : vector<1x256xi32>
    %27 = arith.andi %24, %26 : vector<1x256xi1>
    %c0_i32_7 = arith.constant 0 : i32
    %28 = vector.broadcast %c0_i32_7 : i32 to vector<1x256xi32>
    %29 = arith.cmpi sge, %11, %28 : vector<1x256xi32>
    %c15_i32 = arith.constant 15 : i32
    %30 = vector.broadcast %c15_i32 : i32 to vector<1x256xi32>
    %31 = arith.cmpi sle, %11, %30 : vector<1x256xi32>
    %32 = arith.andi %29, %31 : vector<1x256xi1>
    %c-1_i32 = arith.constant -1 : i32
    %33 = vector.broadcast %c-1_i32 : i32 to vector<1x256xi32>
    %34 = arith.cmpi sge, %11, %33 : vector<1x256xi32>
    %c14_i32 = arith.constant 14 : i32
    %35 = vector.broadcast %c14_i32 : i32 to vector<1x256xi32>
    %36 = arith.cmpi sle, %11, %35 : vector<1x256xi32>
    %37 = arith.andi %34, %36 : vector<1x256xi1>
    %c-2_i32 = arith.constant -2 : i32
    %38 = vector.broadcast %c-2_i32 : i32 to vector<1x256xi32>
    %39 = arith.cmpi sge, %11, %38 : vector<1x256xi32>
    %c13_i32 = arith.constant 13 : i32
    %40 = vector.broadcast %c13_i32 : i32 to vector<1x256xi32>
    %41 = arith.cmpi sle, %11, %40 : vector<1x256xi32>
    %42 = arith.andi %39, %41 : vector<1x256xi1>
    %c-3_i32 = arith.constant -3 : i32
    %43 = vector.broadcast %c-3_i32 : i32 to vector<1x256xi32>
    %44 = arith.cmpi sge, %11, %43 : vector<1x256xi32>
    %c12_i32 = arith.constant 12 : i32
    %45 = vector.broadcast %c12_i32 : i32 to vector<1x256xi32>
    %46 = arith.cmpi sle, %11, %45 : vector<1x256xi32>
    %47 = arith.andi %44, %46 : vector<1x256xi1>
    %c48_i32 = arith.constant 48 : i32
    %48 = vector.broadcast %c48_i32 : i32 to vector<1x256xi32>
    %49 = arith.cmpi sge, %12, %48 : vector<1x256xi32>
    %c288_i32 = arith.constant 288 : i32
    %50 = vector.broadcast %c288_i32 : i32 to vector<1x256xi32>
    %51 = arith.cmpi sle, %12, %50 : vector<1x256xi32>
    %52 = arith.andi %49, %51 : vector<1x256xi1>
    %c32_i32 = arith.constant 32 : i32
    %53 = vector.broadcast %c32_i32 : i32 to vector<1x256xi32>
    %54 = arith.cmpi sge, %12, %53 : vector<1x256xi32>
    %c272_i32 = arith.constant 272 : i32
    %55 = vector.broadcast %c272_i32 : i32 to vector<1x256xi32>
    %56 = arith.cmpi sle, %12, %55 : vector<1x256xi32>
    %57 = arith.andi %54, %56 : vector<1x256xi1>
    %c16_i32_8 = arith.constant 16 : i32
    %58 = vector.broadcast %c16_i32_8 : i32 to vector<1x256xi32>
    %59 = arith.cmpi sge, %12, %58 : vector<1x256xi32>
    %c256_i32 = arith.constant 256 : i32
    %60 = vector.broadcast %c256_i32 : i32 to vector<1x256xi32>
    %61 = arith.cmpi sle, %12, %60 : vector<1x256xi32>
    %62 = arith.andi %59, %61 : vector<1x256xi1>
    %c0_i32_9 = arith.constant 0 : i32
    %63 = vector.broadcast %c0_i32_9 : i32 to vector<1x256xi32>
    %64 = arith.cmpi sge, %12, %63 : vector<1x256xi32>
    %c240_i32 = arith.constant 240 : i32
    %65 = vector.broadcast %c240_i32 : i32 to vector<1x256xi32>
    %66 = arith.cmpi sle, %12, %65 : vector<1x256xi32>
    %67 = arith.andi %64, %66 : vector<1x256xi1>
    %c-16_i32 = arith.constant -16 : i32
    %68 = vector.broadcast %c-16_i32 : i32 to vector<1x256xi32>
    %69 = arith.cmpi sge, %12, %68 : vector<1x256xi32>
    %c224_i32 = arith.constant 224 : i32
    %70 = vector.broadcast %c224_i32 : i32 to vector<1x256xi32>
    %71 = arith.cmpi sle, %12, %70 : vector<1x256xi32>
    %72 = arith.andi %69, %71 : vector<1x256xi1>
    %c-32_i32 = arith.constant -32 : i32
    %73 = vector.broadcast %c-32_i32 : i32 to vector<1x256xi32>
    %74 = arith.cmpi sge, %12, %73 : vector<1x256xi32>
    %c208_i32 = arith.constant 208 : i32
    %75 = vector.broadcast %c208_i32 : i32 to vector<1x256xi32>
    %76 = arith.cmpi sle, %12, %75 : vector<1x256xi32>
    %77 = arith.andi %74, %76 : vector<1x256xi1>
    %c-48_i32 = arith.constant -48 : i32
    %78 = vector.broadcast %c-48_i32 : i32 to vector<1x256xi32>
    %79 = arith.cmpi sge, %12, %78 : vector<1x256xi32>
    %c192_i32 = arith.constant 192 : i32
    %80 = vector.broadcast %c192_i32 : i32 to vector<1x256xi32>
    %81 = arith.cmpi sle, %12, %80 : vector<1x256xi32>
    %82 = arith.andi %79, %81 : vector<1x256xi1>
    %c0_10 = arith.constant 0 : index
    %83 = memref.load %arg2[%c0_10] : memref<1xf32, #tpu.memory_space<smem>>
    %84 = vector.broadcast %83 : f32 to vector<1x256xf32>
    %c51_i32 = arith.constant 51 : i32
    %85 = tpu.dynamic_rotate %10 by %c51_i32 dim 1 : vector<1x256xf32>, i32 -> vector<1x256xf32>
    %86 = arith.andi %52, %17 : vector<1x256xi1>
    %cst_11 = arith.constant 0.000000e+00 : f32
    %87 = vector.broadcast %cst_11 : f32 to vector<1x256xf32>
    %88 = arith.select %86, %85, %87 : vector<1x256xi1>, vector<1x256xf32>
    %c0_12 = arith.constant 0 : index
    %89 = memref.load %arg1[%c0_12] : memref<49xf32, #tpu.memory_space<smem>>
    %90 = vector.broadcast %89 : f32 to vector<1x256xf32>
    %91 = arith.mulf %90, %88 : vector<1x256xf32>
    %92 = arith.addf %84, %91 : vector<1x256xf32>
    %c50_i32 = arith.constant 50 : i32
    %93 = tpu.dynamic_rotate %10 by %c50_i32 dim 1 : vector<1x256xf32>, i32 -> vector<1x256xf32>
    %94 = arith.andi %52, %22 : vector<1x256xi1>
    %cst_13 = arith.constant 0.000000e+00 : f32
    %95 = vector.broadcast %cst_13 : f32 to vector<1x256xf32>
    %96 = arith.select %94, %93, %95 : vector<1x256xi1>, vector<1x256xf32>
    %c1_14 = arith.constant 1 : index
    %97 = memref.load %arg1[%c1_14] : memref<49xf32, #tpu.memory_space<smem>>
    %98 = vector.broadcast %97 : f32 to vector<1x256xf32>
    %99 = arith.mulf %98, %96 : vector<1x256xf32>
    %100 = arith.addf %92, %99 : vector<1x256xf32>
    %c49_i32 = arith.constant 49 : i32
    %101 = tpu.dynamic_rotate %10 by %c49_i32 dim 1 : vector<1x256xf32>, i32 -> vector<1x256xf32>
    %102 = arith.andi %52, %27 : vector<1x256xi1>
    %cst_15 = arith.constant 0.000000e+00 : f32
    %103 = vector.broadcast %cst_15 : f32 to vector<1x256xf32>
    %104 = arith.select %102, %101, %103 : vector<1x256xi1>, vector<1x256xf32>
    %c2 = arith.constant 2 : index
    %105 = memref.load %arg1[%c2] : memref<49xf32, #tpu.memory_space<smem>>
    %106 = vector.broadcast %105 : f32 to vector<1x256xf32>
    %107 = arith.mulf %106, %104 : vector<1x256xf32>
    %108 = arith.addf %100, %107 : vector<1x256xf32>
    %c48_i32_16 = arith.constant 48 : i32
    %109 = tpu.dynamic_rotate %10 by %c48_i32_16 dim 1 : vector<1x256xf32>, i32 -> vector<1x256xf32>
    %110 = arith.andi %52, %32 : vector<1x256xi1>
    %cst_17 = arith.constant 0.000000e+00 : f32
    %111 = vector.broadcast %cst_17 : f32 to vector<1x256xf32>
    %112 = arith.select %110, %109, %111 : vector<1x256xi1>, vector<1x256xf32>
    %c3 = arith.constant 3 : index
    %113 = memref.load %arg1[%c3] : memref<49xf32, #tpu.memory_space<smem>>
    %114 = vector.broadcast %113 : f32 to vector<1x256xf32>
    %115 = arith.mulf %114, %112 : vector<1x256xf32>
    %116 = arith.addf %108, %115 : vector<1x256xf32>
    %c47_i32 = arith.constant 47 : i32
    %117 = tpu.dynamic_rotate %10 by %c47_i32 dim 1 : vector<1x256xf32>, i32 -> vector<1x256xf32>
    %118 = arith.andi %52, %37 : vector<1x256xi1>
    %cst_18 = arith.constant 0.000000e+00 : f32
    %119 = vector.broadcast %cst_18 : f32 to vector<1x256xf32>
    %120 = arith.select %118, %117, %119 : vector<1x256xi1>, vector<1x256xf32>
    %c4 = arith.constant 4 : index
    %121 = memref.load %arg1[%c4] : memref<49xf32, #tpu.memory_space<smem>>
    %122 = vector.broadcast %121 : f32 to vector<1x256xf32>
    %123 = arith.mulf %122, %120 : vector<1x256xf32>
    %124 = arith.addf %116, %123 : vector<1x256xf32>
    %c46_i32 = arith.constant 46 : i32
    %125 = tpu.dynamic_rotate %10 by %c46_i32 dim 1 : vector<1x256xf32>, i32 -> vector<1x256xf32>
    %126 = arith.andi %52, %42 : vector<1x256xi1>
    %cst_19 = arith.constant 0.000000e+00 : f32
    %127 = vector.broadcast %cst_19 : f32 to vector<1x256xf32>
    %128 = arith.select %126, %125, %127 : vector<1x256xi1>, vector<1x256xf32>
    %c5 = arith.constant 5 : index
    %129 = memref.load %arg1[%c5] : memref<49xf32, #tpu.memory_space<smem>>
    %130 = vector.broadcast %129 : f32 to vector<1x256xf32>
    %131 = arith.mulf %130, %128 : vector<1x256xf32>
    %132 = arith.addf %124, %131 : vector<1x256xf32>
    %c45_i32 = arith.constant 45 : i32
    %133 = tpu.dynamic_rotate %10 by %c45_i32 dim 1 : vector<1x256xf32>, i32 -> vector<1x256xf32>
    %134 = arith.andi %52, %47 : vector<1x256xi1>
    %cst_20 = arith.constant 0.000000e+00 : f32
    %135 = vector.broadcast %cst_20 : f32 to vector<1x256xf32>
    %136 = arith.select %134, %133, %135 : vector<1x256xi1>, vector<1x256xf32>
    %c6 = arith.constant 6 : index
    %137 = memref.load %arg1[%c6] : memref<49xf32, #tpu.memory_space<smem>>
    %138 = vector.broadcast %137 : f32 to vector<1x256xf32>
    %139 = arith.mulf %138, %136 : vector<1x256xf32>
    %140 = arith.addf %132, %139 : vector<1x256xf32>
    %c35_i32 = arith.constant 35 : i32
    %141 = tpu.dynamic_rotate %10 by %c35_i32 dim 1 : vector<1x256xf32>, i32 -> vector<1x256xf32>
    %142 = arith.andi %57, %17 : vector<1x256xi1>
    %cst_21 = arith.constant 0.000000e+00 : f32
    %143 = vector.broadcast %cst_21 : f32 to vector<1x256xf32>
    %144 = arith.select %142, %141, %143 : vector<1x256xi1>, vector<1x256xf32>
    %c7 = arith.constant 7 : index
    %145 = memref.load %arg1[%c7] : memref<49xf32, #tpu.memory_space<smem>>
    %146 = vector.broadcast %145 : f32 to vector<1x256xf32>
    %147 = arith.mulf %146, %144 : vector<1x256xf32>
    %148 = arith.addf %140, %147 : vector<1x256xf32>
    %c34_i32 = arith.constant 34 : i32
    %149 = tpu.dynamic_rotate %10 by %c34_i32 dim 1 : vector<1x256xf32>, i32 -> vector<1x256xf32>
    %150 = arith.andi %57, %22 : vector<1x256xi1>
    %cst_22 = arith.constant 0.000000e+00 : f32
    %151 = vector.broadcast %cst_22 : f32 to vector<1x256xf32>
    %152 = arith.select %150, %149, %151 : vector<1x256xi1>, vector<1x256xf32>
    %c8 = arith.constant 8 : index
    %153 = memref.load %arg1[%c8] : memref<49xf32, #tpu.memory_space<smem>>
    %154 = vector.broadcast %153 : f32 to vector<1x256xf32>
    %155 = arith.mulf %154, %152 : vector<1x256xf32>
    %156 = arith.addf %148, %155 : vector<1x256xf32>
    %c33_i32 = arith.constant 33 : i32
    %157 = tpu.dynamic_rotate %10 by %c33_i32 dim 1 : vector<1x256xf32>, i32 -> vector<1x256xf32>
    %158 = arith.andi %57, %27 : vector<1x256xi1>
    %cst_23 = arith.constant 0.000000e+00 : f32
    %159 = vector.broadcast %cst_23 : f32 to vector<1x256xf32>
    %160 = arith.select %158, %157, %159 : vector<1x256xi1>, vector<1x256xf32>
    %c9 = arith.constant 9 : index
    %161 = memref.load %arg1[%c9] : memref<49xf32, #tpu.memory_space<smem>>
    %162 = vector.broadcast %161 : f32 to vector<1x256xf32>
    %163 = arith.mulf %162, %160 : vector<1x256xf32>
    %164 = arith.addf %156, %163 : vector<1x256xf32>
    %c32_i32_24 = arith.constant 32 : i32
    %165 = tpu.dynamic_rotate %10 by %c32_i32_24 dim 1 : vector<1x256xf32>, i32 -> vector<1x256xf32>
    %166 = arith.andi %57, %32 : vector<1x256xi1>
    %cst_25 = arith.constant 0.000000e+00 : f32
    %167 = vector.broadcast %cst_25 : f32 to vector<1x256xf32>
    %168 = arith.select %166, %165, %167 : vector<1x256xi1>, vector<1x256xf32>
    %c10 = arith.constant 10 : index
    %169 = memref.load %arg1[%c10] : memref<49xf32, #tpu.memory_space<smem>>
    %170 = vector.broadcast %169 : f32 to vector<1x256xf32>
    %171 = arith.mulf %170, %168 : vector<1x256xf32>
    %172 = arith.addf %164, %171 : vector<1x256xf32>
    %c31_i32 = arith.constant 31 : i32
    %173 = tpu.dynamic_rotate %10 by %c31_i32 dim 1 : vector<1x256xf32>, i32 -> vector<1x256xf32>
    %174 = arith.andi %57, %37 : vector<1x256xi1>
    %cst_26 = arith.constant 0.000000e+00 : f32
    %175 = vector.broadcast %cst_26 : f32 to vector<1x256xf32>
    %176 = arith.select %174, %173, %175 : vector<1x256xi1>, vector<1x256xf32>
    %c11 = arith.constant 11 : index
    %177 = memref.load %arg1[%c11] : memref<49xf32, #tpu.memory_space<smem>>
    %178 = vector.broadcast %177 : f32 to vector<1x256xf32>
    %179 = arith.mulf %178, %176 : vector<1x256xf32>
    %180 = arith.addf %172, %179 : vector<1x256xf32>
    %c30_i32 = arith.constant 30 : i32
    %181 = tpu.dynamic_rotate %10 by %c30_i32 dim 1 : vector<1x256xf32>, i32 -> vector<1x256xf32>
    %182 = arith.andi %57, %42 : vector<1x256xi1>
    %cst_27 = arith.constant 0.000000e+00 : f32
    %183 = vector.broadcast %cst_27 : f32 to vector<1x256xf32>
    %184 = arith.select %182, %181, %183 : vector<1x256xi1>, vector<1x256xf32>
    %c12 = arith.constant 12 : index
    %185 = memref.load %arg1[%c12] : memref<49xf32, #tpu.memory_space<smem>>
    %186 = vector.broadcast %185 : f32 to vector<1x256xf32>
    %187 = arith.mulf %186, %184 : vector<1x256xf32>
    %188 = arith.addf %180, %187 : vector<1x256xf32>
    %c29_i32 = arith.constant 29 : i32
    %189 = tpu.dynamic_rotate %10 by %c29_i32 dim 1 : vector<1x256xf32>, i32 -> vector<1x256xf32>
    %190 = arith.andi %57, %47 : vector<1x256xi1>
    %cst_28 = arith.constant 0.000000e+00 : f32
    %191 = vector.broadcast %cst_28 : f32 to vector<1x256xf32>
    %192 = arith.select %190, %189, %191 : vector<1x256xi1>, vector<1x256xf32>
    %c13 = arith.constant 13 : index
    %193 = memref.load %arg1[%c13] : memref<49xf32, #tpu.memory_space<smem>>
    %194 = vector.broadcast %193 : f32 to vector<1x256xf32>
    %195 = arith.mulf %194, %192 : vector<1x256xf32>
    %196 = arith.addf %188, %195 : vector<1x256xf32>
    %c19_i32 = arith.constant 19 : i32
    %197 = tpu.dynamic_rotate %10 by %c19_i32 dim 1 : vector<1x256xf32>, i32 -> vector<1x256xf32>
    %198 = arith.andi %62, %17 : vector<1x256xi1>
    %cst_29 = arith.constant 0.000000e+00 : f32
    %199 = vector.broadcast %cst_29 : f32 to vector<1x256xf32>
    %200 = arith.select %198, %197, %199 : vector<1x256xi1>, vector<1x256xf32>
    %c14 = arith.constant 14 : index
    %201 = memref.load %arg1[%c14] : memref<49xf32, #tpu.memory_space<smem>>
    %202 = vector.broadcast %201 : f32 to vector<1x256xf32>
    %203 = arith.mulf %202, %200 : vector<1x256xf32>
    %204 = arith.addf %196, %203 : vector<1x256xf32>
    %c18_i32_30 = arith.constant 18 : i32
    %205 = tpu.dynamic_rotate %10 by %c18_i32_30 dim 1 : vector<1x256xf32>, i32 -> vector<1x256xf32>
    %206 = arith.andi %62, %22 : vector<1x256xi1>
    %cst_31 = arith.constant 0.000000e+00 : f32
    %207 = vector.broadcast %cst_31 : f32 to vector<1x256xf32>
    %208 = arith.select %206, %205, %207 : vector<1x256xi1>, vector<1x256xf32>
    %c15 = arith.constant 15 : index
    %209 = memref.load %arg1[%c15] : memref<49xf32, #tpu.memory_space<smem>>
    %210 = vector.broadcast %209 : f32 to vector<1x256xf32>
    %211 = arith.mulf %210, %208 : vector<1x256xf32>
    %212 = arith.addf %204, %211 : vector<1x256xf32>
    %c17_i32_32 = arith.constant 17 : i32
    %213 = tpu.dynamic_rotate %10 by %c17_i32_32 dim 1 : vector<1x256xf32>, i32 -> vector<1x256xf32>
    %214 = arith.andi %62, %27 : vector<1x256xi1>
    %cst_33 = arith.constant 0.000000e+00 : f32
    %215 = vector.broadcast %cst_33 : f32 to vector<1x256xf32>
    %216 = arith.select %214, %213, %215 : vector<1x256xi1>, vector<1x256xf32>
    %c16 = arith.constant 16 : index
    %217 = memref.load %arg1[%c16] : memref<49xf32, #tpu.memory_space<smem>>
    %218 = vector.broadcast %217 : f32 to vector<1x256xf32>
    %219 = arith.mulf %218, %216 : vector<1x256xf32>
    %220 = arith.addf %212, %219 : vector<1x256xf32>
    %c16_i32_34 = arith.constant 16 : i32
    %221 = tpu.dynamic_rotate %10 by %c16_i32_34 dim 1 : vector<1x256xf32>, i32 -> vector<1x256xf32>
    %222 = arith.andi %62, %32 : vector<1x256xi1>
    %cst_35 = arith.constant 0.000000e+00 : f32
    %223 = vector.broadcast %cst_35 : f32 to vector<1x256xf32>
    %224 = arith.select %222, %221, %223 : vector<1x256xi1>, vector<1x256xf32>
    %c17 = arith.constant 17 : index
    %225 = memref.load %arg1[%c17] : memref<49xf32, #tpu.memory_space<smem>>
    %226 = vector.broadcast %225 : f32 to vector<1x256xf32>
    %227 = arith.mulf %226, %224 : vector<1x256xf32>
    %228 = arith.addf %220, %227 : vector<1x256xf32>
    %c15_i32_36 = arith.constant 15 : i32
    %229 = tpu.dynamic_rotate %10 by %c15_i32_36 dim 1 : vector<1x256xf32>, i32 -> vector<1x256xf32>
    %230 = arith.andi %62, %37 : vector<1x256xi1>
    %cst_37 = arith.constant 0.000000e+00 : f32
    %231 = vector.broadcast %cst_37 : f32 to vector<1x256xf32>
    %232 = arith.select %230, %229, %231 : vector<1x256xi1>, vector<1x256xf32>
    %c18 = arith.constant 18 : index
    %233 = memref.load %arg1[%c18] : memref<49xf32, #tpu.memory_space<smem>>
    %234 = vector.broadcast %233 : f32 to vector<1x256xf32>
    %235 = arith.mulf %234, %232 : vector<1x256xf32>
    %236 = arith.addf %228, %235 : vector<1x256xf32>
    %c14_i32_38 = arith.constant 14 : i32
    %237 = tpu.dynamic_rotate %10 by %c14_i32_38 dim 1 : vector<1x256xf32>, i32 -> vector<1x256xf32>
    %238 = arith.andi %62, %42 : vector<1x256xi1>
    %cst_39 = arith.constant 0.000000e+00 : f32
    %239 = vector.broadcast %cst_39 : f32 to vector<1x256xf32>
    %240 = arith.select %238, %237, %239 : vector<1x256xi1>, vector<1x256xf32>
    %c19 = arith.constant 19 : index
    %241 = memref.load %arg1[%c19] : memref<49xf32, #tpu.memory_space<smem>>
    %242 = vector.broadcast %241 : f32 to vector<1x256xf32>
    %243 = arith.mulf %242, %240 : vector<1x256xf32>
    %244 = arith.addf %236, %243 : vector<1x256xf32>
    %c13_i32_40 = arith.constant 13 : i32
    %245 = tpu.dynamic_rotate %10 by %c13_i32_40 dim 1 : vector<1x256xf32>, i32 -> vector<1x256xf32>
    %246 = arith.andi %62, %47 : vector<1x256xi1>
    %cst_41 = arith.constant 0.000000e+00 : f32
    %247 = vector.broadcast %cst_41 : f32 to vector<1x256xf32>
    %248 = arith.select %246, %245, %247 : vector<1x256xi1>, vector<1x256xf32>
    %c20 = arith.constant 20 : index
    %249 = memref.load %arg1[%c20] : memref<49xf32, #tpu.memory_space<smem>>
    %250 = vector.broadcast %249 : f32 to vector<1x256xf32>
    %251 = arith.mulf %250, %248 : vector<1x256xf32>
    %252 = arith.addf %244, %251 : vector<1x256xf32>
    %c3_i32_42 = arith.constant 3 : i32
    %253 = tpu.dynamic_rotate %10 by %c3_i32_42 dim 1 : vector<1x256xf32>, i32 -> vector<1x256xf32>
    %254 = arith.andi %67, %17 : vector<1x256xi1>
    %cst_43 = arith.constant 0.000000e+00 : f32
    %255 = vector.broadcast %cst_43 : f32 to vector<1x256xf32>
    %256 = arith.select %254, %253, %255 : vector<1x256xi1>, vector<1x256xf32>
    %c21 = arith.constant 21 : index
    %257 = memref.load %arg1[%c21] : memref<49xf32, #tpu.memory_space<smem>>
    %258 = vector.broadcast %257 : f32 to vector<1x256xf32>
    %259 = arith.mulf %258, %256 : vector<1x256xf32>
    %260 = arith.addf %252, %259 : vector<1x256xf32>
    %c2_i32_44 = arith.constant 2 : i32
    %261 = tpu.dynamic_rotate %10 by %c2_i32_44 dim 1 : vector<1x256xf32>, i32 -> vector<1x256xf32>
    %262 = arith.andi %67, %22 : vector<1x256xi1>
    %cst_45 = arith.constant 0.000000e+00 : f32
    %263 = vector.broadcast %cst_45 : f32 to vector<1x256xf32>
    %264 = arith.select %262, %261, %263 : vector<1x256xi1>, vector<1x256xf32>
    %c22 = arith.constant 22 : index
    %265 = memref.load %arg1[%c22] : memref<49xf32, #tpu.memory_space<smem>>
    %266 = vector.broadcast %265 : f32 to vector<1x256xf32>
    %267 = arith.mulf %266, %264 : vector<1x256xf32>
    %268 = arith.addf %260, %267 : vector<1x256xf32>
    %c1_i32_46 = arith.constant 1 : i32
    %269 = tpu.dynamic_rotate %10 by %c1_i32_46 dim 1 : vector<1x256xf32>, i32 -> vector<1x256xf32>
    %270 = arith.andi %67, %27 : vector<1x256xi1>
    %cst_47 = arith.constant 0.000000e+00 : f32
    %271 = vector.broadcast %cst_47 : f32 to vector<1x256xf32>
    %272 = arith.select %270, %269, %271 : vector<1x256xi1>, vector<1x256xf32>
    %c23 = arith.constant 23 : index
    %273 = memref.load %arg1[%c23] : memref<49xf32, #tpu.memory_space<smem>>
    %274 = vector.broadcast %273 : f32 to vector<1x256xf32>
    %275 = arith.mulf %274, %272 : vector<1x256xf32>
    %276 = arith.addf %268, %275 : vector<1x256xf32>
    %277 = arith.andi %67, %32 : vector<1x256xi1>
    %cst_48 = arith.constant 0.000000e+00 : f32
    %278 = vector.broadcast %cst_48 : f32 to vector<1x256xf32>
    %279 = arith.select %277, %10, %278 : vector<1x256xi1>, vector<1x256xf32>
    %c24 = arith.constant 24 : index
    %280 = memref.load %arg1[%c24] : memref<49xf32, #tpu.memory_space<smem>>
    %281 = vector.broadcast %280 : f32 to vector<1x256xf32>
    %282 = arith.mulf %281, %279 : vector<1x256xf32>
    %283 = arith.addf %276, %282 : vector<1x256xf32>
    %c255_i32 = arith.constant 255 : i32
    %284 = tpu.dynamic_rotate %10 by %c255_i32 dim 1 : vector<1x256xf32>, i32 -> vector<1x256xf32>
    %285 = arith.andi %67, %37 : vector<1x256xi1>
    %cst_49 = arith.constant 0.000000e+00 : f32
    %286 = vector.broadcast %cst_49 : f32 to vector<1x256xf32>
    %287 = arith.select %285, %284, %286 : vector<1x256xi1>, vector<1x256xf32>
    %c25 = arith.constant 25 : index
    %288 = memref.load %arg1[%c25] : memref<49xf32, #tpu.memory_space<smem>>
    %289 = vector.broadcast %288 : f32 to vector<1x256xf32>
    %290 = arith.mulf %289, %287 : vector<1x256xf32>
    %291 = arith.addf %283, %290 : vector<1x256xf32>
    %c254_i32 = arith.constant 254 : i32
    %292 = tpu.dynamic_rotate %10 by %c254_i32 dim 1 : vector<1x256xf32>, i32 -> vector<1x256xf32>
    %293 = arith.andi %67, %42 : vector<1x256xi1>
    %cst_50 = arith.constant 0.000000e+00 : f32
    %294 = vector.broadcast %cst_50 : f32 to vector<1x256xf32>
    %295 = arith.select %293, %292, %294 : vector<1x256xi1>, vector<1x256xf32>
    %c26 = arith.constant 26 : index
    %296 = memref.load %arg1[%c26] : memref<49xf32, #tpu.memory_space<smem>>
    %297 = vector.broadcast %296 : f32 to vector<1x256xf32>
    %298 = arith.mulf %297, %295 : vector<1x256xf32>
    %299 = arith.addf %291, %298 : vector<1x256xf32>
    %c253_i32 = arith.constant 253 : i32
    %300 = tpu.dynamic_rotate %10 by %c253_i32 dim 1 : vector<1x256xf32>, i32 -> vector<1x256xf32>
    %301 = arith.andi %67, %47 : vector<1x256xi1>
    %cst_51 = arith.constant 0.000000e+00 : f32
    %302 = vector.broadcast %cst_51 : f32 to vector<1x256xf32>
    %303 = arith.select %301, %300, %302 : vector<1x256xi1>, vector<1x256xf32>
    %c27 = arith.constant 27 : index
    %304 = memref.load %arg1[%c27] : memref<49xf32, #tpu.memory_space<smem>>
    %305 = vector.broadcast %304 : f32 to vector<1x256xf32>
    %306 = arith.mulf %305, %303 : vector<1x256xf32>
    %307 = arith.addf %299, %306 : vector<1x256xf32>
    %c243_i32 = arith.constant 243 : i32
    %308 = tpu.dynamic_rotate %10 by %c243_i32 dim 1 : vector<1x256xf32>, i32 -> vector<1x256xf32>
    %309 = arith.andi %72, %17 : vector<1x256xi1>
    %cst_52 = arith.constant 0.000000e+00 : f32
    %310 = vector.broadcast %cst_52 : f32 to vector<1x256xf32>
    %311 = arith.select %309, %308, %310 : vector<1x256xi1>, vector<1x256xf32>
    %c28 = arith.constant 28 : index
    %312 = memref.load %arg1[%c28] : memref<49xf32, #tpu.memory_space<smem>>
    %313 = vector.broadcast %312 : f32 to vector<1x256xf32>
    %314 = arith.mulf %313, %311 : vector<1x256xf32>
    %315 = arith.addf %307, %314 : vector<1x256xf32>
    %c242_i32 = arith.constant 242 : i32
    %316 = tpu.dynamic_rotate %10 by %c242_i32 dim 1 : vector<1x256xf32>, i32 -> vector<1x256xf32>
    %317 = arith.andi %72, %22 : vector<1x256xi1>
    %cst_53 = arith.constant 0.000000e+00 : f32
    %318 = vector.broadcast %cst_53 : f32 to vector<1x256xf32>
    %319 = arith.select %317, %316, %318 : vector<1x256xi1>, vector<1x256xf32>
    %c29 = arith.constant 29 : index
    %320 = memref.load %arg1[%c29] : memref<49xf32, #tpu.memory_space<smem>>
    %321 = vector.broadcast %320 : f32 to vector<1x256xf32>
    %322 = arith.mulf %321, %319 : vector<1x256xf32>
    %323 = arith.addf %315, %322 : vector<1x256xf32>
    %c241_i32 = arith.constant 241 : i32
    %324 = tpu.dynamic_rotate %10 by %c241_i32 dim 1 : vector<1x256xf32>, i32 -> vector<1x256xf32>
    %325 = arith.andi %72, %27 : vector<1x256xi1>
    %cst_54 = arith.constant 0.000000e+00 : f32
    %326 = vector.broadcast %cst_54 : f32 to vector<1x256xf32>
    %327 = arith.select %325, %324, %326 : vector<1x256xi1>, vector<1x256xf32>
    %c30 = arith.constant 30 : index
    %328 = memref.load %arg1[%c30] : memref<49xf32, #tpu.memory_space<smem>>
    %329 = vector.broadcast %328 : f32 to vector<1x256xf32>
    %330 = arith.mulf %329, %327 : vector<1x256xf32>
    %331 = arith.addf %323, %330 : vector<1x256xf32>
    %c240_i32_55 = arith.constant 240 : i32
    %332 = tpu.dynamic_rotate %10 by %c240_i32_55 dim 1 : vector<1x256xf32>, i32 -> vector<1x256xf32>
    %333 = arith.andi %72, %32 : vector<1x256xi1>
    %cst_56 = arith.constant 0.000000e+00 : f32
    %334 = vector.broadcast %cst_56 : f32 to vector<1x256xf32>
    %335 = arith.select %333, %332, %334 : vector<1x256xi1>, vector<1x256xf32>
    %c31 = arith.constant 31 : index
    %336 = memref.load %arg1[%c31] : memref<49xf32, #tpu.memory_space<smem>>
    %337 = vector.broadcast %336 : f32 to vector<1x256xf32>
    %338 = arith.mulf %337, %335 : vector<1x256xf32>
    %339 = arith.addf %331, %338 : vector<1x256xf32>
    %c239_i32 = arith.constant 239 : i32
    %340 = tpu.dynamic_rotate %10 by %c239_i32 dim 1 : vector<1x256xf32>, i32 -> vector<1x256xf32>
    %341 = arith.andi %72, %37 : vector<1x256xi1>
    %cst_57 = arith.constant 0.000000e+00 : f32
    %342 = vector.broadcast %cst_57 : f32 to vector<1x256xf32>
    %343 = arith.select %341, %340, %342 : vector<1x256xi1>, vector<1x256xf32>
    %c32 = arith.constant 32 : index
    %344 = memref.load %arg1[%c32] : memref<49xf32, #tpu.memory_space<smem>>
    %345 = vector.broadcast %344 : f32 to vector<1x256xf32>
    %346 = arith.mulf %345, %343 : vector<1x256xf32>
    %347 = arith.addf %339, %346 : vector<1x256xf32>
    %c238_i32 = arith.constant 238 : i32
    %348 = tpu.dynamic_rotate %10 by %c238_i32 dim 1 : vector<1x256xf32>, i32 -> vector<1x256xf32>
    %349 = arith.andi %72, %42 : vector<1x256xi1>
    %cst_58 = arith.constant 0.000000e+00 : f32
    %350 = vector.broadcast %cst_58 : f32 to vector<1x256xf32>
    %351 = arith.select %349, %348, %350 : vector<1x256xi1>, vector<1x256xf32>
    %c33 = arith.constant 33 : index
    %352 = memref.load %arg1[%c33] : memref<49xf32, #tpu.memory_space<smem>>
    %353 = vector.broadcast %352 : f32 to vector<1x256xf32>
    %354 = arith.mulf %353, %351 : vector<1x256xf32>
    %355 = arith.addf %347, %354 : vector<1x256xf32>
    %c237_i32 = arith.constant 237 : i32
    %356 = tpu.dynamic_rotate %10 by %c237_i32 dim 1 : vector<1x256xf32>, i32 -> vector<1x256xf32>
    %357 = arith.andi %72, %47 : vector<1x256xi1>
    %cst_59 = arith.constant 0.000000e+00 : f32
    %358 = vector.broadcast %cst_59 : f32 to vector<1x256xf32>
    %359 = arith.select %357, %356, %358 : vector<1x256xi1>, vector<1x256xf32>
    %c34 = arith.constant 34 : index
    %360 = memref.load %arg1[%c34] : memref<49xf32, #tpu.memory_space<smem>>
    %361 = vector.broadcast %360 : f32 to vector<1x256xf32>
    %362 = arith.mulf %361, %359 : vector<1x256xf32>
    %363 = arith.addf %355, %362 : vector<1x256xf32>
    %c227_i32 = arith.constant 227 : i32
    %364 = tpu.dynamic_rotate %10 by %c227_i32 dim 1 : vector<1x256xf32>, i32 -> vector<1x256xf32>
    %365 = arith.andi %77, %17 : vector<1x256xi1>
    %cst_60 = arith.constant 0.000000e+00 : f32
    %366 = vector.broadcast %cst_60 : f32 to vector<1x256xf32>
    %367 = arith.select %365, %364, %366 : vector<1x256xi1>, vector<1x256xf32>
    %c35 = arith.constant 35 : index
    %368 = memref.load %arg1[%c35] : memref<49xf32, #tpu.memory_space<smem>>
    %369 = vector.broadcast %368 : f32 to vector<1x256xf32>
    %370 = arith.mulf %369, %367 : vector<1x256xf32>
    %371 = arith.addf %363, %370 : vector<1x256xf32>
    %c226_i32 = arith.constant 226 : i32
    %372 = tpu.dynamic_rotate %10 by %c226_i32 dim 1 : vector<1x256xf32>, i32 -> vector<1x256xf32>
    %373 = arith.andi %77, %22 : vector<1x256xi1>
    %cst_61 = arith.constant 0.000000e+00 : f32
    %374 = vector.broadcast %cst_61 : f32 to vector<1x256xf32>
    %375 = arith.select %373, %372, %374 : vector<1x256xi1>, vector<1x256xf32>
    %c36 = arith.constant 36 : index
    %376 = memref.load %arg1[%c36] : memref<49xf32, #tpu.memory_space<smem>>
    %377 = vector.broadcast %376 : f32 to vector<1x256xf32>
    %378 = arith.mulf %377, %375 : vector<1x256xf32>
    %379 = arith.addf %371, %378 : vector<1x256xf32>
    %c225_i32 = arith.constant 225 : i32
    %380 = tpu.dynamic_rotate %10 by %c225_i32 dim 1 : vector<1x256xf32>, i32 -> vector<1x256xf32>
    %381 = arith.andi %77, %27 : vector<1x256xi1>
    %cst_62 = arith.constant 0.000000e+00 : f32
    %382 = vector.broadcast %cst_62 : f32 to vector<1x256xf32>
    %383 = arith.select %381, %380, %382 : vector<1x256xi1>, vector<1x256xf32>
    %c37 = arith.constant 37 : index
    %384 = memref.load %arg1[%c37] : memref<49xf32, #tpu.memory_space<smem>>
    %385 = vector.broadcast %384 : f32 to vector<1x256xf32>
    %386 = arith.mulf %385, %383 : vector<1x256xf32>
    %387 = arith.addf %379, %386 : vector<1x256xf32>
    %c224_i32_63 = arith.constant 224 : i32
    %388 = tpu.dynamic_rotate %10 by %c224_i32_63 dim 1 : vector<1x256xf32>, i32 -> vector<1x256xf32>
    %389 = arith.andi %77, %32 : vector<1x256xi1>
    %cst_64 = arith.constant 0.000000e+00 : f32
    %390 = vector.broadcast %cst_64 : f32 to vector<1x256xf32>
    %391 = arith.select %389, %388, %390 : vector<1x256xi1>, vector<1x256xf32>
    %c38 = arith.constant 38 : index
    %392 = memref.load %arg1[%c38] : memref<49xf32, #tpu.memory_space<smem>>
    %393 = vector.broadcast %392 : f32 to vector<1x256xf32>
    %394 = arith.mulf %393, %391 : vector<1x256xf32>
    %395 = arith.addf %387, %394 : vector<1x256xf32>
    %c223_i32 = arith.constant 223 : i32
    %396 = tpu.dynamic_rotate %10 by %c223_i32 dim 1 : vector<1x256xf32>, i32 -> vector<1x256xf32>
    %397 = arith.andi %77, %37 : vector<1x256xi1>
    %cst_65 = arith.constant 0.000000e+00 : f32
    %398 = vector.broadcast %cst_65 : f32 to vector<1x256xf32>
    %399 = arith.select %397, %396, %398 : vector<1x256xi1>, vector<1x256xf32>
    %c39 = arith.constant 39 : index
    %400 = memref.load %arg1[%c39] : memref<49xf32, #tpu.memory_space<smem>>
    %401 = vector.broadcast %400 : f32 to vector<1x256xf32>
    %402 = arith.mulf %401, %399 : vector<1x256xf32>
    %403 = arith.addf %395, %402 : vector<1x256xf32>
    %c222_i32 = arith.constant 222 : i32
    %404 = tpu.dynamic_rotate %10 by %c222_i32 dim 1 : vector<1x256xf32>, i32 -> vector<1x256xf32>
    %405 = arith.andi %77, %42 : vector<1x256xi1>
    %cst_66 = arith.constant 0.000000e+00 : f32
    %406 = vector.broadcast %cst_66 : f32 to vector<1x256xf32>
    %407 = arith.select %405, %404, %406 : vector<1x256xi1>, vector<1x256xf32>
    %c40 = arith.constant 40 : index
    %408 = memref.load %arg1[%c40] : memref<49xf32, #tpu.memory_space<smem>>
    %409 = vector.broadcast %408 : f32 to vector<1x256xf32>
    %410 = arith.mulf %409, %407 : vector<1x256xf32>
    %411 = arith.addf %403, %410 : vector<1x256xf32>
    %c221_i32 = arith.constant 221 : i32
    %412 = tpu.dynamic_rotate %10 by %c221_i32 dim 1 : vector<1x256xf32>, i32 -> vector<1x256xf32>
    %413 = arith.andi %77, %47 : vector<1x256xi1>
    %cst_67 = arith.constant 0.000000e+00 : f32
    %414 = vector.broadcast %cst_67 : f32 to vector<1x256xf32>
    %415 = arith.select %413, %412, %414 : vector<1x256xi1>, vector<1x256xf32>
    %c41 = arith.constant 41 : index
    %416 = memref.load %arg1[%c41] : memref<49xf32, #tpu.memory_space<smem>>
    %417 = vector.broadcast %416 : f32 to vector<1x256xf32>
    %418 = arith.mulf %417, %415 : vector<1x256xf32>
    %419 = arith.addf %411, %418 : vector<1x256xf32>
    %c211_i32 = arith.constant 211 : i32
    %420 = tpu.dynamic_rotate %10 by %c211_i32 dim 1 : vector<1x256xf32>, i32 -> vector<1x256xf32>
    %421 = arith.andi %82, %17 : vector<1x256xi1>
    %cst_68 = arith.constant 0.000000e+00 : f32
    %422 = vector.broadcast %cst_68 : f32 to vector<1x256xf32>
    %423 = arith.select %421, %420, %422 : vector<1x256xi1>, vector<1x256xf32>
    %c42 = arith.constant 42 : index
    %424 = memref.load %arg1[%c42] : memref<49xf32, #tpu.memory_space<smem>>
    %425 = vector.broadcast %424 : f32 to vector<1x256xf32>
    %426 = arith.mulf %425, %423 : vector<1x256xf32>
    %427 = arith.addf %419, %426 : vector<1x256xf32>
    %c210_i32 = arith.constant 210 : i32
    %428 = tpu.dynamic_rotate %10 by %c210_i32 dim 1 : vector<1x256xf32>, i32 -> vector<1x256xf32>
    %429 = arith.andi %82, %22 : vector<1x256xi1>
    %cst_69 = arith.constant 0.000000e+00 : f32
    %430 = vector.broadcast %cst_69 : f32 to vector<1x256xf32>
    %431 = arith.select %429, %428, %430 : vector<1x256xi1>, vector<1x256xf32>
    %c43 = arith.constant 43 : index
    %432 = memref.load %arg1[%c43] : memref<49xf32, #tpu.memory_space<smem>>
    %433 = vector.broadcast %432 : f32 to vector<1x256xf32>
    %434 = arith.mulf %433, %431 : vector<1x256xf32>
    %435 = arith.addf %427, %434 : vector<1x256xf32>
    %c209_i32 = arith.constant 209 : i32
    %436 = tpu.dynamic_rotate %10 by %c209_i32 dim 1 : vector<1x256xf32>, i32 -> vector<1x256xf32>
    %437 = arith.andi %82, %27 : vector<1x256xi1>
    %cst_70 = arith.constant 0.000000e+00 : f32
    %438 = vector.broadcast %cst_70 : f32 to vector<1x256xf32>
    %439 = arith.select %437, %436, %438 : vector<1x256xi1>, vector<1x256xf32>
    %c44 = arith.constant 44 : index
    %440 = memref.load %arg1[%c44] : memref<49xf32, #tpu.memory_space<smem>>
    %441 = vector.broadcast %440 : f32 to vector<1x256xf32>
    %442 = arith.mulf %441, %439 : vector<1x256xf32>
    %443 = arith.addf %435, %442 : vector<1x256xf32>
    %c208_i32_71 = arith.constant 208 : i32
    %444 = tpu.dynamic_rotate %10 by %c208_i32_71 dim 1 : vector<1x256xf32>, i32 -> vector<1x256xf32>
    %445 = arith.andi %82, %32 : vector<1x256xi1>
    %cst_72 = arith.constant 0.000000e+00 : f32
    %446 = vector.broadcast %cst_72 : f32 to vector<1x256xf32>
    %447 = arith.select %445, %444, %446 : vector<1x256xi1>, vector<1x256xf32>
    %c45 = arith.constant 45 : index
    %448 = memref.load %arg1[%c45] : memref<49xf32, #tpu.memory_space<smem>>
    %449 = vector.broadcast %448 : f32 to vector<1x256xf32>
    %450 = arith.mulf %449, %447 : vector<1x256xf32>
    %451 = arith.addf %443, %450 : vector<1x256xf32>
    %c207_i32 = arith.constant 207 : i32
    %452 = tpu.dynamic_rotate %10 by %c207_i32 dim 1 : vector<1x256xf32>, i32 -> vector<1x256xf32>
    %453 = arith.andi %82, %37 : vector<1x256xi1>
    %cst_73 = arith.constant 0.000000e+00 : f32
    %454 = vector.broadcast %cst_73 : f32 to vector<1x256xf32>
    %455 = arith.select %453, %452, %454 : vector<1x256xi1>, vector<1x256xf32>
    %c46 = arith.constant 46 : index
    %456 = memref.load %arg1[%c46] : memref<49xf32, #tpu.memory_space<smem>>
    %457 = vector.broadcast %456 : f32 to vector<1x256xf32>
    %458 = arith.mulf %457, %455 : vector<1x256xf32>
    %459 = arith.addf %451, %458 : vector<1x256xf32>
    %c206_i32 = arith.constant 206 : i32
    %460 = tpu.dynamic_rotate %10 by %c206_i32 dim 1 : vector<1x256xf32>, i32 -> vector<1x256xf32>
    %461 = arith.andi %82, %42 : vector<1x256xi1>
    %cst_74 = arith.constant 0.000000e+00 : f32
    %462 = vector.broadcast %cst_74 : f32 to vector<1x256xf32>
    %463 = arith.select %461, %460, %462 : vector<1x256xi1>, vector<1x256xf32>
    %c47 = arith.constant 47 : index
    %464 = memref.load %arg1[%c47] : memref<49xf32, #tpu.memory_space<smem>>
    %465 = vector.broadcast %464 : f32 to vector<1x256xf32>
    %466 = arith.mulf %465, %463 : vector<1x256xf32>
    %467 = arith.addf %459, %466 : vector<1x256xf32>
    %c205_i32 = arith.constant 205 : i32
    %468 = tpu.dynamic_rotate %10 by %c205_i32 dim 1 : vector<1x256xf32>, i32 -> vector<1x256xf32>
    %469 = arith.andi %82, %47 : vector<1x256xi1>
    %cst_75 = arith.constant 0.000000e+00 : f32
    %470 = vector.broadcast %cst_75 : f32 to vector<1x256xf32>
    %471 = arith.select %469, %468, %470 : vector<1x256xi1>, vector<1x256xf32>
    %c48 = arith.constant 48 : index
    %472 = memref.load %arg1[%c48] : memref<49xf32, #tpu.memory_space<smem>>
    %473 = vector.broadcast %472 : f32 to vector<1x256xf32>
    %474 = arith.mulf %473, %471 : vector<1x256xf32>
    %475 = arith.addf %467, %474 : vector<1x256xf32>
    %cst_76 = arith.constant 0.000000e+00 : f32
    %476 = vector.broadcast %cst_76 : f32 to vector<1x256xf32>
    %477 = arith.maximumf %475, %476 : vector<1x256xf32>
    %c0_77 = arith.constant 0 : index
    %478 = memref.load %arg4[%c0_77] : memref<1xf32, #tpu.memory_space<smem>>
    %479 = vector.broadcast %478 : f32 to vector<1x256xf32>
    %c51_i32_78 = arith.constant 51 : i32
    %480 = tpu.dynamic_rotate %477 by %c51_i32_78 dim 1 : vector<1x256xf32>, i32 -> vector<1x256xf32>
    %481 = arith.andi %52, %17 : vector<1x256xi1>
    %cst_79 = arith.constant 0.000000e+00 : f32
    %482 = vector.broadcast %cst_79 : f32 to vector<1x256xf32>
    %483 = arith.select %481, %480, %482 : vector<1x256xi1>, vector<1x256xf32>
    %c0_80 = arith.constant 0 : index
    %484 = memref.load %arg3[%c0_80] : memref<49xf32, #tpu.memory_space<smem>>
    %485 = vector.broadcast %484 : f32 to vector<1x256xf32>
    %486 = arith.mulf %485, %483 : vector<1x256xf32>
    %487 = arith.addf %479, %486 : vector<1x256xf32>
    %c50_i32_81 = arith.constant 50 : i32
    %488 = tpu.dynamic_rotate %477 by %c50_i32_81 dim 1 : vector<1x256xf32>, i32 -> vector<1x256xf32>
    %489 = arith.andi %52, %22 : vector<1x256xi1>
    %cst_82 = arith.constant 0.000000e+00 : f32
    %490 = vector.broadcast %cst_82 : f32 to vector<1x256xf32>
    %491 = arith.select %489, %488, %490 : vector<1x256xi1>, vector<1x256xf32>
    %c1_83 = arith.constant 1 : index
    %492 = memref.load %arg3[%c1_83] : memref<49xf32, #tpu.memory_space<smem>>
    %493 = vector.broadcast %492 : f32 to vector<1x256xf32>
    %494 = arith.mulf %493, %491 : vector<1x256xf32>
    %495 = arith.addf %487, %494 : vector<1x256xf32>
    %c49_i32_84 = arith.constant 49 : i32
    %496 = tpu.dynamic_rotate %477 by %c49_i32_84 dim 1 : vector<1x256xf32>, i32 -> vector<1x256xf32>
    %497 = arith.andi %52, %27 : vector<1x256xi1>
    %cst_85 = arith.constant 0.000000e+00 : f32
    %498 = vector.broadcast %cst_85 : f32 to vector<1x256xf32>
    %499 = arith.select %497, %496, %498 : vector<1x256xi1>, vector<1x256xf32>
    %c2_86 = arith.constant 2 : index
    %500 = memref.load %arg3[%c2_86] : memref<49xf32, #tpu.memory_space<smem>>
    %501 = vector.broadcast %500 : f32 to vector<1x256xf32>
    %502 = arith.mulf %501, %499 : vector<1x256xf32>
    %503 = arith.addf %495, %502 : vector<1x256xf32>
    %c48_i32_87 = arith.constant 48 : i32
    %504 = tpu.dynamic_rotate %477 by %c48_i32_87 dim 1 : vector<1x256xf32>, i32 -> vector<1x256xf32>
    %505 = arith.andi %52, %32 : vector<1x256xi1>
    %cst_88 = arith.constant 0.000000e+00 : f32
    %506 = vector.broadcast %cst_88 : f32 to vector<1x256xf32>
    %507 = arith.select %505, %504, %506 : vector<1x256xi1>, vector<1x256xf32>
    %c3_89 = arith.constant 3 : index
    %508 = memref.load %arg3[%c3_89] : memref<49xf32, #tpu.memory_space<smem>>
    %509 = vector.broadcast %508 : f32 to vector<1x256xf32>
    %510 = arith.mulf %509, %507 : vector<1x256xf32>
    %511 = arith.addf %503, %510 : vector<1x256xf32>
    %c47_i32_90 = arith.constant 47 : i32
    %512 = tpu.dynamic_rotate %477 by %c47_i32_90 dim 1 : vector<1x256xf32>, i32 -> vector<1x256xf32>
    %513 = arith.andi %52, %37 : vector<1x256xi1>
    %cst_91 = arith.constant 0.000000e+00 : f32
    %514 = vector.broadcast %cst_91 : f32 to vector<1x256xf32>
    %515 = arith.select %513, %512, %514 : vector<1x256xi1>, vector<1x256xf32>
    %c4_92 = arith.constant 4 : index
    %516 = memref.load %arg3[%c4_92] : memref<49xf32, #tpu.memory_space<smem>>
    %517 = vector.broadcast %516 : f32 to vector<1x256xf32>
    %518 = arith.mulf %517, %515 : vector<1x256xf32>
    %519 = arith.addf %511, %518 : vector<1x256xf32>
    %c46_i32_93 = arith.constant 46 : i32
    %520 = tpu.dynamic_rotate %477 by %c46_i32_93 dim 1 : vector<1x256xf32>, i32 -> vector<1x256xf32>
    %521 = arith.andi %52, %42 : vector<1x256xi1>
    %cst_94 = arith.constant 0.000000e+00 : f32
    %522 = vector.broadcast %cst_94 : f32 to vector<1x256xf32>
    %523 = arith.select %521, %520, %522 : vector<1x256xi1>, vector<1x256xf32>
    %c5_95 = arith.constant 5 : index
    %524 = memref.load %arg3[%c5_95] : memref<49xf32, #tpu.memory_space<smem>>
    %525 = vector.broadcast %524 : f32 to vector<1x256xf32>
    %526 = arith.mulf %525, %523 : vector<1x256xf32>
    %527 = arith.addf %519, %526 : vector<1x256xf32>
    %c45_i32_96 = arith.constant 45 : i32
    %528 = tpu.dynamic_rotate %477 by %c45_i32_96 dim 1 : vector<1x256xf32>, i32 -> vector<1x256xf32>
    %529 = arith.andi %52, %47 : vector<1x256xi1>
    %cst_97 = arith.constant 0.000000e+00 : f32
    %530 = vector.broadcast %cst_97 : f32 to vector<1x256xf32>
    %531 = arith.select %529, %528, %530 : vector<1x256xi1>, vector<1x256xf32>
    %c6_98 = arith.constant 6 : index
    %532 = memref.load %arg3[%c6_98] : memref<49xf32, #tpu.memory_space<smem>>
    %533 = vector.broadcast %532 : f32 to vector<1x256xf32>
    %534 = arith.mulf %533, %531 : vector<1x256xf32>
    %535 = arith.addf %527, %534 : vector<1x256xf32>
    %c35_i32_99 = arith.constant 35 : i32
    %536 = tpu.dynamic_rotate %477 by %c35_i32_99 dim 1 : vector<1x256xf32>, i32 -> vector<1x256xf32>
    %537 = arith.andi %57, %17 : vector<1x256xi1>
    %cst_100 = arith.constant 0.000000e+00 : f32
    %538 = vector.broadcast %cst_100 : f32 to vector<1x256xf32>
    %539 = arith.select %537, %536, %538 : vector<1x256xi1>, vector<1x256xf32>
    %c7_101 = arith.constant 7 : index
    %540 = memref.load %arg3[%c7_101] : memref<49xf32, #tpu.memory_space<smem>>
    %541 = vector.broadcast %540 : f32 to vector<1x256xf32>
    %542 = arith.mulf %541, %539 : vector<1x256xf32>
    %543 = arith.addf %535, %542 : vector<1x256xf32>
    %c34_i32_102 = arith.constant 34 : i32
    %544 = tpu.dynamic_rotate %477 by %c34_i32_102 dim 1 : vector<1x256xf32>, i32 -> vector<1x256xf32>
    %545 = arith.andi %57, %22 : vector<1x256xi1>
    %cst_103 = arith.constant 0.000000e+00 : f32
    %546 = vector.broadcast %cst_103 : f32 to vector<1x256xf32>
    %547 = arith.select %545, %544, %546 : vector<1x256xi1>, vector<1x256xf32>
    %c8_104 = arith.constant 8 : index
    %548 = memref.load %arg3[%c8_104] : memref<49xf32, #tpu.memory_space<smem>>
    %549 = vector.broadcast %548 : f32 to vector<1x256xf32>
    %550 = arith.mulf %549, %547 : vector<1x256xf32>
    %551 = arith.addf %543, %550 : vector<1x256xf32>
    %c33_i32_105 = arith.constant 33 : i32
    %552 = tpu.dynamic_rotate %477 by %c33_i32_105 dim 1 : vector<1x256xf32>, i32 -> vector<1x256xf32>
    %553 = arith.andi %57, %27 : vector<1x256xi1>
    %cst_106 = arith.constant 0.000000e+00 : f32
    %554 = vector.broadcast %cst_106 : f32 to vector<1x256xf32>
    %555 = arith.select %553, %552, %554 : vector<1x256xi1>, vector<1x256xf32>
    %c9_107 = arith.constant 9 : index
    %556 = memref.load %arg3[%c9_107] : memref<49xf32, #tpu.memory_space<smem>>
    %557 = vector.broadcast %556 : f32 to vector<1x256xf32>
    %558 = arith.mulf %557, %555 : vector<1x256xf32>
    %559 = arith.addf %551, %558 : vector<1x256xf32>
    %c32_i32_108 = arith.constant 32 : i32
    %560 = tpu.dynamic_rotate %477 by %c32_i32_108 dim 1 : vector<1x256xf32>, i32 -> vector<1x256xf32>
    %561 = arith.andi %57, %32 : vector<1x256xi1>
    %cst_109 = arith.constant 0.000000e+00 : f32
    %562 = vector.broadcast %cst_109 : f32 to vector<1x256xf32>
    %563 = arith.select %561, %560, %562 : vector<1x256xi1>, vector<1x256xf32>
    %c10_110 = arith.constant 10 : index
    %564 = memref.load %arg3[%c10_110] : memref<49xf32, #tpu.memory_space<smem>>
    %565 = vector.broadcast %564 : f32 to vector<1x256xf32>
    %566 = arith.mulf %565, %563 : vector<1x256xf32>
    %567 = arith.addf %559, %566 : vector<1x256xf32>
    %c31_i32_111 = arith.constant 31 : i32
    %568 = tpu.dynamic_rotate %477 by %c31_i32_111 dim 1 : vector<1x256xf32>, i32 -> vector<1x256xf32>
    %569 = arith.andi %57, %37 : vector<1x256xi1>
    %cst_112 = arith.constant 0.000000e+00 : f32
    %570 = vector.broadcast %cst_112 : f32 to vector<1x256xf32>
    %571 = arith.select %569, %568, %570 : vector<1x256xi1>, vector<1x256xf32>
    %c11_113 = arith.constant 11 : index
    %572 = memref.load %arg3[%c11_113] : memref<49xf32, #tpu.memory_space<smem>>
    %573 = vector.broadcast %572 : f32 to vector<1x256xf32>
    %574 = arith.mulf %573, %571 : vector<1x256xf32>
    %575 = arith.addf %567, %574 : vector<1x256xf32>
    %c30_i32_114 = arith.constant 30 : i32
    %576 = tpu.dynamic_rotate %477 by %c30_i32_114 dim 1 : vector<1x256xf32>, i32 -> vector<1x256xf32>
    %577 = arith.andi %57, %42 : vector<1x256xi1>
    %cst_115 = arith.constant 0.000000e+00 : f32
    %578 = vector.broadcast %cst_115 : f32 to vector<1x256xf32>
    %579 = arith.select %577, %576, %578 : vector<1x256xi1>, vector<1x256xf32>
    %c12_116 = arith.constant 12 : index
    %580 = memref.load %arg3[%c12_116] : memref<49xf32, #tpu.memory_space<smem>>
    %581 = vector.broadcast %580 : f32 to vector<1x256xf32>
    %582 = arith.mulf %581, %579 : vector<1x256xf32>
    %583 = arith.addf %575, %582 : vector<1x256xf32>
    %c29_i32_117 = arith.constant 29 : i32
    %584 = tpu.dynamic_rotate %477 by %c29_i32_117 dim 1 : vector<1x256xf32>, i32 -> vector<1x256xf32>
    %585 = arith.andi %57, %47 : vector<1x256xi1>
    %cst_118 = arith.constant 0.000000e+00 : f32
    %586 = vector.broadcast %cst_118 : f32 to vector<1x256xf32>
    %587 = arith.select %585, %584, %586 : vector<1x256xi1>, vector<1x256xf32>
    %c13_119 = arith.constant 13 : index
    %588 = memref.load %arg3[%c13_119] : memref<49xf32, #tpu.memory_space<smem>>
    %589 = vector.broadcast %588 : f32 to vector<1x256xf32>
    %590 = arith.mulf %589, %587 : vector<1x256xf32>
    %591 = arith.addf %583, %590 : vector<1x256xf32>
    %c19_i32_120 = arith.constant 19 : i32
    %592 = tpu.dynamic_rotate %477 by %c19_i32_120 dim 1 : vector<1x256xf32>, i32 -> vector<1x256xf32>
    %593 = arith.andi %62, %17 : vector<1x256xi1>
    %cst_121 = arith.constant 0.000000e+00 : f32
    %594 = vector.broadcast %cst_121 : f32 to vector<1x256xf32>
    %595 = arith.select %593, %592, %594 : vector<1x256xi1>, vector<1x256xf32>
    %c14_122 = arith.constant 14 : index
    %596 = memref.load %arg3[%c14_122] : memref<49xf32, #tpu.memory_space<smem>>
    %597 = vector.broadcast %596 : f32 to vector<1x256xf32>
    %598 = arith.mulf %597, %595 : vector<1x256xf32>
    %599 = arith.addf %591, %598 : vector<1x256xf32>
    %c18_i32_123 = arith.constant 18 : i32
    %600 = tpu.dynamic_rotate %477 by %c18_i32_123 dim 1 : vector<1x256xf32>, i32 -> vector<1x256xf32>
    %601 = arith.andi %62, %22 : vector<1x256xi1>
    %cst_124 = arith.constant 0.000000e+00 : f32
    %602 = vector.broadcast %cst_124 : f32 to vector<1x256xf32>
    %603 = arith.select %601, %600, %602 : vector<1x256xi1>, vector<1x256xf32>
    %c15_125 = arith.constant 15 : index
    %604 = memref.load %arg3[%c15_125] : memref<49xf32, #tpu.memory_space<smem>>
    %605 = vector.broadcast %604 : f32 to vector<1x256xf32>
    %606 = arith.mulf %605, %603 : vector<1x256xf32>
    %607 = arith.addf %599, %606 : vector<1x256xf32>
    %c17_i32_126 = arith.constant 17 : i32
    %608 = tpu.dynamic_rotate %477 by %c17_i32_126 dim 1 : vector<1x256xf32>, i32 -> vector<1x256xf32>
    %609 = arith.andi %62, %27 : vector<1x256xi1>
    %cst_127 = arith.constant 0.000000e+00 : f32
    %610 = vector.broadcast %cst_127 : f32 to vector<1x256xf32>
    %611 = arith.select %609, %608, %610 : vector<1x256xi1>, vector<1x256xf32>
    %c16_128 = arith.constant 16 : index
    %612 = memref.load %arg3[%c16_128] : memref<49xf32, #tpu.memory_space<smem>>
    %613 = vector.broadcast %612 : f32 to vector<1x256xf32>
    %614 = arith.mulf %613, %611 : vector<1x256xf32>
    %615 = arith.addf %607, %614 : vector<1x256xf32>
    %c16_i32_129 = arith.constant 16 : i32
    %616 = tpu.dynamic_rotate %477 by %c16_i32_129 dim 1 : vector<1x256xf32>, i32 -> vector<1x256xf32>
    %617 = arith.andi %62, %32 : vector<1x256xi1>
    %cst_130 = arith.constant 0.000000e+00 : f32
    %618 = vector.broadcast %cst_130 : f32 to vector<1x256xf32>
    %619 = arith.select %617, %616, %618 : vector<1x256xi1>, vector<1x256xf32>
    %c17_131 = arith.constant 17 : index
    %620 = memref.load %arg3[%c17_131] : memref<49xf32, #tpu.memory_space<smem>>
    %621 = vector.broadcast %620 : f32 to vector<1x256xf32>
    %622 = arith.mulf %621, %619 : vector<1x256xf32>
    %623 = arith.addf %615, %622 : vector<1x256xf32>
    %c15_i32_132 = arith.constant 15 : i32
    %624 = tpu.dynamic_rotate %477 by %c15_i32_132 dim 1 : vector<1x256xf32>, i32 -> vector<1x256xf32>
    %625 = arith.andi %62, %37 : vector<1x256xi1>
    %cst_133 = arith.constant 0.000000e+00 : f32
    %626 = vector.broadcast %cst_133 : f32 to vector<1x256xf32>
    %627 = arith.select %625, %624, %626 : vector<1x256xi1>, vector<1x256xf32>
    %c18_134 = arith.constant 18 : index
    %628 = memref.load %arg3[%c18_134] : memref<49xf32, #tpu.memory_space<smem>>
    %629 = vector.broadcast %628 : f32 to vector<1x256xf32>
    %630 = arith.mulf %629, %627 : vector<1x256xf32>
    %631 = arith.addf %623, %630 : vector<1x256xf32>
    %c14_i32_135 = arith.constant 14 : i32
    %632 = tpu.dynamic_rotate %477 by %c14_i32_135 dim 1 : vector<1x256xf32>, i32 -> vector<1x256xf32>
    %633 = arith.andi %62, %42 : vector<1x256xi1>
    %cst_136 = arith.constant 0.000000e+00 : f32
    %634 = vector.broadcast %cst_136 : f32 to vector<1x256xf32>
    %635 = arith.select %633, %632, %634 : vector<1x256xi1>, vector<1x256xf32>
    %c19_137 = arith.constant 19 : index
    %636 = memref.load %arg3[%c19_137] : memref<49xf32, #tpu.memory_space<smem>>
    %637 = vector.broadcast %636 : f32 to vector<1x256xf32>
    %638 = arith.mulf %637, %635 : vector<1x256xf32>
    %639 = arith.addf %631, %638 : vector<1x256xf32>
    %c13_i32_138 = arith.constant 13 : i32
    %640 = tpu.dynamic_rotate %477 by %c13_i32_138 dim 1 : vector<1x256xf32>, i32 -> vector<1x256xf32>
    %641 = arith.andi %62, %47 : vector<1x256xi1>
    %cst_139 = arith.constant 0.000000e+00 : f32
    %642 = vector.broadcast %cst_139 : f32 to vector<1x256xf32>
    %643 = arith.select %641, %640, %642 : vector<1x256xi1>, vector<1x256xf32>
    %c20_140 = arith.constant 20 : index
    %644 = memref.load %arg3[%c20_140] : memref<49xf32, #tpu.memory_space<smem>>
    %645 = vector.broadcast %644 : f32 to vector<1x256xf32>
    %646 = arith.mulf %645, %643 : vector<1x256xf32>
    %647 = arith.addf %639, %646 : vector<1x256xf32>
    %c3_i32_141 = arith.constant 3 : i32
    %648 = tpu.dynamic_rotate %477 by %c3_i32_141 dim 1 : vector<1x256xf32>, i32 -> vector<1x256xf32>
    %649 = arith.andi %67, %17 : vector<1x256xi1>
    %cst_142 = arith.constant 0.000000e+00 : f32
    %650 = vector.broadcast %cst_142 : f32 to vector<1x256xf32>
    %651 = arith.select %649, %648, %650 : vector<1x256xi1>, vector<1x256xf32>
    %c21_143 = arith.constant 21 : index
    %652 = memref.load %arg3[%c21_143] : memref<49xf32, #tpu.memory_space<smem>>
    %653 = vector.broadcast %652 : f32 to vector<1x256xf32>
    %654 = arith.mulf %653, %651 : vector<1x256xf32>
    %655 = arith.addf %647, %654 : vector<1x256xf32>
    %c2_i32_144 = arith.constant 2 : i32
    %656 = tpu.dynamic_rotate %477 by %c2_i32_144 dim 1 : vector<1x256xf32>, i32 -> vector<1x256xf32>
    %657 = arith.andi %67, %22 : vector<1x256xi1>
    %cst_145 = arith.constant 0.000000e+00 : f32
    %658 = vector.broadcast %cst_145 : f32 to vector<1x256xf32>
    %659 = arith.select %657, %656, %658 : vector<1x256xi1>, vector<1x256xf32>
    %c22_146 = arith.constant 22 : index
    %660 = memref.load %arg3[%c22_146] : memref<49xf32, #tpu.memory_space<smem>>
    %661 = vector.broadcast %660 : f32 to vector<1x256xf32>
    %662 = arith.mulf %661, %659 : vector<1x256xf32>
    %663 = arith.addf %655, %662 : vector<1x256xf32>
    %c1_i32_147 = arith.constant 1 : i32
    %664 = tpu.dynamic_rotate %477 by %c1_i32_147 dim 1 : vector<1x256xf32>, i32 -> vector<1x256xf32>
    %665 = arith.andi %67, %27 : vector<1x256xi1>
    %cst_148 = arith.constant 0.000000e+00 : f32
    %666 = vector.broadcast %cst_148 : f32 to vector<1x256xf32>
    %667 = arith.select %665, %664, %666 : vector<1x256xi1>, vector<1x256xf32>
    %c23_149 = arith.constant 23 : index
    %668 = memref.load %arg3[%c23_149] : memref<49xf32, #tpu.memory_space<smem>>
    %669 = vector.broadcast %668 : f32 to vector<1x256xf32>
    %670 = arith.mulf %669, %667 : vector<1x256xf32>
    %671 = arith.addf %663, %670 : vector<1x256xf32>
    %672 = arith.andi %67, %32 : vector<1x256xi1>
    %cst_150 = arith.constant 0.000000e+00 : f32
    %673 = vector.broadcast %cst_150 : f32 to vector<1x256xf32>
    %674 = arith.select %672, %477, %673 : vector<1x256xi1>, vector<1x256xf32>
    %c24_151 = arith.constant 24 : index
    %675 = memref.load %arg3[%c24_151] : memref<49xf32, #tpu.memory_space<smem>>
    %676 = vector.broadcast %675 : f32 to vector<1x256xf32>
    %677 = arith.mulf %676, %674 : vector<1x256xf32>
    %678 = arith.addf %671, %677 : vector<1x256xf32>
    %c255_i32_152 = arith.constant 255 : i32
    %679 = tpu.dynamic_rotate %477 by %c255_i32_152 dim 1 : vector<1x256xf32>, i32 -> vector<1x256xf32>
    %680 = arith.andi %67, %37 : vector<1x256xi1>
    %cst_153 = arith.constant 0.000000e+00 : f32
    %681 = vector.broadcast %cst_153 : f32 to vector<1x256xf32>
    %682 = arith.select %680, %679, %681 : vector<1x256xi1>, vector<1x256xf32>
    %c25_154 = arith.constant 25 : index
    %683 = memref.load %arg3[%c25_154] : memref<49xf32, #tpu.memory_space<smem>>
    %684 = vector.broadcast %683 : f32 to vector<1x256xf32>
    %685 = arith.mulf %684, %682 : vector<1x256xf32>
    %686 = arith.addf %678, %685 : vector<1x256xf32>
    %c254_i32_155 = arith.constant 254 : i32
    %687 = tpu.dynamic_rotate %477 by %c254_i32_155 dim 1 : vector<1x256xf32>, i32 -> vector<1x256xf32>
    %688 = arith.andi %67, %42 : vector<1x256xi1>
    %cst_156 = arith.constant 0.000000e+00 : f32
    %689 = vector.broadcast %cst_156 : f32 to vector<1x256xf32>
    %690 = arith.select %688, %687, %689 : vector<1x256xi1>, vector<1x256xf32>
    %c26_157 = arith.constant 26 : index
    %691 = memref.load %arg3[%c26_157] : memref<49xf32, #tpu.memory_space<smem>>
    %692 = vector.broadcast %691 : f32 to vector<1x256xf32>
    %693 = arith.mulf %692, %690 : vector<1x256xf32>
    %694 = arith.addf %686, %693 : vector<1x256xf32>
    %c253_i32_158 = arith.constant 253 : i32
    %695 = tpu.dynamic_rotate %477 by %c253_i32_158 dim 1 : vector<1x256xf32>, i32 -> vector<1x256xf32>
    %696 = arith.andi %67, %47 : vector<1x256xi1>
    %cst_159 = arith.constant 0.000000e+00 : f32
    %697 = vector.broadcast %cst_159 : f32 to vector<1x256xf32>
    %698 = arith.select %696, %695, %697 : vector<1x256xi1>, vector<1x256xf32>
    %c27_160 = arith.constant 27 : index
    %699 = memref.load %arg3[%c27_160] : memref<49xf32, #tpu.memory_space<smem>>
    %700 = vector.broadcast %699 : f32 to vector<1x256xf32>
    %701 = arith.mulf %700, %698 : vector<1x256xf32>
    %702 = arith.addf %694, %701 : vector<1x256xf32>
    %c243_i32_161 = arith.constant 243 : i32
    %703 = tpu.dynamic_rotate %477 by %c243_i32_161 dim 1 : vector<1x256xf32>, i32 -> vector<1x256xf32>
    %704 = arith.andi %72, %17 : vector<1x256xi1>
    %cst_162 = arith.constant 0.000000e+00 : f32
    %705 = vector.broadcast %cst_162 : f32 to vector<1x256xf32>
    %706 = arith.select %704, %703, %705 : vector<1x256xi1>, vector<1x256xf32>
    %c28_163 = arith.constant 28 : index
    %707 = memref.load %arg3[%c28_163] : memref<49xf32, #tpu.memory_space<smem>>
    %708 = vector.broadcast %707 : f32 to vector<1x256xf32>
    %709 = arith.mulf %708, %706 : vector<1x256xf32>
    %710 = arith.addf %702, %709 : vector<1x256xf32>
    %c242_i32_164 = arith.constant 242 : i32
    %711 = tpu.dynamic_rotate %477 by %c242_i32_164 dim 1 : vector<1x256xf32>, i32 -> vector<1x256xf32>
    %712 = arith.andi %72, %22 : vector<1x256xi1>
    %cst_165 = arith.constant 0.000000e+00 : f32
    %713 = vector.broadcast %cst_165 : f32 to vector<1x256xf32>
    %714 = arith.select %712, %711, %713 : vector<1x256xi1>, vector<1x256xf32>
    %c29_166 = arith.constant 29 : index
    %715 = memref.load %arg3[%c29_166] : memref<49xf32, #tpu.memory_space<smem>>
    %716 = vector.broadcast %715 : f32 to vector<1x256xf32>
    %717 = arith.mulf %716, %714 : vector<1x256xf32>
    %718 = arith.addf %710, %717 : vector<1x256xf32>
    %c241_i32_167 = arith.constant 241 : i32
    %719 = tpu.dynamic_rotate %477 by %c241_i32_167 dim 1 : vector<1x256xf32>, i32 -> vector<1x256xf32>
    %720 = arith.andi %72, %27 : vector<1x256xi1>
    %cst_168 = arith.constant 0.000000e+00 : f32
    %721 = vector.broadcast %cst_168 : f32 to vector<1x256xf32>
    %722 = arith.select %720, %719, %721 : vector<1x256xi1>, vector<1x256xf32>
    %c30_169 = arith.constant 30 : index
    %723 = memref.load %arg3[%c30_169] : memref<49xf32, #tpu.memory_space<smem>>
    %724 = vector.broadcast %723 : f32 to vector<1x256xf32>
    %725 = arith.mulf %724, %722 : vector<1x256xf32>
    %726 = arith.addf %718, %725 : vector<1x256xf32>
    %c240_i32_170 = arith.constant 240 : i32
    %727 = tpu.dynamic_rotate %477 by %c240_i32_170 dim 1 : vector<1x256xf32>, i32 -> vector<1x256xf32>
    %728 = arith.andi %72, %32 : vector<1x256xi1>
    %cst_171 = arith.constant 0.000000e+00 : f32
    %729 = vector.broadcast %cst_171 : f32 to vector<1x256xf32>
    %730 = arith.select %728, %727, %729 : vector<1x256xi1>, vector<1x256xf32>
    %c31_172 = arith.constant 31 : index
    %731 = memref.load %arg3[%c31_172] : memref<49xf32, #tpu.memory_space<smem>>
    %732 = vector.broadcast %731 : f32 to vector<1x256xf32>
    %733 = arith.mulf %732, %730 : vector<1x256xf32>
    %734 = arith.addf %726, %733 : vector<1x256xf32>
    %c239_i32_173 = arith.constant 239 : i32
    %735 = tpu.dynamic_rotate %477 by %c239_i32_173 dim 1 : vector<1x256xf32>, i32 -> vector<1x256xf32>
    %736 = arith.andi %72, %37 : vector<1x256xi1>
    %cst_174 = arith.constant 0.000000e+00 : f32
    %737 = vector.broadcast %cst_174 : f32 to vector<1x256xf32>
    %738 = arith.select %736, %735, %737 : vector<1x256xi1>, vector<1x256xf32>
    %c32_175 = arith.constant 32 : index
    %739 = memref.load %arg3[%c32_175] : memref<49xf32, #tpu.memory_space<smem>>
    %740 = vector.broadcast %739 : f32 to vector<1x256xf32>
    %741 = arith.mulf %740, %738 : vector<1x256xf32>
    %742 = arith.addf %734, %741 : vector<1x256xf32>
    %c238_i32_176 = arith.constant 238 : i32
    %743 = tpu.dynamic_rotate %477 by %c238_i32_176 dim 1 : vector<1x256xf32>, i32 -> vector<1x256xf32>
    %744 = arith.andi %72, %42 : vector<1x256xi1>
    %cst_177 = arith.constant 0.000000e+00 : f32
    %745 = vector.broadcast %cst_177 : f32 to vector<1x256xf32>
    %746 = arith.select %744, %743, %745 : vector<1x256xi1>, vector<1x256xf32>
    %c33_178 = arith.constant 33 : index
    %747 = memref.load %arg3[%c33_178] : memref<49xf32, #tpu.memory_space<smem>>
    %748 = vector.broadcast %747 : f32 to vector<1x256xf32>
    %749 = arith.mulf %748, %746 : vector<1x256xf32>
    %750 = arith.addf %742, %749 : vector<1x256xf32>
    %c237_i32_179 = arith.constant 237 : i32
    %751 = tpu.dynamic_rotate %477 by %c237_i32_179 dim 1 : vector<1x256xf32>, i32 -> vector<1x256xf32>
    %752 = arith.andi %72, %47 : vector<1x256xi1>
    %cst_180 = arith.constant 0.000000e+00 : f32
    %753 = vector.broadcast %cst_180 : f32 to vector<1x256xf32>
    %754 = arith.select %752, %751, %753 : vector<1x256xi1>, vector<1x256xf32>
    %c34_181 = arith.constant 34 : index
    %755 = memref.load %arg3[%c34_181] : memref<49xf32, #tpu.memory_space<smem>>
    %756 = vector.broadcast %755 : f32 to vector<1x256xf32>
    %757 = arith.mulf %756, %754 : vector<1x256xf32>
    %758 = arith.addf %750, %757 : vector<1x256xf32>
    %c227_i32_182 = arith.constant 227 : i32
    %759 = tpu.dynamic_rotate %477 by %c227_i32_182 dim 1 : vector<1x256xf32>, i32 -> vector<1x256xf32>
    %760 = arith.andi %77, %17 : vector<1x256xi1>
    %cst_183 = arith.constant 0.000000e+00 : f32
    %761 = vector.broadcast %cst_183 : f32 to vector<1x256xf32>
    %762 = arith.select %760, %759, %761 : vector<1x256xi1>, vector<1x256xf32>
    %c35_184 = arith.constant 35 : index
    %763 = memref.load %arg3[%c35_184] : memref<49xf32, #tpu.memory_space<smem>>
    %764 = vector.broadcast %763 : f32 to vector<1x256xf32>
    %765 = arith.mulf %764, %762 : vector<1x256xf32>
    %766 = arith.addf %758, %765 : vector<1x256xf32>
    %c226_i32_185 = arith.constant 226 : i32
    %767 = tpu.dynamic_rotate %477 by %c226_i32_185 dim 1 : vector<1x256xf32>, i32 -> vector<1x256xf32>
    %768 = arith.andi %77, %22 : vector<1x256xi1>
    %cst_186 = arith.constant 0.000000e+00 : f32
    %769 = vector.broadcast %cst_186 : f32 to vector<1x256xf32>
    %770 = arith.select %768, %767, %769 : vector<1x256xi1>, vector<1x256xf32>
    %c36_187 = arith.constant 36 : index
    %771 = memref.load %arg3[%c36_187] : memref<49xf32, #tpu.memory_space<smem>>
    %772 = vector.broadcast %771 : f32 to vector<1x256xf32>
    %773 = arith.mulf %772, %770 : vector<1x256xf32>
    %774 = arith.addf %766, %773 : vector<1x256xf32>
    %c225_i32_188 = arith.constant 225 : i32
    %775 = tpu.dynamic_rotate %477 by %c225_i32_188 dim 1 : vector<1x256xf32>, i32 -> vector<1x256xf32>
    %776 = arith.andi %77, %27 : vector<1x256xi1>
    %cst_189 = arith.constant 0.000000e+00 : f32
    %777 = vector.broadcast %cst_189 : f32 to vector<1x256xf32>
    %778 = arith.select %776, %775, %777 : vector<1x256xi1>, vector<1x256xf32>
    %c37_190 = arith.constant 37 : index
    %779 = memref.load %arg3[%c37_190] : memref<49xf32, #tpu.memory_space<smem>>
    %780 = vector.broadcast %779 : f32 to vector<1x256xf32>
    %781 = arith.mulf %780, %778 : vector<1x256xf32>
    %782 = arith.addf %774, %781 : vector<1x256xf32>
    %c224_i32_191 = arith.constant 224 : i32
    %783 = tpu.dynamic_rotate %477 by %c224_i32_191 dim 1 : vector<1x256xf32>, i32 -> vector<1x256xf32>
    %784 = arith.andi %77, %32 : vector<1x256xi1>
    %cst_192 = arith.constant 0.000000e+00 : f32
    %785 = vector.broadcast %cst_192 : f32 to vector<1x256xf32>
    %786 = arith.select %784, %783, %785 : vector<1x256xi1>, vector<1x256xf32>
    %c38_193 = arith.constant 38 : index
    %787 = memref.load %arg3[%c38_193] : memref<49xf32, #tpu.memory_space<smem>>
    %788 = vector.broadcast %787 : f32 to vector<1x256xf32>
    %789 = arith.mulf %788, %786 : vector<1x256xf32>
    %790 = arith.addf %782, %789 : vector<1x256xf32>
    %c223_i32_194 = arith.constant 223 : i32
    %791 = tpu.dynamic_rotate %477 by %c223_i32_194 dim 1 : vector<1x256xf32>, i32 -> vector<1x256xf32>
    %792 = arith.andi %77, %37 : vector<1x256xi1>
    %cst_195 = arith.constant 0.000000e+00 : f32
    %793 = vector.broadcast %cst_195 : f32 to vector<1x256xf32>
    %794 = arith.select %792, %791, %793 : vector<1x256xi1>, vector<1x256xf32>
    %c39_196 = arith.constant 39 : index
    %795 = memref.load %arg3[%c39_196] : memref<49xf32, #tpu.memory_space<smem>>
    %796 = vector.broadcast %795 : f32 to vector<1x256xf32>
    %797 = arith.mulf %796, %794 : vector<1x256xf32>
    %798 = arith.addf %790, %797 : vector<1x256xf32>
    %c222_i32_197 = arith.constant 222 : i32
    %799 = tpu.dynamic_rotate %477 by %c222_i32_197 dim 1 : vector<1x256xf32>, i32 -> vector<1x256xf32>
    %800 = arith.andi %77, %42 : vector<1x256xi1>
    %cst_198 = arith.constant 0.000000e+00 : f32
    %801 = vector.broadcast %cst_198 : f32 to vector<1x256xf32>
    %802 = arith.select %800, %799, %801 : vector<1x256xi1>, vector<1x256xf32>
    %c40_199 = arith.constant 40 : index
    %803 = memref.load %arg3[%c40_199] : memref<49xf32, #tpu.memory_space<smem>>
    %804 = vector.broadcast %803 : f32 to vector<1x256xf32>
    %805 = arith.mulf %804, %802 : vector<1x256xf32>
    %806 = arith.addf %798, %805 : vector<1x256xf32>
    %c221_i32_200 = arith.constant 221 : i32
    %807 = tpu.dynamic_rotate %477 by %c221_i32_200 dim 1 : vector<1x256xf32>, i32 -> vector<1x256xf32>
    %808 = arith.andi %77, %47 : vector<1x256xi1>
    %cst_201 = arith.constant 0.000000e+00 : f32
    %809 = vector.broadcast %cst_201 : f32 to vector<1x256xf32>
    %810 = arith.select %808, %807, %809 : vector<1x256xi1>, vector<1x256xf32>
    %c41_202 = arith.constant 41 : index
    %811 = memref.load %arg3[%c41_202] : memref<49xf32, #tpu.memory_space<smem>>
    %812 = vector.broadcast %811 : f32 to vector<1x256xf32>
    %813 = arith.mulf %812, %810 : vector<1x256xf32>
    %814 = arith.addf %806, %813 : vector<1x256xf32>
    %c211_i32_203 = arith.constant 211 : i32
    %815 = tpu.dynamic_rotate %477 by %c211_i32_203 dim 1 : vector<1x256xf32>, i32 -> vector<1x256xf32>
    %816 = arith.andi %82, %17 : vector<1x256xi1>
    %cst_204 = arith.constant 0.000000e+00 : f32
    %817 = vector.broadcast %cst_204 : f32 to vector<1x256xf32>
    %818 = arith.select %816, %815, %817 : vector<1x256xi1>, vector<1x256xf32>
    %c42_205 = arith.constant 42 : index
    %819 = memref.load %arg3[%c42_205] : memref<49xf32, #tpu.memory_space<smem>>
    %820 = vector.broadcast %819 : f32 to vector<1x256xf32>
    %821 = arith.mulf %820, %818 : vector<1x256xf32>
    %822 = arith.addf %814, %821 : vector<1x256xf32>
    %c210_i32_206 = arith.constant 210 : i32
    %823 = tpu.dynamic_rotate %477 by %c210_i32_206 dim 1 : vector<1x256xf32>, i32 -> vector<1x256xf32>
    %824 = arith.andi %82, %22 : vector<1x256xi1>
    %cst_207 = arith.constant 0.000000e+00 : f32
    %825 = vector.broadcast %cst_207 : f32 to vector<1x256xf32>
    %826 = arith.select %824, %823, %825 : vector<1x256xi1>, vector<1x256xf32>
    %c43_208 = arith.constant 43 : index
    %827 = memref.load %arg3[%c43_208] : memref<49xf32, #tpu.memory_space<smem>>
    %828 = vector.broadcast %827 : f32 to vector<1x256xf32>
    %829 = arith.mulf %828, %826 : vector<1x256xf32>
    %830 = arith.addf %822, %829 : vector<1x256xf32>
    %c209_i32_209 = arith.constant 209 : i32
    %831 = tpu.dynamic_rotate %477 by %c209_i32_209 dim 1 : vector<1x256xf32>, i32 -> vector<1x256xf32>
    %832 = arith.andi %82, %27 : vector<1x256xi1>
    %cst_210 = arith.constant 0.000000e+00 : f32
    %833 = vector.broadcast %cst_210 : f32 to vector<1x256xf32>
    %834 = arith.select %832, %831, %833 : vector<1x256xi1>, vector<1x256xf32>
    %c44_211 = arith.constant 44 : index
    %835 = memref.load %arg3[%c44_211] : memref<49xf32, #tpu.memory_space<smem>>
    %836 = vector.broadcast %835 : f32 to vector<1x256xf32>
    %837 = arith.mulf %836, %834 : vector<1x256xf32>
    %838 = arith.addf %830, %837 : vector<1x256xf32>
    %c208_i32_212 = arith.constant 208 : i32
    %839 = tpu.dynamic_rotate %477 by %c208_i32_212 dim 1 : vector<1x256xf32>, i32 -> vector<1x256xf32>
    %840 = arith.andi %82, %32 : vector<1x256xi1>
    %cst_213 = arith.constant 0.000000e+00 : f32
    %841 = vector.broadcast %cst_213 : f32 to vector<1x256xf32>
    %842 = arith.select %840, %839, %841 : vector<1x256xi1>, vector<1x256xf32>
    %c45_214 = arith.constant 45 : index
    %843 = memref.load %arg3[%c45_214] : memref<49xf32, #tpu.memory_space<smem>>
    %844 = vector.broadcast %843 : f32 to vector<1x256xf32>
    %845 = arith.mulf %844, %842 : vector<1x256xf32>
    %846 = arith.addf %838, %845 : vector<1x256xf32>
    %c207_i32_215 = arith.constant 207 : i32
    %847 = tpu.dynamic_rotate %477 by %c207_i32_215 dim 1 : vector<1x256xf32>, i32 -> vector<1x256xf32>
    %848 = arith.andi %82, %37 : vector<1x256xi1>
    %cst_216 = arith.constant 0.000000e+00 : f32
    %849 = vector.broadcast %cst_216 : f32 to vector<1x256xf32>
    %850 = arith.select %848, %847, %849 : vector<1x256xi1>, vector<1x256xf32>
    %c46_217 = arith.constant 46 : index
    %851 = memref.load %arg3[%c46_217] : memref<49xf32, #tpu.memory_space<smem>>
    %852 = vector.broadcast %851 : f32 to vector<1x256xf32>
    %853 = arith.mulf %852, %850 : vector<1x256xf32>
    %854 = arith.addf %846, %853 : vector<1x256xf32>
    %c206_i32_218 = arith.constant 206 : i32
    %855 = tpu.dynamic_rotate %477 by %c206_i32_218 dim 1 : vector<1x256xf32>, i32 -> vector<1x256xf32>
    %856 = arith.andi %82, %42 : vector<1x256xi1>
    %cst_219 = arith.constant 0.000000e+00 : f32
    %857 = vector.broadcast %cst_219 : f32 to vector<1x256xf32>
    %858 = arith.select %856, %855, %857 : vector<1x256xi1>, vector<1x256xf32>
    %c47_220 = arith.constant 47 : index
    %859 = memref.load %arg3[%c47_220] : memref<49xf32, #tpu.memory_space<smem>>
    %860 = vector.broadcast %859 : f32 to vector<1x256xf32>
    %861 = arith.mulf %860, %858 : vector<1x256xf32>
    %862 = arith.addf %854, %861 : vector<1x256xf32>
    %c205_i32_221 = arith.constant 205 : i32
    %863 = tpu.dynamic_rotate %477 by %c205_i32_221 dim 1 : vector<1x256xf32>, i32 -> vector<1x256xf32>
    %864 = arith.andi %82, %47 : vector<1x256xi1>
    %cst_222 = arith.constant 0.000000e+00 : f32
    %865 = vector.broadcast %cst_222 : f32 to vector<1x256xf32>
    %866 = arith.select %864, %863, %865 : vector<1x256xi1>, vector<1x256xf32>
    %c48_223 = arith.constant 48 : index
    %867 = memref.load %arg3[%c48_223] : memref<49xf32, #tpu.memory_space<smem>>
    %868 = vector.broadcast %867 : f32 to vector<1x256xf32>
    %869 = arith.mulf %868, %866 : vector<1x256xf32>
    %870 = arith.addf %862, %869 : vector<1x256xf32>
    %871 = arith.negf %870 : vector<1x256xf32>
    %872 = math.exp %871 : vector<1x256xf32>
    %cst_224 = arith.constant 1.000000e+00 : f32
    %873 = vector.broadcast %cst_224 : f32 to vector<1x256xf32>
    %874 = arith.addf %873, %872 : vector<1x256xf32>
    %875 = arith.divf %873, %874 : vector<1x256xf32>
    %cst_225 = arith.constant 1.000000e+00 : f32
    %876 = vector.broadcast %cst_225 : f32 to vector<1x256xf32>
    %877 = arith.addf %875, %876 : vector<1x256xf32>
    %c0_i32_226 = arith.constant 0 : i32
    %c4_i32_227 = arith.constant 4 : i32
    %878 = arith.muli %c0_i32_226, %c4_i32_227 : i32
    %879 = tpu.assume_multiple %878, 4 : i32
    %c0_228 = arith.constant 0 : index
    %880 = arith.index_cast %879 : i32 to index
    %c0_229 = arith.constant 0 : index
    %881 = vector.load %arg6[%c0_228, %880, %c0_229] : memref<1x4x256xf32, #tpu.memory_space<vmem>>, vector<1x4x256xf32>
    %882 = vector.shape_cast %881 : vector<1x4x256xf32> to vector<4x256xf32>
    %883 = vector.broadcast %877 : vector<1x256xf32> to vector<4x256xf32>
    %884 = arith.mulf %882, %883 : vector<4x256xf32>
    %c0_230 = arith.constant 0 : index
    %885 = arith.index_cast %879 : i32 to index
    %c0_231 = arith.constant 0 : index
    %886 = vector.load %arg7[%c0_230, %885, %c0_231] : memref<1x4x256xf32, #tpu.memory_space<vmem>>, vector<1x4x256xf32>
    %887 = vector.shape_cast %886 : vector<1x4x256xf32> to vector<4x256xf32>
    %888 = vector.shape_cast %884 : vector<4x256xf32> to vector<1x4x256xf32>
    tpu.vector_store %arg7[%c0_230, %885, %c0_231], %888 {strides = array<i32>} : memref<1x4x256xf32, #tpu.memory_space<vmem>>, vector<1x4x256xf32>,
    %c1_i32_232 = arith.constant 1 : i32
    return
  }
  func.func @transform_0(%arg0: i32) -> i32 {
    %c0_i32 = arith.constant 0 : i32
    %c0_i32_0 = arith.constant 0 : i32
    return %c0_i32 : i32
  }
  func.func @transform_1(%arg0: i32) -> i32 {
    %c0_i32 = arith.constant 0 : i32
    %c0_i32_0 = arith.constant 0 : i32
    return %c0_i32 : i32
  }
  func.func @transform_2(%arg0: i32) -> i32 {
    %c0_i32 = arith.constant 0 : i32
    %c0_i32_0 = arith.constant 0 : i32
    return %c0_i32 : i32
  }
  func.func @transform_3(%arg0: i32) -> i32 {
    %c0_i32 = arith.constant 0 : i32
    %c0_i32_0 = arith.constant 0 : i32
    return %c0_i32 : i32
  }
  func.func @transform_4(%arg0: i32) -> (i32, i32) {
    %c0_i32 = arith.constant 0 : i32
    %c0_i32_0 = arith.constant 0 : i32
    %c0_i32_1 = arith.constant 0 : i32
    return %c0_i32, %c0_i32_0 : i32, i32
  }
  func.func @transform_5(%arg0: i32) -> (i32, i32, i32) {
    %c0_i32 = arith.constant 0 : i32
    %c0_i32_0 = arith.constant 0 : i32
    %c0_i32_1 = arith.constant 0 : i32
    return %arg0, %c0_i32, %c0_i32_0 : i32, i32, i32
  }
  func.func @transform_6(%arg0: i32) -> (i32, i32, i32) {
    %c0_i32 = arith.constant 0 : i32
    %c0_i32_0 = arith.constant 0 : i32
    %c0_i32_1 = arith.constant 0 : i32
    return %arg0, %c0_i32, %c0_i32_0 : i32, i32, i32
  }
}

</mosaic_0001>

<llo_original>
// kernel: tpu_custom_call.1
$region0: #{tpu_custom_call.1}
  #allocation0 [shape = 'u32[]', space=smem, size = 0x4, offset = 0x4, fixed_abs, tag = 'smem constant byte address 0x4 - core index']
  #allocation1 [shape = 'u32[144,128]{1,0:T(1,128)}', space=vmem, size = 0x12000, scoped, tag = 'internal scratch']
  #allocation2 [shape = 'f32[1]{0:T(128)S(6)}', space=smem, size = 0x200, scoped, tag = 'scoped memory for tpu_custom_call.1']
  #allocation3 [shape = 'f32[1]{0:T(128)S(6)}', space=smem, size = 0x200, scoped, tag = 'scoped memory for tpu_custom_call.1']
  %s0 = inlined_call_operand.vmem [shape: f32[49], index: 0, kind: input, shape index: {}]
  %s1 = inlined_call_operand.<no memory space> [shape: f32[1], index: 1, kind: input, shape index: {}]
  %s2 = inlined_call_operand.vmem [shape: f32[49], index: 2, kind: input, shape index: {}]
  %s3 = inlined_call_operand.<no memory space> [shape: f32[1], index: 3, kind: input, shape index: {}]
  %s4 = inlined_call_operand.vmem [shape: s32[2,256], index: 4, kind: input, shape index: {}]
  %s5 = inlined_call_operand.hbm [shape: f32[2,4,256], index: 5, kind: input, shape index: {}]
  %s6 = inlined_call_operand.hbm [shape: f32[2,4,256], index: 6, kind: output, shape index: {}]
  %s7 = sld [smem:[#allocation0]]
  $region69: #{tpu_custom_call.1} parent=0
    _
  %s9 = ssub.s32 1, %s7
  %s10 = scalar_select 0, %s9, %s7
  %11 = sst [smem:[#allocation2]] %s1
  %12 = sst [smem:[#allocation3]] %s3
  $region1: #{tpu_custom_call.1} parent=0
    #allocation4 [shape = 'u8[512]{0}', space=smem, size = 0x200, scoped, tag = 'input window, operand 0, single buffered']
    #allocation5 [shape = 's32[2]{0}', space=sflag, size = 0x8, scoped, tag = 'scoped memory for tpu_custom_call.1']
    #allocation6 [shape = 's32[2]{0}', space=sflag, size = 0x8, scoped, tag = 'scoped memory for tpu_custom_call.1']
    #allocation7 [shape = 's32[2]{0}', space=sflag, size = 0x8, scoped, tag = 'scoped memory for tpu_custom_call.1']
    #allocation8 [shape = 'u8[512]{0}', space=smem, size = 0x200, scoped, tag = 'input window, operand 2, single buffered']
    #allocation9 [shape = 's32[1]{0}', space=sflag, size = 0x4, scoped, tag = 'scoped memory for tpu_custom_call.1']
    #allocation10 [shape = 'u8[8192]{0}', space=vmem, size = 0x2000, scoped, tag = 'input window, operand 5']
    #allocation11 [shape = 'u8[8192]{0}', space=vmem, size = 0x2000, scoped, tag = 'output window, operand 0']
    %13 = vsyncpa [#allocation7], 0
    %14 = vsyncpa [#allocation9], 0
    %15 = vsyncpa [#allocation5], 0
    %s16 = scalar_lea.sflag [#allocation5], 1
    %17 = vsyncpa %s16, 0
    %18 = vsyncpa [#allocation6], 0
    %s19 = scalar_lea.sflag [#allocation6], 1
    %20 = vsyncpa %s19, 0
    loop: start=0, step=1, limit=4
    $region2: #{tpu_custom_call.1} parent=1 // loop_pre_header
      _
    $region3: #{tpu_custom_call.1} parent=1 // loop_header
      %s22 = sphi 0, %s26
      %p23 = scmp.ge.s32.totalorder %s22, 4
      %s30 = sphi 0, %s30
      %s32 = sphi 0, %s30
      %s33 = sphi 0, %s32
      %s47 = sphi 0, %s33
      %s51 = sphi 0, %s51
      %s53 = sphi 0, %s51
      %s54 = sphi 0, %s53
      %s68 = sphi 0, %s54
      %s72 = sphi 0, %s72
      %s74 = sphi 0, %s72
      %s75 = sphi 0, %s74
      %s89 = sphi 0, %s75
      %s93 = sphi 0, %s93
      %s95 = sphi 0, %s93
      %s96 = sphi 0, %s95
      %s110 = sphi 0, %s96
      %s114 = sphi 0, %s114
      %s116 = sphi 0, %s114
      %s117 = sphi 0, %s116
      %s131 = sphi 0, %s117
      %s137 = sphi 0, %s139
      %s140 = sphi 0, %s137
      %s141 = sphi 0, %s140
      %s157 = sphi 0, %s141
      %s163 = sphi 0, %s165
      %s166 = sphi 0, %s163
      %s167 = sphi 0, %s166
      %s183 = sphi 0, %s167
    $region4: #{tpu_custom_call.1} parent=1 // loop_header_branch
      %25 = sbr.rel (%p23) target = $region8
    $region5: #{tpu_custom_call.1} parent=1 // loop_body
      %s27 = ssub.s32 %s22, 1
      %s28 = ssub.s32 %s22, 2
      %s29 = sadd.s32 %s22, 1
      %s31 = sadd.s32 %s30, 1
      %p34 = scmp.eq.s32.totalorder %s22, 1
      %p35 = scmp.ne.s32.totalorder %s30, %s32
      %p36 = scmp.eq.s32.totalorder %s22, 0
      %p37 = por %p35, %p36
      %p38 = scmp.ne.s32.totalorder %s30, %s32
      %p39 = scmp.eq.s32.totalorder %s27, 1
      %p40 = por %p38, %p39
      %p41 = scmp.ne.s32.totalorder %s32, %s33
      %p42 = scmp.eq.s32.totalorder %s27, 0
      %p43 = por %p41, %p42
      %p44 = scmp.ne.s32.totalorder %s32, %s33
      %p45 = scmp.eq.s32.totalorder %s28, 1
      %p46 = por %p44, %p45
      %p48 = scmp.ne.s32.totalorder %s33, %s47
      %p49 = scmp.eq.s32.totalorder %s28, 0
      %p50 = por %p48, %p49
      %s52 = sadd.s32 %s51, 1
      %p55 = scmp.eq.s32.totalorder %s22, 1
      %p56 = scmp.ne.s32.totalorder %s51, %s53
      %p57 = scmp.eq.s32.totalorder %s22, 0
      %p58 = por %p56, %p57
      %p59 = scmp.ne.s32.totalorder %s51, %s53
      %p60 = scmp.eq.s32.totalorder %s27, 1
      %p61 = por %p59, %p60
      %p62 = scmp.ne.s32.totalorder %s53, %s54
      %p63 = scmp.eq.s32.totalorder %s27, 0
      %p64 = por %p62, %p63
      %p65 = scmp.ne.s32.totalorder %s53, %s54
      %p66 = scmp.eq.s32.totalorder %s28, 1
      %p67 = por %p65, %p66
      %p69 = scmp.ne.s32.totalorder %s54, %s68
      %p70 = scmp.eq.s32.totalorder %s28, 0
      %p71 = por %p69, %p70
      %s73 = sadd.s32 %s72, 1
      %p76 = scmp.eq.s32.totalorder %s22, 1
      %p77 = scmp.ne.s32.totalorder %s72, %s74
      %p78 = scmp.eq.s32.totalorder %s22, 0
      %p79 = por %p77, %p78
      %p80 = scmp.ne.s32.totalorder %s72, %s74
      %p81 = scmp.eq.s32.totalorder %s27, 1
      %p82 = por %p80, %p81
      %p83 = scmp.ne.s32.totalorder %s74, %s75
      %p84 = scmp.eq.s32.totalorder %s27, 0
      %p85 = por %p83, %p84
      %p86 = scmp.ne.s32.totalorder %s74, %s75
      %p87 = scmp.eq.s32.totalorder %s28, 1
      %p88 = por %p86, %p87
      %p90 = scmp.ne.s32.totalorder %s75, %s89
      %p91 = scmp.eq.s32.totalorder %s28, 0
      %p92 = por %p90, %p91
      %s94 = sadd.s32 %s93, 1
      %p97 = scmp.eq.s32.totalorder %s22, 1
      %p98 = scmp.ne.s32.totalorder %s93, %s95
      %p99 = scmp.eq.s32.totalorder %s22, 0
      %p100 = por %p98, %p99
      %p101 = scmp.ne.s32.totalorder %s93, %s95
      %p102 = scmp.eq.s32.totalorder %s27, 1
      %p103 = por %p101, %p102
      %p104 = scmp.ne.s32.totalorder %s95, %s96
      %p105 = scmp.eq.s32.totalorder %s27, 0
      %p106 = por %p104, %p105
      %p107 = scmp.ne.s32.totalorder %s95, %s96
      %p108 = scmp.eq.s32.totalorder %s28, 1
      %p109 = por %p107, %p108
      %p111 = scmp.ne.s32.totalorder %s96, %s110
      %p112 = scmp.eq.s32.totalorder %s28, 0
      %p113 = por %p111, %p112
      %s115 = sadd.s32 %s114, 1
      %p118 = scmp.eq.s32.totalorder %s22, 1
      %p119 = scmp.ne.s32.totalorder %s114, %s116
      %p120 = scmp.eq.s32.totalorder %s22, 0
      %p121 = por %p119, %p120
      %p122 = scmp.ne.s32.totalorder %s114, %s116
      %p123 = scmp.eq.s32.totalorder %s27, 1
      %p124 = por %p122, %p123
      %p125 = scmp.ne.s32.totalorder %s116, %s117
      %p126 = scmp.eq.s32.totalorder %s27, 0
      %p127 = por %p125, %p126
      %p128 = scmp.ne.s32.totalorder %s116, %s117
      %p129 = scmp.eq.s32.totalorder %s28, 1
      %p130 = por %p128, %p129
      %p132 = scmp.ne.s32.totalorder %s117, %s131
      %p133 = scmp.eq.s32.totalorder %s28, 0
      %p134 = por %p132, %p133
      %s135 = ssub.s32 %s22, %s29
      %p136 = scmp.eq.s32.totalorder %s135, 0
      %s138 = sadd.s32 %s137, 1
      %s139 = scalar_select %p136, %s137, %s138
      %p142 = pneg %p136
      %p143 = scmp.eq.s32.totalorder %s22, 1
      %p144 = por %p142, %p143
      %p145 = scmp.ne.s32.totalorder %s137, %s140
      %p146 = scmp.eq.s32.totalorder %s22, 0
      %p147 = por %p145, %p146
      %p148 = scmp.ne.s32.totalorder %s137, %s140
      %p149 = scmp.eq.s32.totalorder %s27, 1
      %p150 = por %p148, %p149
      %p151 = scmp.ne.s32.totalorder %s140, %s141
      %p152 = scmp.eq.s32.totalorder %s27, 0
      %p153 = por %p151, %p152
      %p154 = scmp.ne.s32.totalorder %s140, %s141
      %p155 = scmp.eq.s32.totalorder %s28, 1
      %p156 = por %p154, %p155
      %p158 = scmp.ne.s32.totalorder %s141, %s157
      %p159 = scmp.eq.s32.totalorder %s28, 0
      %p160 = por %p158, %p159
      %s161 = ssub.s32 %s22, %s29
      %p162 = scmp.eq.s32.totalorder %s161, 0
      %s164 = sadd.s32 %s163, 1
      %s165 = scalar_select %p162, %s163, %s164
      %p168 = pneg %p162
      %p169 = scmp.eq.s32.totalorder %s22, 1
      %p170 = por %p168, %p169
      %p171 = scmp.ne.s32.totalorder %s163, %s166
      %p172 = scmp.eq.s32.totalorder %s22, 0
      %p173 = por %p171, %p172
      %p174 = scmp.ne.s32.totalorder %s163, %s166
      %p175 = scmp.eq.s32.totalorder %s27, 1
      %p176 = por %p174, %p175
      %p177 = scmp.ne.s32.totalorder %s166, %s167
      %p178 = scmp.eq.s32.totalorder %s27, 0
      %p179 = por %p177, %p178
      %p180 = scmp.ne.s32.totalorder %s166, %s167
      %p181 = scmp.eq.s32.totalorder %s28, 1
      %p182 = por %p180, %p181
      %p184 = scmp.ne.s32.totalorder %s167, %s183
      %p185 = scmp.eq.s32.totalorder %s28, 0
      %p186 = por %p184, %p185
      %p187 = scmp.le.s32.totalorder 1, %s22
      %p188 = scmp.lt.s32.totalorder %s22, 3
      %p189 = pnand %p187, %p188
      %p190 = pneg %p189
      // Predicated region
      $region9: #{tpu_custom_call.1} parent=5 // pred_check
        _
      $region10: #{tpu_custom_call.1} parent=5 // pred_check_branch
        %192 = sbr.rel (%p189) target = $region12
      $region11: #{tpu_custom_call.1} parent=5 // pred_region
        %s193 = ssub.s32 %s22, 1
        // Predicated region
        $region13: #{tpu_custom_call.1} parent=11 // pred_check
          %p194 = pneg %p43
        $region14: #{tpu_custom_call.1} parent=11 // pred_check_branch
          %196 = sbr.rel (%p194) target = $region16
        $region15: #{tpu_custom_call.1} parent=11 // pred_region
          %s198 = ssub.s32 16, 16
          %199 = vsyncadd [#allocation7], %s198
          %s201 = sshll.u32 %s0, 4
          %s202 = int_to_ptr.vmem [resolvable:$true] %s201
          %204 = dma.vmem_to_smem %s202, 16, [#allocation4], [#allocation7]
        $region16: #{tpu_custom_call.1} parent=11 // pred_fallthru
          _
        // Predicated region
        $region17: #{tpu_custom_call.1} parent=11 // pred_check
          %p205 = pneg %p64
        $region18: #{tpu_custom_call.1} parent=11 // pred_check_branch
          %207 = sbr.rel (%p205) target = $region20
        $region19: #{tpu_custom_call.1} parent=11 // pred_region
          _
        $region20: #{tpu_custom_call.1} parent=11 // pred_fallthru
          _
        // Predicated region
        $region21: #{tpu_custom_call.1} parent=11 // pred_check
          %p208 = pneg %p85
        $region22: #{tpu_custom_call.1} parent=11 // pred_check_branch
          %210 = sbr.rel (%p208) target = $region24
        $region23: #{tpu_custom_call.1} parent=11 // pred_region
          %s212 = ssub.s32 16, 16
          %213 = vsyncadd [#allocation9], %s212
          %s215 = sshll.u32 %s2, 4
          %s216 = int_to_ptr.vmem [resolvable:$true] %s215
          %218 = dma.vmem_to_smem %s216, 16, [#allocation8], [#allocation9]
        $region24: #{tpu_custom_call.1} parent=11 // pred_fallthru
          _
        // Predicated region
        $region25: #{tpu_custom_call.1} parent=11 // pred_check
          %p219 = pneg %p106
        $region26: #{tpu_custom_call.1} parent=11 // pred_check_branch
          %221 = sbr.rel (%p219) target = $region28
        $region27: #{tpu_custom_call.1} parent=11 // pred_region
          _
        $region28: #{tpu_custom_call.1} parent=11 // pred_fallthru
          _
        // Predicated region
        $region29: #{tpu_custom_call.1} parent=11 // pred_check
          %p222 = pneg %p127
        $region30: #{tpu_custom_call.1} parent=11 // pred_check_branch
          %224 = sbr.rel (%p222) target = $region32
        $region31: #{tpu_custom_call.1} parent=11 // pred_region
          _
        $region32: #{tpu_custom_call.1} parent=11 // pred_fallthru
          _
      $region12: #{tpu_custom_call.1} parent=5 // pred_fallthru
        _
      %p225 = scmp.lt.s32.totalorder %s22, 2
      // Predicated region
      $region33: #{tpu_custom_call.1} parent=5 // pred_check
        %p226 = pneg %p225
      $region34: #{tpu_custom_call.1} parent=5 // pred_check_branch
        %228 = sbr.rel (%p226) target = $region36
      $region35: #{tpu_custom_call.1} parent=5 // pred_region
        // Predicated region
        $region37: #{tpu_custom_call.1} parent=35 // pred_check
          %p229 = pneg %p147
        $region38: #{tpu_custom_call.1} parent=35 // pred_check_branch
          %231 = sbr.rel (%p229) target = $region40
        $region39: #{tpu_custom_call.1} parent=35 // pred_region
          %s232 = sand.u32 %s137, 1
          %s233 = scalar_lea.sflag [#allocation5], %s232
          %s234 = sand.u32 %s137, 1
          %s235 = smul.addr %s234, 8
          %s236 = scalar_lea.vmem [#allocation10], %s235
          %s238 = ssub.s32 128, 128
          %239 = vsyncadd %s233, %s238
          %s240 = smul.addr %s22, 2
          %s241 = smul.addr %s240, 64
          %s242 = scalar_lea.hbm %s5, %s241
          %s244 = sshll.u32 %s236, 4
          %s245 = int_to_ptr.vmem [resolvable:$true] %s244
          %247 = dma.hbm_to_vmem [thread:$0]  %s242, 128, %s245, %s233
        $region40: #{tpu_custom_call.1} parent=35 // pred_fallthru
          _
      $region36: #{tpu_custom_call.1} parent=5 // pred_fallthru
        _
      %p248 = scmp.le.s32.totalorder 1, %s22
      %p249 = scmp.lt.s32.totalorder %s22, 3
      %p250 = pnand %p248, %p249
      %p251 = pneg %p250
      // Predicated region
      $region41: #{tpu_custom_call.1} parent=5 // pred_check
        _
      $region42: #{tpu_custom_call.1} parent=5 // pred_check_branch
        %253 = sbr.rel (%p250) target = $region44
      $region43: #{tpu_custom_call.1} parent=5 // pred_region
        %s254 = ssub.s32 %s22, 1
        // Predicated region
        $region45: #{tpu_custom_call.1} parent=43 // pred_check
          %p255 = pneg %p43
        $region46: #{tpu_custom_call.1} parent=43 // pred_check_branch
          %257 = sbr.rel (%p255) target = $region48
        $region47: #{tpu_custom_call.1} parent=43 // pred_region
          %258 = dma.done [#allocation7], 16
        $region48: #{tpu_custom_call.1} parent=43 // pred_fallthru
          _
        // Predicated region
        $region49: #{tpu_custom_call.1} parent=43 // pred_check
          %p259 = pneg %p85
        $region50: #{tpu_custom_call.1} parent=43 // pred_check_branch
          %261 = sbr.rel (%p259) target = $region52
        $region51: #{tpu_custom_call.1} parent=43 // pred_region
          %262 = dma.done [#allocation9], 16
        $region52: #{tpu_custom_call.1} parent=43 // pred_fallthru
          _
        %s263 = sand.u32 %s140, 1
        %s264 = scalar_lea.sflag [#allocation5], %s263
        %s265 = sand.u32 %s140, 1
        %s266 = smul.addr %s265, 8
        %s267 = scalar_lea.vmem [#allocation10], %s266
        // Predicated region
        $region53: #{tpu_custom_call.1} parent=43 // pred_check
          %p268 = pneg %p153
        $region54: #{tpu_custom_call.1} parent=43 // pred_check_branch
          %270 = sbr.rel (%p268) target = $region56
        $region55: #{tpu_custom_call.1} parent=43 // pred_region
          %271 = dma.done %s264, 128
        $region56: #{tpu_custom_call.1} parent=43 // pred_fallthru
          _
        %272 = sfence
        %p273 = pneg %p43
        %p274 = pneg %p40
        %p275 = pneg %p64
        %p276 = pneg %p61
        %p277 = pneg %p85
        %p278 = pneg %p82
        %p279 = pneg %p106
        %p280 = pneg %p103
        %p281 = pneg %p127
        %p282 = pneg %p124
        %s283 = sand.u32 %s140, 1
        %s284 = scalar_lea.sflag [#allocation5], %s283
        %s285 = sand.u32 %s140, 1
        %s286 = smul.addr %s285, 8
        %s287 = scalar_lea.vmem [#allocation10], %s286
        %p288 = pneg %p153
        %p289 = pneg %p150
        %p290 = pneg %p179
        %p291 = pneg %p176
        %s292 = sand.u32 %s166, 1
        %s293 = scalar_lea.sflag [#allocation6], %s292
        %s294 = sand.u32 %s166, 1
        %s295 = smul.addr %s294, 8
        %s296 = scalar_lea.vmem [#allocation11], %s295
        %s297 = smul.u32 0, 2
        %s298 = smul.addr %s297, 4
        %s299 = scalar_lea.vmem %s267, %s298 [#allocation10]
        %v300 = vld [vmem:[%s299] sm:$0xff]
        %v302 = vcombine.high %v300, %v300
        %vm304 = vcmask 1043456
        %v305 = vsel %vm304, %v300, 0.0
        %v306 = vrot.slane %v305, 4
        %v307 = vadd.f32 %v305, %v306
        %v308 = vrot.slane %v307, 2
        %v309 = vadd.f32 %v307, %v308
        %v310 = vrot.slane %v309, 1
        %v311 = vadd.f32 %v309, %v310
        %v312 = vsel %vm304, %v302, 0.0
        %v313 = vrot.slane %v312, 4
        %v314 = vadd.f32 %v312, %v313
        %v315 = vrot.slane %v314, 2
        %v316 = vadd.f32 %v314, %v315
        %v317 = vrot.slane %v316, 1
        %v318 = vadd.f32 %v316, %v317
        %v319 = vadd.f32 %v311, 0.0
        %v320 = vadd.f32 %v318, 0.0
        %v321 = vmul.f32 %v319, 0.25
        %v322 = vmul.f32 %v320, 0.25
        %v323 = vld [vmem:[%s4] ss:$2 sm:$0x3]
        %s324 = scalar_lea.vmem %s4, 1
        %v325 = vld [vmem:[%s324] ss:$2 sm:$0x3]
        %vm326 = vcmp.ge.s32.totalorder %v323, 3
        %vm327 = vcmp.le.s32.totalorder %v323, 18
        %vm328 = vmand %vm326, %vm327
        %vm329 = vcmp.ge.s32.totalorder %v323, 2
        %vm330 = vcmp.le.s32.totalorder %v323, 17
        %vm331 = vmand %vm329, %vm330
        %vm332 = vcmp.ge.s32.totalorder %v323, 1
        %vm333 = vcmp.le.s32.totalorder %v323, 16
        %vm334 = vmand %vm332, %vm333
        %vm335 = vcmp.ge.s32.totalorder %v323, 0
        %vm336 = vcmp.le.s32.totalorder %v323, 15
        %vm337 = vmand %vm335, %vm336
        %vm338 = vcmp.ge.s32.totalorder %v323, 4294967295
        %vm339 = vcmp.le.s32.totalorder %v323, 14
        %vm340 = vmand %vm338, %vm339
        %vm341 = vcmp.ge.s32.totalorder %v323, 4294967294
        %vm342 = vcmp.le.s32.totalorder %v323, 13
        %vm343 = vmand %vm341, %vm342
        %vm344 = vcmp.ge.s32.totalorder %v323, 4294967293
        %vm345 = vcmp.le.s32.totalorder %v323, 12
        %vm346 = vmand %vm344, %vm345
        %vm347 = vcmp.ge.s32.totalorder %v325, 48
        %vm348 = vcmp.le.s32.totalorder %v325, 288
        %vm349 = vmand %vm347, %vm348
        %vm350 = vcmp.ge.s32.totalorder %v325, 32
        %vm351 = vcmp.le.s32.totalorder %v325, 272
        %vm352 = vmand %vm350, %vm351
        %vm353 = vcmp.ge.s32.totalorder %v325, 16
        %vm354 = vcmp.le.s32.totalorder %v325, 256
        %vm355 = vmand %vm353, %vm354
        %vm356 = vcmp.ge.s32.totalorder %v325, 0
        %vm357 = vcmp.le.s32.totalorder %v325, 240
        %vm358 = vmand %vm356, %vm357
        %vm359 = vcmp.ge.s32.totalorder %v325, 4294967280
        %vm360 = vcmp.le.s32.totalorder %v325, 224
        %vm361 = vmand %vm359, %vm360
        %vm362 = vcmp.ge.s32.totalorder %v325, 4294967264
        %vm363 = vcmp.le.s32.totalorder %v325, 208
        %vm364 = vmand %vm362, %vm363
        %vm365 = vcmp.ge.s32.totalorder %v325, 4294967248
        %vm366 = vcmp.le.s32.totalorder %v325, 192
        %vm367 = vmand %vm365, %vm366
        %s368 = sld [smem:[#allocation2]]
        %v369 = vstv %s368
        %370 = vrot.lane.b32.xlu0 %v321, 51
        %v371 = vpop.permute.xlu0 %370
        %372 = vrot.lane.b32.xlu0 %v322, 51
        %v373 = vpop.permute.xlu0 %372
        %v374 = vlaneseq
        %v375 = vand.u32 %v374, 127
        %vm376 = vcmp.lt.s32.totalorder %v375, 51
        %v377 = vsel %vm376, %v371, %v373
        %v378 = vsel %vm376, %v373, %v371
        %vm379 = vmand %vm349, %vm328
        %v382 = vcombine.low %v378, %v377
        %v384 = vunpack.c.l.s4 1966171168
        %v385 = vunpack.c.0.s8 %v384
        %v386 = vlaneseq
        %v387 = vshrl.u32 %v386, 7
        %v388 = vsub.s32 %v385, %v387
        %v389 = vrot.slane %v382, %v388
        %v391 = vunpack.c.l.s4 1966171168
        %v392 = vunpack.c.0.s8 %v391
        %v393 = vlaneseq
        %v394 = vshrl.u32 %v393, 7
        %v395 = vsub.s32 %v392, %v394
        %v396 = vrot.slane %v389, %v395
        %v398 = vsel %vm379, %v396, 0.0
        %s399 = sld [smem:[#allocation4]]
        %v400 = vstv %s399
        %v401 = vmul.f32 %v400, %v398
        %v402 = vadd.f32 %v369, %v401
        %403 = vrot.lane.b32.xlu0 %v321, 50
        %v404 = vpop.permute.xlu0 %403
        %405 = vrot.lane.b32.xlu0 %v322, 50
        %v406 = vpop.permute.xlu0 %405
        %vm407 = vcmp.lt.s32.totalorder %v375, 50
        %v408 = vsel %vm407, %v404, %v406
        %v409 = vsel %vm407, %v406, %v404
        %vm410 = vmand %vm349, %vm331
        %v413 = vcombine.low %v409, %v408
        %v415 = vunpack.c.l.s4 1966171168
        %v416 = vunpack.c.0.s8 %v415
        %v417 = vlaneseq
        %v418 = vshrl.u32 %v417, 7
        %v419 = vsub.s32 %v416, %v418
        %v420 = vrot.slane %v413, %v419
        %v422 = vunpack.c.l.s4 1966171168
        %v423 = vunpack.c.0.s8 %v422
        %v424 = vlaneseq
        %v425 = vshrl.u32 %v424, 7
        %v426 = vsub.s32 %v423, %v425
        %v427 = vrot.slane %v420, %v426
        %v429 = vsel %vm410, %v427, 0.0
        %s430 = sld [smem:[#allocation4 + $0x1]]
        %v431 = vstv %s430
        %v432 = vmul.f32 %v431, %v429
        %v433 = vadd.f32 %v402, %v432
        %434 = vrot.lane.b32.xlu0 %v321, 49
        %v435 = vpop.permute.xlu0 %434
        %436 = vrot.lane.b32.xlu0 %v322, 49
        %v437 = vpop.permute.xlu0 %436
        %vm438 = vcmp.lt.s32.totalorder %v375, 49
        %v439 = vsel %vm438, %v435, %v437
        %v440 = vsel %vm438, %v437, %v435
        %vm441 = vmand %vm349, %vm334
        %v444 = vcombine.low %v440, %v439
        %v446 = vunpack.c.l.s4 1966171168
        %v447 = vunpack.c.0.s8 %v446
        %v448 = vlaneseq
        %v449 = vshrl.u32 %v448, 7
        %v450 = vsub.s32 %v447, %v449
        %v451 = vrot.slane %v444, %v450
        %v453 = vunpack.c.l.s4 1966171168
        %v454 = vunpack.c.0.s8 %v453
        %v455 = vlaneseq
        %v456 = vshrl.u32 %v455, 7
        %v457 = vsub.s32 %v454, %v456
        %v458 = vrot.slane %v451, %v457
        %v460 = vsel %vm441, %v458, 0.0
        %s461 = sld [smem:[#allocation4 + $0x2]]
        %v462 = vstv %s461
        %v463 = vmul.f32 %v462, %v460
        %v464 = vadd.f32 %v433, %v463
        %465 = vrot.lane.b32.xlu0 %v321, 48
        %v466 = vpop.permute.xlu0 %465
        %467 = vrot.lane.b32.xlu0 %v322, 48
        %v468 = vpop.permute.xlu0 %467
        %vm469 = vcmp.lt.s32.totalorder %v375, 48
        %v470 = vsel %vm469, %v466, %v468
        %v471 = vsel %vm469, %v468, %v466
        %vm472 = vmand %vm349, %vm337
        %v475 = vcombine.low %v471, %v470
        %v477 = vunpack.c.l.s4 1966171168
        %v478 = vunpack.c.0.s8 %v477
        %v479 = vlaneseq
        %v480 = vshrl.u32 %v479, 7
        %v481 = vsub.s32 %v478, %v480
        %v482 = vrot.slane %v475, %v481
        %v484 = vunpack.c.l.s4 1966171168
        %v485 = vunpack.c.0.s8 %v484
        %v486 = vlaneseq
        %v487 = vshrl.u32 %v486, 7
        %v488 = vsub.s32 %v485, %v487
        %v489 = vrot.slane %v482, %v488
        %v491 = vsel %vm472, %v489, 0.0
        %s492 = sld [smem:[#allocation4 + $0x3]]
        %v493 = vstv %s492
        %v494 = vmul.f32 %v493, %v491
        %v495 = vadd.f32 %v464, %v494
        %496 = vrot.lane.b32.xlu0 %v321, 47
        %v497 = vpop.permute.xlu0 %496
        %498 = vrot.lane.b32.xlu0 %v322, 47
        %v499 = vpop.permute.xlu0 %498
        %vm500 = vcmp.lt.s32.totalorder %v375, 47
        %v501 = vsel %vm500, %v497, %v499
        %v502 = vsel %vm500, %v499, %v497
        %vm503 = vmand %vm349, %vm340
        %v506 = vcombine.low %v502, %v501
        %v508 = vunpack.c.l.s4 1966171168
        %v509 = vunpack.c.0.s8 %v508
        %v510 = vlaneseq
        %v511 = vshrl.u32 %v510, 7
        %v512 = vsub.s32 %v509, %v511
        %v513 = vrot.slane %v506, %v512
        %v515 = vunpack.c.l.s4 1966171168
        %v516 = vunpack.c.0.s8 %v515
        %v517 = vlaneseq
        %v518 = vshrl.u32 %v517, 7
        %v519 = vsub.s32 %v516, %v518
        %v520 = vrot.slane %v513, %v519
        %v522 = vsel %vm503, %v520, 0.0
        %s523 = sld [smem:[#allocation4 + $0x4]]
        %v524 = vstv %s523
        %v525 = vmul.f32 %v524, %v522
        %v526 = vadd.f32 %v495, %v525
        %527 = vrot.lane.b32.xlu0 %v321, 46
        %v528 = vpop.permute.xlu0 %527
        %529 = vrot.lane.b32.xlu0 %v322, 46
        %v530 = vpop.permute.xlu0 %529
        %vm531 = vcmp.lt.s32.totalorder %v375, 46
        %v532 = vsel %vm531, %v528, %v530
        %v533 = vsel %vm531, %v530, %v528
        %vm534 = vmand %vm349, %vm343
        %v537 = vcombine.low %v533, %v532
        %v539 = vunpack.c.l.s4 1966171168
        %v540 = vunpack.c.0.s8 %v539
        %v541 = vlaneseq
        %v542 = vshrl.u32 %v541, 7
        %v543 = vsub.s32 %v540, %v542
        %v544 = vrot.slane %v537, %v543
        %v546 = vunpack.c.l.s4 1966171168
        %v547 = vunpack.c.0.s8 %v546
        %v548 = vlaneseq
        %v549 = vshrl.u32 %v548, 7
        %v550 = vsub.s32 %v547, %v549
        %v551 = vrot.slane %v544, %v550
        %v553 = vsel %vm534, %v551, 0.0
        %s554 = sld [smem:[#allocation4 + $0x5]]
        %v555 = vstv %s554
        %v556 = vmul.f32 %v555, %v553
        %v557 = vadd.f32 %v526, %v556
        %558 = vrot.lane.b32.xlu0 %v321, 45
        %v559 = vpop.permute.xlu0 %558
        %560 = vrot.lane.b32.xlu0 %v322, 45
        %v561 = vpop.permute.xlu0 %560
        %vm562 = vcmp.lt.s32.totalorder %v375, 45
        %v563 = vsel %vm562, %v559, %v561
        %v564 = vsel %vm562, %v561, %v559
        %vm565 = vmand %vm349, %vm346
        %v568 = vcombine.low %v564, %v563
        %v570 = vunpack.c.l.s4 1966171168
        %v571 = vunpack.c.0.s8 %v570
        %v572 = vlaneseq
        %v573 = vshrl.u32 %v572, 7
        %v574 = vsub.s32 %v571, %v573
        %v575 = vrot.slane %v568, %v574
        %v577 = vunpack.c.l.s4 1966171168
        %v578 = vunpack.c.0.s8 %v577
        %v579 = vlaneseq
        %v580 = vshrl.u32 %v579, 7
        %v581 = vsub.s32 %v578, %v580
        %v582 = vrot.slane %v575, %v581
        %v584 = vsel %vm565, %v582, 0.0
        %s585 = sld [smem:[#allocation4 + $0x6]]
        %v586 = vstv %s585
        %v587 = vmul.f32 %v586, %v584
        %v588 = vadd.f32 %v557, %v587
        %589 = vrot.lane.b32.xlu0 %v321, 35
        %v590 = vpop.permute.xlu0 %589
        %591 = vrot.lane.b32.xlu0 %v322, 35
        %v592 = vpop.permute.xlu0 %591
        %vm593 = vcmp.lt.s32.totalorder %v375, 35
        %v594 = vsel %vm593, %v590, %v592
        %v595 = vsel %vm593, %v592, %v590
        %vm596 = vmand %vm352, %vm328
        %v599 = vcombine.low %v595, %v594
        %v601 = vunpack.c.l.s4 1966171168
        %v602 = vunpack.c.0.s8 %v601
        %v603 = vlaneseq
        %v604 = vshrl.u32 %v603, 7
        %v605 = vsub.s32 %v602, %v604
        %v606 = vrot.slane %v599, %v605
        %v608 = vunpack.c.l.s4 1966171168
        %v609 = vunpack.c.0.s8 %v608
        %v610 = vlaneseq
        %v611 = vshrl.u32 %v610, 7
        %v612 = vsub.s32 %v609, %v611
        %v613 = vrot.slane %v606, %v612
        %v615 = vsel %vm596, %v613, 0.0
        %s616 = sld [smem:[#allocation4 + $0x7]]
        %v617 = vstv %s616
        %v618 = vmul.f32 %v617, %v615
        %v619 = vadd.f32 %v588, %v618
        %620 = vrot.lane.b32.xlu0 %v321, 34
        %v621 = vpop.permute.xlu0 %620
        %622 = vrot.lane.b32.xlu0 %v322, 34
        %v623 = vpop.permute.xlu0 %622
        %vm624 = vcmp.lt.s32.totalorder %v375, 34
        %v625 = vsel %vm624, %v621, %v623
        %v626 = vsel %vm624, %v623, %v621
        %vm627 = vmand %vm352, %vm331
        %v630 = vcombine.low %v626, %v625
        %v632 = vunpack.c.l.s4 1966171168
        %v633 = vunpack.c.0.s8 %v632
        %v634 = vlaneseq
        %v635 = vshrl.u32 %v634, 7
        %v636 = vsub.s32 %v633, %v635
        %v637 = vrot.slane %v630, %v636
        %v639 = vunpack.c.l.s4 1966171168
        %v640 = vunpack.c.0.s8 %v639
        %v641 = vlaneseq
        %v642 = vshrl.u32 %v641, 7
        %v643 = vsub.s32 %v640, %v642
        %v644 = vrot.slane %v637, %v643
        %v646 = vsel %vm627, %v644, 0.0
        %s647 = sld [smem:[#allocation4 + $0x8]]
        %v648 = vstv %s647
        %v649 = vmul.f32 %v648, %v646
        %v650 = vadd.f32 %v619, %v649
        %651 = vrot.lane.b32.xlu0 %v321, 33
        %v652 = vpop.permute.xlu0 %651
        %653 = vrot.lane.b32.xlu0 %v322, 33
        %v654 = vpop.permute.xlu0 %653
        %vm655 = vcmp.lt.s32.totalorder %v375, 33
        %v656 = vsel %vm655, %v652, %v654
        %v657 = vsel %vm655, %v654, %v652
        %vm658 = vmand %vm352, %vm334
        %v661 = vcombine.low %v657, %v656
        %v663 = vunpack.c.l.s4 1966171168
        %v664 = vunpack.c.0.s8 %v663
        %v665 = vlaneseq
        %v666 = vshrl.u32 %v665, 7
        %v667 = vsub.s32 %v664, %v666
        %v668 = vrot.slane %v661, %v667
        %v670 = vunpack.c.l.s4 1966171168
        %v671 = vunpack.c.0.s8 %v670
        %v672 = vlaneseq
        %v673 = vshrl.u32 %v672, 7
        %v674 = vsub.s32 %v671, %v673
        %v675 = vrot.slane %v668, %v674
        %v677 = vsel %vm658, %v675, 0.0
        %s678 = sld [smem:[#allocation4 + $0x9]]
        %v679 = vstv %s678
        %v680 = vmul.f32 %v679, %v677
        %v681 = vadd.f32 %v650, %v680
        %682 = vrot.lane.b32.xlu0 %v321, 32
        %v683 = vpop.permute.xlu0 %682
        %684 = vrot.lane.b32.xlu0 %v322, 32
        %v685 = vpop.permute.xlu0 %684
        %vm686 = vcmp.lt.s32.totalorder %v375, 32
        %v687 = vsel %vm686, %v683, %v685
        %v688 = vsel %vm686, %v685, %v683
        %vm689 = vmand %vm352, %vm337
        %v692 = vcombine.low %v688, %v687
        %v694 = vunpack.c.l.s4 1966171168
        %v695 = vunpack.c.0.s8 %v694
        %v696 = vlaneseq
        %v697 = vshrl.u32 %v696, 7
        %v698 = vsub.s32 %v695, %v697
        %v699 = vrot.slane %v692, %v698
        %v701 = vunpack.c.l.s4 1966171168
        %v702 = vunpack.c.0.s8 %v701
        %v703 = vlaneseq
        %v704 = vshrl.u32 %v703, 7
        %v705 = vsub.s32 %v702, %v704
        %v706 = vrot.slane %v699, %v705
        %v708 = vsel %vm689, %v706, 0.0
        %s709 = sld [smem:[#allocation4 + $0xa]]
        %v710 = vstv %s709
        %v711 = vmul.f32 %v710, %v708
        %v712 = vadd.f32 %v681, %v711
        %713 = vrot.lane.b32.xlu0 %v321, 31
        %v714 = vpop.permute.xlu0 %713
        %715 = vrot.lane.b32.xlu0 %v322, 31
        %v716 = vpop.permute.xlu0 %715
        %vm717 = vcmp.lt.s32.totalorder %v375, 31
        %v718 = vsel %vm717, %v714, %v716
        %v719 = vsel %vm717, %v716, %v714
        %vm720 = vmand %vm352, %vm340
        %v723 = vcombine.low %v719, %v718
        %v725 = vunpack.c.l.s4 1966171168
        %v726 = vunpack.c.0.s8 %v725
        %v727 = vlaneseq
        %v728 = vshrl.u32 %v727, 7
        %v729 = vsub.s32 %v726, %v728
        %v730 = vrot.slane %v723, %v729
        %v732 = vunpack.c.l.s4 1966171168
        %v733 = vunpack.c.0.s8 %v732
        %v734 = vlaneseq
        %v735 = vshrl.u32 %v734, 7
        %v736 = vsub.s32 %v733, %v735
        %v737 = vrot.slane %v730, %v736
        %v739 = vsel %vm720, %v737, 0.0
        %s740 = sld [smem:[#allocation4 + $0xb]]
        %v741 = vstv %s740
        %v742 = vmul.f32 %v741, %v739
        %v743 = vadd.f32 %v712, %v742
        %744 = vrot.lane.b32.xlu0 %v321, 30
        %v745 = vpop.permute.xlu0 %744
        %746 = vrot.lane.b32.xlu0 %v322, 30
        %v747 = vpop.permute.xlu0 %746
        %vm748 = vcmp.lt.s32.totalorder %v375, 30
        %v749 = vsel %vm748, %v745, %v747
        %v750 = vsel %vm748, %v747, %v745
        %vm751 = vmand %vm352, %vm343
        %v754 = vcombine.low %v750, %v749
        %v756 = vunpack.c.l.s4 1966171168
        %v757 = vunpack.c.0.s8 %v756
        %v758 = vlaneseq
        %v759 = vshrl.u32 %v758, 7
        %v760 = vsub.s32 %v757, %v759
        %v761 = vrot.slane %v754, %v760
        %v763 = vunpack.c.l.s4 1966171168
        %v764 = vunpack.c.0.s8 %v763
        %v765 = vlaneseq
        %v766 = vshrl.u32 %v765, 7
        %v767 = vsub.s32 %v764, %v766
        %v768 = vrot.slane %v761, %v767
        %v770 = vsel %vm751, %v768, 0.0
        %s771 = sld [smem:[#allocation4 + $0xc]]
        %v772 = vstv %s771
        %v773 = vmul.f32 %v772, %v770
        %v774 = vadd.f32 %v743, %v773
        %775 = vrot.lane.b32.xlu0 %v321, 29
        %v776 = vpop.permute.xlu0 %775
        %777 = vrot.lane.b32.xlu0 %v322, 29
        %v778 = vpop.permute.xlu0 %777
        %vm779 = vcmp.lt.s32.totalorder %v375, 29
        %v780 = vsel %vm779, %v776, %v778
        %v781 = vsel %vm779, %v778, %v776
        %vm782 = vmand %vm352, %vm346
        %v785 = vcombine.low %v781, %v780
        %v787 = vunpack.c.l.s4 1966171168
        %v788 = vunpack.c.0.s8 %v787
        %v789 = vlaneseq
        %v790 = vshrl.u32 %v789, 7
        %v791 = vsub.s32 %v788, %v790
        %v792 = vrot.slane %v785, %v791
        %v794 = vunpack.c.l.s4 1966171168
        %v795 = vunpack.c.0.s8 %v794
        %v796 = vlaneseq
        %v797 = vshrl.u32 %v796, 7
        %v798 = vsub.s32 %v795, %v797
        %v799 = vrot.slane %v792, %v798
        %v801 = vsel %vm782, %v799, 0.0
        %s802 = sld [smem:[#allocation4 + $0xd]]
        %v803 = vstv %s802
        %v804 = vmul.f32 %v803, %v801
        %v805 = vadd.f32 %v774, %v804
        %806 = vrot.lane.b32.xlu0 %v321, 19
        %v807 = vpop.permute.xlu0 %806
        %808 = vrot.lane.b32.xlu0 %v322, 19
        %v809 = vpop.permute.xlu0 %808
        %vm810 = vcmp.lt.s32.totalorder %v375, 19
        %v811 = vsel %vm810, %v807, %v809
        %v812 = vsel %vm810, %v809, %v807
        %vm813 = vmand %vm355, %vm328
        %v816 = vcombine.low %v812, %v811
        %v818 = vunpack.c.l.s4 1966171168
        %v819 = vunpack.c.0.s8 %v818
        %v820 = vlaneseq
        %v821 = vshrl.u32 %v820, 7
        %v822 = vsub.s32 %v819, %v821
        %v823 = vrot.slane %v816, %v822
        %v825 = vunpack.c.l.s4 1966171168
        %v826 = vunpack.c.0.s8 %v825
        %v827 = vlaneseq
        %v828 = vshrl.u32 %v827, 7
        %v829 = vsub.s32 %v826, %v828
        %v830 = vrot.slane %v823, %v829
        %v832 = vsel %vm813, %v830, 0.0
        %s833 = sld [smem:[#allocation4 + $0xe]]
        %v834 = vstv %s833
        %v835 = vmul.f32 %v834, %v832
        %v836 = vadd.f32 %v805, %v835
        %837 = vrot.lane.b32.xlu0 %v321, 18
        %v838 = vpop.permute.xlu0 %837
        %839 = vrot.lane.b32.xlu0 %v322, 18
        %v840 = vpop.permute.xlu0 %839
        %vm841 = vcmp.lt.s32.totalorder %v375, 18
        %v842 = vsel %vm841, %v838, %v840
        %v843 = vsel %vm841, %v840, %v838
        %vm844 = vmand %vm355, %vm331
        %v847 = vcombine.low %v843, %v842
        %v849 = vunpack.c.l.s4 1966171168
        %v850 = vunpack.c.0.s8 %v849
        %v851 = vlaneseq
        %v852 = vshrl.u32 %v851, 7
        %v853 = vsub.s32 %v850, %v852
        %v854 = vrot.slane %v847, %v853
        %v856 = vunpack.c.l.s4 1966171168
        %v857 = vunpack.c.0.s8 %v856
        %v858 = vlaneseq
        %v859 = vshrl.u32 %v858, 7
        %v860 = vsub.s32 %v857, %v859
        %v861 = vrot.slane %v854, %v860
        %v863 = vsel %vm844, %v861, 0.0
        %s864 = sld [smem:[#allocation4 + $0xf]]
        %v865 = vstv %s864
        %v866 = vmul.f32 %v865, %v863
        %v867 = vadd.f32 %v836, %v866
        %868 = vrot.lane.b32.xlu0 %v321, 17
        %v869 = vpop.permute.xlu0 %868
        %870 = vrot.lane.b32.xlu0 %v322, 17
        %v871 = vpop.permute.xlu0 %870
        %vm872 = vcmp.lt.s32.totalorder %v375, 17
        %v873 = vsel %vm872, %v869, %v871
        %v874 = vsel %vm872, %v871, %v869
        %vm875 = vmand %vm355, %vm334
        %v878 = vcombine.low %v874, %v873
        %v880 = vunpack.c.l.s4 1966171168
        %v881 = vunpack.c.0.s8 %v880
        %v882 = vlaneseq
        %v883 = vshrl.u32 %v882, 7
        %v884 = vsub.s32 %v881, %v883
        %v885 = vrot.slane %v878, %v884
        %v887 = vunpack.c.l.s4 1966171168
        %v888 = vunpack.c.0.s8 %v887
        %v889 = vlaneseq
        %v890 = vshrl.u32 %v889, 7
        %v891 = vsub.s32 %v888, %v890
        %v892 = vrot.slane %v885, %v891
        %v894 = vsel %vm875, %v892, 0.0
        %s895 = sld [smem:[#allocation4 + $0x10]]
        %v896 = vstv %s895
        %v897 = vmul.f32 %v896, %v894
        %v898 = vadd.f32 %v867, %v897
        %899 = vrot.lane.b32.xlu0 %v321, 16
        %v900 = vpop.permute.xlu0 %899
        %901 = vrot.lane.b32.xlu0 %v322, 16
        %v902 = vpop.permute.xlu0 %901
        %vm903 = vcmp.lt.s32.totalorder %v375, 16
        %v904 = vsel %vm903, %v900, %v902
        %v905 = vsel %vm903, %v902, %v900
        %vm906 = vmand %vm355, %vm337
        %v909 = vcombine.low %v905, %v904
        %v911 = vunpack.c.l.s4 1966171168
        %v912 = vunpack.c.0.s8 %v911
        %v913 = vlaneseq
        %v914 = vshrl.u32 %v913, 7
        %v915 = vsub.s32 %v912, %v914
        %v916 = vrot.slane %v909, %v915
        %v918 = vunpack.c.l.s4 1966171168
        %v919 = vunpack.c.0.s8 %v918
        %v920 = vlaneseq
        %v921 = vshrl.u32 %v920, 7
        %v922 = vsub.s32 %v919, %v921
        %v923 = vrot.slane %v916, %v922
        %v925 = vsel %vm906, %v923, 0.0
        %s926 = sld [smem:[#allocation4 + $0x11]]
        %v927 = vstv %s926
        %v928 = vmul.f32 %v927, %v925
        %v929 = vadd.f32 %v898, %v928
        %930 = vrot.lane.b32.xlu0 %v321, 15
        %v931 = vpop.permute.xlu0 %930
        %932 = vrot.lane.b32.xlu0 %v322, 15
        %v933 = vpop.permute.xlu0 %932
        %vm934 = vcmp.lt.s32.totalorder %v375, 15
        %v935 = vsel %vm934, %v931, %v933
        %v936 = vsel %vm934, %v933, %v931
        %vm937 = vmand %vm355, %vm340
        %v940 = vcombine.low %v936, %v935
        %v942 = vunpack.c.l.s4 1966171168
        %v943 = vunpack.c.0.s8 %v942
        %v944 = vlaneseq
        %v945 = vshrl.u32 %v944, 7
        %v946 = vsub.s32 %v943, %v945
        %v947 = vrot.slane %v940, %v946
        %v949 = vunpack.c.l.s4 1966171168
        %v950 = vunpack.c.0.s8 %v949
        %v951 = vlaneseq
        %v952 = vshrl.u32 %v951, 7
        %v953 = vsub.s32 %v950, %v952
        %v954 = vrot.slane %v947, %v953
        %v956 = vsel %vm937, %v954, 0.0
        %s957 = sld [smem:[#allocation4 + $0x12]]
        %v958 = vstv %s957
        %v959 = vmul.f32 %v958, %v956
        %v960 = vadd.f32 %v929, %v959
        %961 = vrot.lane.b32.xlu0 %v321, 14
        %v962 = vpop.permute.xlu0 %961
        %963 = vrot.lane.b32.xlu0 %v322, 14
        %v964 = vpop.permute.xlu0 %963
        %vm965 = vcmp.lt.s32.totalorder %v375, 14
        %v966 = vsel %vm965, %v962, %v964
        %v967 = vsel %vm965, %v964, %v962
        %vm968 = vmand %vm355, %vm343
        %v971 = vcombine.low %v967, %v966
        %v973 = vunpack.c.l.s4 1966171168
        %v974 = vunpack.c.0.s8 %v973
        %v975 = vlaneseq
        %v976 = vshrl.u32 %v975, 7
        %v977 = vsub.s32 %v974, %v976
        %v978 = vrot.slane %v971, %v977
        %v980 = vunpack.c.l.s4 1966171168
        %v981 = vunpack.c.0.s8 %v980
        %v982 = vlaneseq
        %v983 = vshrl.u32 %v982, 7
        %v984 = vsub.s32 %v981, %v983
        %v985 = vrot.slane %v978, %v984
        %v987 = vsel %vm968, %v985, 0.0
        %s988 = sld [smem:[#allocation4 + $0x13]]
        %v989 = vstv %s988
        %v990 = vmul.f32 %v989, %v987
        %v991 = vadd.f32 %v960, %v990
        %992 = vrot.lane.b32.xlu0 %v321, 13
        %v993 = vpop.permute.xlu0 %992
        %994 = vrot.lane.b32.xlu0 %v322, 13
        %v995 = vpop.permute.xlu0 %994
        %vm996 = vcmp.lt.s32.totalorder %v375, 13
        %v997 = vsel %vm996, %v993, %v995
        %v998 = vsel %vm996, %v995, %v993
        %vm999 = vmand %vm355, %vm346
        %v1002 = vcombine.low %v998, %v997
        %v1004 = vunpack.c.l.s4 1966171168
        %v1005 = vunpack.c.0.s8 %v1004
        %v1006 = vlaneseq
        %v1007 = vshrl.u32 %v1006, 7
        %v1008 = vsub.s32 %v1005, %v1007
        %v1009 = vrot.slane %v1002, %v1008
        %v1011 = vunpack.c.l.s4 1966171168
        %v1012 = vunpack.c.0.s8 %v1011
        %v1013 = vlaneseq
        %v1014 = vshrl.u32 %v1013, 7
        %v1015 = vsub.s32 %v1012, %v1014
        %v1016 = vrot.slane %v1009, %v1015
        %v1018 = vsel %vm999, %v1016, 0.0
        %s1019 = sld [smem:[#allocation4 + $0x14]]
        %v1020 = vstv %s1019
        %v1021 = vmul.f32 %v1020, %v1018
        %v1022 = vadd.f32 %v991, %v1021
        %1023 = vrot.lane.b32.xlu0 %v321, 3
        %v1024 = vpop.permute.xlu0 %1023
        %1025 = vrot.lane.b32.xlu0 %v322, 3
        %v1026 = vpop.permute.xlu0 %1025
        %vm1027 = vcmp.lt.s32.totalorder %v375, 3
        %v1028 = vsel %vm1027, %v1024, %v1026
        %v1029 = vsel %vm1027, %v1026, %v1024
        %vm1030 = vmand %vm358, %vm328
        %v1033 = vcombine.low %v1029, %v1028
        %v1035 = vunpack.c.l.s4 1966171168
        %v1036 = vunpack.c.0.s8 %v1035
        %v1037 = vlaneseq
        %v1038 = vshrl.u32 %v1037, 7
        %v1039 = vsub.s32 %v1036, %v1038
        %v1040 = vrot.slane %v1033, %v1039
        %v1042 = vunpack.c.l.s4 1966171168
        %v1043 = vunpack.c.0.s8 %v1042
        %v1044 = vlaneseq
        %v1045 = vshrl.u32 %v1044, 7
        %v1046 = vsub.s32 %v1043, %v1045
        %v1047 = vrot.slane %v1040, %v1046
        %v1049 = vsel %vm1030, %v1047, 0.0
        %s1050 = sld [smem:[#allocation4 + $0x15]]
        %v1051 = vstv %s1050
        %v1052 = vmul.f32 %v1051, %v1049
        %v1053 = vadd.f32 %v1022, %v1052
        %1054 = vrot.lane.b32.xlu0 %v321, 2
        %v1055 = vpop.permute.xlu0 %1054
        %1056 = vrot.lane.b32.xlu0 %v322, 2
        %v1057 = vpop.permute.xlu0 %1056
        %vm1058 = vcmp.lt.s32.totalorder %v375, 2
        %v1059 = vsel %vm1058, %v1055, %v1057
        %v1060 = vsel %vm1058, %v1057, %v1055
        %vm1061 = vmand %vm358, %vm331
        %v1064 = vcombine.low %v1060, %v1059
        %v1066 = vunpack.c.l.s4 1966171168
        %v1067 = vunpack.c.0.s8 %v1066
        %v1068 = vlaneseq
        %v1069 = vshrl.u32 %v1068, 7
        %v1070 = vsub.s32 %v1067, %v1069
        %v1071 = vrot.slane %v1064, %v1070
        %v1073 = vunpack.c.l.s4 1966171168
        %v1074 = vunpack.c.0.s8 %v1073
        %v1075 = vlaneseq
        %v1076 = vshrl.u32 %v1075, 7
        %v1077 = vsub.s32 %v1074, %v1076
        %v1078 = vrot.slane %v1071, %v1077
        %v1080 = vsel %vm1061, %v1078, 0.0
        %s1081 = sld [smem:[#allocation4 + $0x16]]
        %v1082 = vstv %s1081
        %v1083 = vmul.f32 %v1082, %v1080
        %v1084 = vadd.f32 %v1053, %v1083
        %1085 = vrot.lane.b32.xlu0 %v321, 1
        %v1086 = vpop.permute.xlu0 %1085
        %1087 = vrot.lane.b32.xlu0 %v322, 1
        %v1088 = vpop.permute.xlu0 %1087
        %vm1089 = vcmp.lt.s32.totalorder %v375, 1
        %v1090 = vsel %vm1089, %v1086, %v1088
        %v1091 = vsel %vm1089, %v1088, %v1086
        %vm1092 = vmand %vm358, %vm334
        %v1095 = vcombine.low %v1091, %v1090
        %v1097 = vunpack.c.l.s4 1966171168
        %v1098 = vunpack.c.0.s8 %v1097
        %v1099 = vlaneseq
        %v1100 = vshrl.u32 %v1099, 7
        %v1101 = vsub.s32 %v1098, %v1100
        %v1102 = vrot.slane %v1095, %v1101
        %v1104 = vunpack.c.l.s4 1966171168
        %v1105 = vunpack.c.0.s8 %v1104
        %v1106 = vlaneseq
        %v1107 = vshrl.u32 %v1106, 7
        %v1108 = vsub.s32 %v1105, %v1107
        %v1109 = vrot.slane %v1102, %v1108
        %v1111 = vsel %vm1092, %v1109, 0.0
        %s1112 = sld [smem:[#allocation4 + $0x17]]
        %v1113 = vstv %s1112
        %v1114 = vmul.f32 %v1113, %v1111
        %v1115 = vadd.f32 %v1084, %v1114
        %vm1116 = vmand %vm358, %vm337
        %v1119 = vcombine.low %v321, %v322
        %v1121 = vunpack.c.l.s4 1966171168
        %v1122 = vunpack.c.0.s8 %v1121
        %v1123 = vlaneseq
        %v1124 = vshrl.u32 %v1123, 7
        %v1125 = vsub.s32 %v1122, %v1124
        %v1126 = vrot.slane %v1119, %v1125
        %v1128 = vunpack.c.l.s4 1966171168
        %v1129 = vunpack.c.0.s8 %v1128
        %v1130 = vlaneseq
        %v1131 = vshrl.u32 %v1130, 7
        %v1132 = vsub.s32 %v1129, %v1131
        %v1133 = vrot.slane %v1126, %v1132
        %v1135 = vsel %vm1116, %v1133, 0.0
        %s1136 = sld [smem:[#allocation4 + $0x18]]
        %v1137 = vstv %s1136
        %v1138 = vmul.f32 %v1137, %v1135
        %v1139 = vadd.f32 %v1115, %v1138
        %1140 = vrot.lane.b32.xlu0 %v321, 127
        %v1141 = vpop.permute.xlu0 %1140
        %1142 = vrot.lane.b32.xlu0 %v322, 127
        %v1143 = vpop.permute.xlu0 %1142
        %vm1144 = vcmp.lt.s32.totalorder %v375, 127
        %v1145 = vsel %vm1144, %v1141, %v1143
        %v1146 = vsel %vm1144, %v1143, %v1141
        %vm1147 = vmand %vm358, %vm340
        %v1150 = vcombine.low %v1145, %v1146
        %v1152 = vunpack.c.l.s4 1966171168
        %v1153 = vunpack.c.0.s8 %v1152
        %v1154 = vlaneseq
        %v1155 = vshrl.u32 %v1154, 7
        %v1156 = vsub.s32 %v1153, %v1155
        %v1157 = vrot.slane %v1150, %v1156
        %v1159 = vunpack.c.l.s4 1966171168
        %v1160 = vunpack.c.0.s8 %v1159
        %v1161 = vlaneseq
        %v1162 = vshrl.u32 %v1161, 7
        %v1163 = vsub.s32 %v1160, %v1162
        %v1164 = vrot.slane %v1157, %v1163
        %v1166 = vsel %vm1147, %v1164, 0.0
        %s1167 = sld [smem:[#allocation4 + $0x19]]
        %v1168 = vstv %s1167
        %v1169 = vmul.f32 %v1168, %v1166
        %v1170 = vadd.f32 %v1139, %v1169
        %1171 = vrot.lane.b32.xlu0 %v321, 126
        %v1172 = vpop.permute.xlu0 %1171
        %1173 = vrot.lane.b32.xlu0 %v322, 126
        %v1174 = vpop.permute.xlu0 %1173
        %vm1175 = vcmp.lt.s32.totalorder %v375, 126
        %v1176 = vsel %vm1175, %v1172, %v1174
        %v1177 = vsel %vm1175, %v1174, %v1172
        %vm1178 = vmand %vm358, %vm343
        %v1181 = vcombine.low %v1176, %v1177
        %v1183 = vunpack.c.l.s4 1966171168
        %v1184 = vunpack.c.0.s8 %v1183
        %v1185 = vlaneseq
        %v1186 = vshrl.u32 %v1185, 7
        %v1187 = vsub.s32 %v1184, %v1186
        %v1188 = vrot.slane %v1181, %v1187
        %v1190 = vunpack.c.l.s4 1966171168
        %v1191 = vunpack.c.0.s8 %v1190
        %v1192 = vlaneseq
        %v1193 = vshrl.u32 %v1192, 7
        %v1194 = vsub.s32 %v1191, %v1193
        %v1195 = vrot.slane %v1188, %v1194
        %v1197 = vsel %vm1178, %v1195, 0.0
        %s1198 = sld [smem:[#allocation4 + $0x1a]]
        %v1199 = vstv %s1198
        %v1200 = vmul.f32 %v1199, %v1197
        %v1201 = vadd.f32 %v1170, %v1200
        %1202 = vrot.lane.b32.xlu0 %v321, 125
        %v1203 = vpop.permute.xlu0 %1202
        %1204 = vrot.lane.b32.xlu0 %v322, 125
        %v1205 = vpop.permute.xlu0 %1204
        %vm1206 = vcmp.lt.s32.totalorder %v375, 125
        %v1207 = vsel %vm1206, %v1203, %v1205
        %v1208 = vsel %vm1206, %v1205, %v1203
        %vm1209 = vmand %vm358, %vm346
        %v1212 = vcombine.low %v1207, %v1208
        %v1214 = vunpack.c.l.s4 1966171168
        %v1215 = vunpack.c.0.s8 %v1214
        %v1216 = vlaneseq
        %v1217 = vshrl.u32 %v1216, 7
        %v1218 = vsub.s32 %v1215, %v1217
        %v1219 = vrot.slane %v1212, %v1218
        %v1221 = vunpack.c.l.s4 1966171168
        %v1222 = vunpack.c.0.s8 %v1221
        %v1223 = vlaneseq
        %v1224 = vshrl.u32 %v1223, 7
        %v1225 = vsub.s32 %v1222, %v1224
        %v1226 = vrot.slane %v1219, %v1225
        %v1228 = vsel %vm1209, %v1226, 0.0
        %s1229 = sld [smem:[#allocation4 + $0x1b]]
        %v1230 = vstv %s1229
        %v1231 = vmul.f32 %v1230, %v1228
        %v1232 = vadd.f32 %v1201, %v1231
        %1233 = vrot.lane.b32.xlu0 %v321, 115
        %v1234 = vpop.permute.xlu0 %1233
        %1235 = vrot.lane.b32.xlu0 %v322, 115
        %v1236 = vpop.permute.xlu0 %1235
        %vm1237 = vcmp.lt.s32.totalorder %v375, 115
        %v1238 = vsel %vm1237, %v1234, %v1236
        %v1239 = vsel %vm1237, %v1236, %v1234
        %vm1240 = vmand %vm361, %vm328
        %v1243 = vcombine.low %v1238, %v1239
        %v1245 = vunpack.c.l.s4 1966171168
        %v1246 = vunpack.c.0.s8 %v1245
        %v1247 = vlaneseq
        %v1248 = vshrl.u32 %v1247, 7
        %v1249 = vsub.s32 %v1246, %v1248
        %v1250 = vrot.slane %v1243, %v1249
        %v1252 = vunpack.c.l.s4 1966171168
        %v1253 = vunpack.c.0.s8 %v1252
        %v1254 = vlaneseq
        %v1255 = vshrl.u32 %v1254, 7
        %v1256 = vsub.s32 %v1253, %v1255
        %v1257 = vrot.slane %v1250, %v1256
        %v1259 = vsel %vm1240, %v1257, 0.0
        %s1260 = sld [smem:[#allocation4 + $0x1c]]
        %v1261 = vstv %s1260
        %v1262 = vmul.f32 %v1261, %v1259
        %v1263 = vadd.f32 %v1232, %v1262
        %1264 = vrot.lane.b32.xlu0 %v321, 114
        %v1265 = vpop.permute.xlu0 %1264
        %1266 = vrot.lane.b32.xlu0 %v322, 114
        %v1267 = vpop.permute.xlu0 %1266
        %vm1268 = vcmp.lt.s32.totalorder %v375, 114
        %v1269 = vsel %vm1268, %v1265, %v1267
        %v1270 = vsel %vm1268, %v1267, %v1265
        %vm1271 = vmand %vm361, %vm331
        %v1274 = vcombine.low %v1269, %v1270
        %v1276 = vunpack.c.l.s4 1966171168
        %v1277 = vunpack.c.0.s8 %v1276
        %v1278 = vlaneseq
        %v1279 = vshrl.u32 %v1278, 7
        %v1280 = vsub.s32 %v1277, %v1279
        %v1281 = vrot.slane %v1274, %v1280
        %v1283 = vunpack.c.l.s4 1966171168
        %v1284 = vunpack.c.0.s8 %v1283
        %v1285 = vlaneseq
        %v1286 = vshrl.u32 %v1285, 7
        %v1287 = vsub.s32 %v1284, %v1286
        %v1288 = vrot.slane %v1281, %v1287
        %v1290 = vsel %vm1271, %v1288, 0.0
        %s1291 = sld [smem:[#allocation4 + $0x1d]]
        %v1292 = vstv %s1291
        %v1293 = vmul.f32 %v1292, %v1290
        %v1294 = vadd.f32 %v1263, %v1293
        %1295 = vrot.lane.b32.xlu0 %v321, 113
        %v1296 = vpop.permute.xlu0 %1295
        %1297 = vrot.lane.b32.xlu0 %v322, 113
        %v1298 = vpop.permute.xlu0 %1297
        %vm1299 = vcmp.lt.s32.totalorder %v375, 113
        %v1300 = vsel %vm1299, %v1296, %v1298
        %v1301 = vsel %vm1299, %v1298, %v1296
        %vm1302 = vmand %vm361, %vm334
        %v1305 = vcombine.low %v1300, %v1301
        %v1307 = vunpack.c.l.s4 1966171168
        %v1308 = vunpack.c.0.s8 %v1307
        %v1309 = vlaneseq
        %v1310 = vshrl.u32 %v1309, 7
        %v1311 = vsub.s32 %v1308, %v1310
        %v1312 = vrot.slane %v1305, %v1311
        %v1314 = vunpack.c.l.s4 1966171168
        %v1315 = vunpack.c.0.s8 %v1314
        %v1316 = vlaneseq
        %v1317 = vshrl.u32 %v1316, 7
        %v1318 = vsub.s32 %v1315, %v1317
        %v1319 = vrot.slane %v1312, %v1318
        %v1321 = vsel %vm1302, %v1319, 0.0
        %s1322 = sld [smem:[#allocation4 + $0x1e]]
        %v1323 = vstv %s1322
        %v1324 = vmul.f32 %v1323, %v1321
        %v1325 = vadd.f32 %v1294, %v1324
        %1326 = vrot.lane.b32.xlu0 %v321, 112
        %v1327 = vpop.permute.xlu0 %1326
        %1328 = vrot.lane.b32.xlu0 %v322, 112
        %v1329 = vpop.permute.xlu0 %1328
        %vm1330 = vcmp.lt.s32.totalorder %v375, 112
        %v1331 = vsel %vm1330, %v1327, %v1329
        %v1332 = vsel %vm1330, %v1329, %v1327
        %vm1333 = vmand %vm361, %vm337
        %v1336 = vcombine.low %v1331, %v1332
        %v1338 = vunpack.c.l.s4 1966171168
        %v1339 = vunpack.c.0.s8 %v1338
        %v1340 = vlaneseq
        %v1341 = vshrl.u32 %v1340, 7
        %v1342 = vsub.s32 %v1339, %v1341
        %v1343 = vrot.slane %v1336, %v1342
        %v1345 = vunpack.c.l.s4 1966171168
        %v1346 = vunpack.c.0.s8 %v1345
        %v1347 = vlaneseq
        %v1348 = vshrl.u32 %v1347, 7
        %v1349 = vsub.s32 %v1346, %v1348
        %v1350 = vrot.slane %v1343, %v1349
        %v1352 = vsel %vm1333, %v1350, 0.0
        %s1353 = sld [smem:[#allocation4 + $0x1f]]
        %v1354 = vstv %s1353
        %v1355 = vmul.f32 %v1354, %v1352
        %v1356 = vadd.f32 %v1325, %v1355
        %1357 = vrot.lane.b32.xlu0 %v321, 111
        %v1358 = vpop.permute.xlu0 %1357
        %1359 = vrot.lane.b32.xlu0 %v322, 111
        %v1360 = vpop.permute.xlu0 %1359
        %vm1361 = vcmp.lt.s32.totalorder %v375, 111
        %v1362 = vsel %vm1361, %v1358, %v1360
        %v1363 = vsel %vm1361, %v1360, %v1358
        %vm1364 = vmand %vm361, %vm340
        %v1367 = vcombine.low %v1362, %v1363
        %v1369 = vunpack.c.l.s4 1966171168
        %v1370 = vunpack.c.0.s8 %v1369
        %v1371 = vlaneseq
        %v1372 = vshrl.u32 %v1371, 7
        %v1373 = vsub.s32 %v1370, %v1372
        %v1374 = vrot.slane %v1367, %v1373
        %v1376 = vunpack.c.l.s4 1966171168
        %v1377 = vunpack.c.0.s8 %v1376
        %v1378 = vlaneseq
        %v1379 = vshrl.u32 %v1378, 7
        %v1380 = vsub.s32 %v1377, %v1379
        %v1381 = vrot.slane %v1374, %v1380
        %v1383 = vsel %vm1364, %v1381, 0.0
        %s1384 = sld [smem:[#allocation4 + $0x20]]
        %v1385 = vstv %s1384
        %v1386 = vmul.f32 %v1385, %v1383
        %v1387 = vadd.f32 %v1356, %v1386
        %1388 = vrot.lane.b32.xlu0 %v321, 110
        %v1389 = vpop.permute.xlu0 %1388
        %1390 = vrot.lane.b32.xlu0 %v322, 110
        %v1391 = vpop.permute.xlu0 %1390
        %vm1392 = vcmp.lt.s32.totalorder %v375, 110
        %v1393 = vsel %vm1392, %v1389, %v1391
        %v1394 = vsel %vm1392, %v1391, %v1389
        %vm1395 = vmand %vm361, %vm343
        %v1398 = vcombine.low %v1393, %v1394
        %v1400 = vunpack.c.l.s4 1966171168
        %v1401 = vunpack.c.0.s8 %v1400
        %v1402 = vlaneseq
        %v1403 = vshrl.u32 %v1402, 7
        %v1404 = vsub.s32 %v1401, %v1403
        %v1405 = vrot.slane %v1398, %v1404
        %v1407 = vunpack.c.l.s4 1966171168
        %v1408 = vunpack.c.0.s8 %v1407
        %v1409 = vlaneseq
        %v1410 = vshrl.u32 %v1409, 7
        %v1411 = vsub.s32 %v1408, %v1410
        %v1412 = vrot.slane %v1405, %v1411
        %v1414 = vsel %vm1395, %v1412, 0.0
        %s1415 = sld [smem:[#allocation4 + $0x21]]
        %v1416 = vstv %s1415
        %v1417 = vmul.f32 %v1416, %v1414
        %v1418 = vadd.f32 %v1387, %v1417
        %1419 = vrot.lane.b32.xlu0 %v321, 109
        %v1420 = vpop.permute.xlu0 %1419
        %1421 = vrot.lane.b32.xlu0 %v322, 109
        %v1422 = vpop.permute.xlu0 %1421
        %vm1423 = vcmp.lt.s32.totalorder %v375, 109
        %v1424 = vsel %vm1423, %v1420, %v1422
        %v1425 = vsel %vm1423, %v1422, %v1420
        %vm1426 = vmand %vm361, %vm346
        %v1429 = vcombine.low %v1424, %v1425
        %v1431 = vunpack.c.l.s4 1966171168
        %v1432 = vunpack.c.0.s8 %v1431
        %v1433 = vlaneseq
        %v1434 = vshrl.u32 %v1433, 7
        %v1435 = vsub.s32 %v1432, %v1434
        %v1436 = vrot.slane %v1429, %v1435
        %v1438 = vunpack.c.l.s4 1966171168
        %v1439 = vunpack.c.0.s8 %v1438
        %v1440 = vlaneseq
        %v1441 = vshrl.u32 %v1440, 7
        %v1442 = vsub.s32 %v1439, %v1441
        %v1443 = vrot.slane %v1436, %v1442
        %v1445 = vsel %vm1426, %v1443, 0.0
        %s1446 = sld [smem:[#allocation4 + $0x22]]
        %v1447 = vstv %s1446
        %v1448 = vmul.f32 %v1447, %v1445
        %v1449 = vadd.f32 %v1418, %v1448
        %1450 = vrot.lane.b32.xlu0 %v321, 99
        %v1451 = vpop.permute.xlu0 %1450
        %1452 = vrot.lane.b32.xlu0 %v322, 99
        %v1453 = vpop.permute.xlu0 %1452
        %vm1454 = vcmp.lt.s32.totalorder %v375, 99
        %v1455 = vsel %vm1454, %v1451, %v1453
        %v1456 = vsel %vm1454, %v1453, %v1451
        %vm1457 = vmand %vm364, %vm328
        %v1460 = vcombine.low %v1455, %v1456
        %v1462 = vunpack.c.l.s4 1966171168
        %v1463 = vunpack.c.0.s8 %v1462
        %v1464 = vlaneseq
        %v1465 = vshrl.u32 %v1464, 7
        %v1466 = vsub.s32 %v1463, %v1465
        %v1467 = vrot.slane %v1460, %v1466
        %v1469 = vunpack.c.l.s4 1966171168
        %v1470 = vunpack.c.0.s8 %v1469
        %v1471 = vlaneseq
        %v1472 = vshrl.u32 %v1471, 7
        %v1473 = vsub.s32 %v1470, %v1472
        %v1474 = vrot.slane %v1467, %v1473
        %v1476 = vsel %vm1457, %v1474, 0.0
        %s1477 = sld [smem:[#allocation4 + $0x23]]
        %v1478 = vstv %s1477
        %v1479 = vmul.f32 %v1478, %v1476
        %v1480 = vadd.f32 %v1449, %v1479
        %1481 = vrot.lane.b32.xlu0 %v321, 98
        %v1482 = vpop.permute.xlu0 %1481
        %1483 = vrot.lane.b32.xlu0 %v322, 98
        %v1484 = vpop.permute.xlu0 %1483
        %vm1485 = vcmp.lt.s32.totalorder %v375, 98
        %v1486 = vsel %vm1485, %v1482, %v1484
        %v1487 = vsel %vm1485, %v1484, %v1482
        %vm1488 = vmand %vm364, %vm331
        %v1491 = vcombine.low %v1486, %v1487
        %v1493 = vunpack.c.l.s4 1966171168
        %v1494 = vunpack.c.0.s8 %v1493
        %v1495 = vlaneseq
        %v1496 = vshrl.u32 %v1495, 7
        %v1497 = vsub.s32 %v1494, %v1496
        %v1498 = vrot.slane %v1491, %v1497
        %v1500 = vunpack.c.l.s4 1966171168
        %v1501 = vunpack.c.0.s8 %v1500
        %v1502 = vlaneseq
        %v1503 = vshrl.u32 %v1502, 7
        %v1504 = vsub.s32 %v1501, %v1503
        %v1505 = vrot.slane %v1498, %v1504
        %v1507 = vsel %vm1488, %v1505, 0.0
        %s1508 = sld [smem:[#allocation4 + $0x24]]
        %v1509 = vstv %s1508
        %v1510 = vmul.f32 %v1509, %v1507
        %v1511 = vadd.f32 %v1480, %v1510
        %1512 = vrot.lane.b32.xlu0 %v321, 97
        %v1513 = vpop.permute.xlu0 %1512
        %1514 = vrot.lane.b32.xlu0 %v322, 97
        %v1515 = vpop.permute.xlu0 %1514
        %vm1516 = vcmp.lt.s32.totalorder %v375, 97
        %v1517 = vsel %vm1516, %v1513, %v1515
        %v1518 = vsel %vm1516, %v1515, %v1513
        %vm1519 = vmand %vm364, %vm334
        %v1522 = vcombine.low %v1517, %v1518
        %v1524 = vunpack.c.l.s4 1966171168
        %v1525 = vunpack.c.0.s8 %v1524
        %v1526 = vlaneseq
        %v1527 = vshrl.u32 %v1526, 7
        %v1528 = vsub.s32 %v1525, %v1527
        %v1529 = vrot.slane %v1522, %v1528
        %v1531 = vunpack.c.l.s4 1966171168
        %v1532 = vunpack.c.0.s8 %v1531
        %v1533 = vlaneseq
        %v1534 = vshrl.u32 %v1533, 7
        %v1535 = vsub.s32 %v1532, %v1534
        %v1536 = vrot.slane %v1529, %v1535
        %v1538 = vsel %vm1519, %v1536, 0.0
        %s1539 = sld [smem:[#allocation4 + $0x25]]
        %v1540 = vstv %s1539
        %v1541 = vmul.f32 %v1540, %v1538
        %v1542 = vadd.f32 %v1511, %v1541
        %1543 = vrot.lane.b32.xlu0 %v321, 96
        %v1544 = vpop.permute.xlu0 %1543
        %1545 = vrot.lane.b32.xlu0 %v322, 96
        %v1546 = vpop.permute.xlu0 %1545
        %vm1547 = vcmp.lt.s32.totalorder %v375, 96
        %v1548 = vsel %vm1547, %v1544, %v1546
        %v1549 = vsel %vm1547, %v1546, %v1544
        %vm1550 = vmand %vm364, %vm337
        %v1553 = vcombine.low %v1548, %v1549
        %v1555 = vunpack.c.l.s4 1966171168
        %v1556 = vunpack.c.0.s8 %v1555
        %v1557 = vlaneseq
        %v1558 = vshrl.u32 %v1557, 7
        %v1559 = vsub.s32 %v1556, %v1558
        %v1560 = vrot.slane %v1553, %v1559
        %v1562 = vunpack.c.l.s4 1966171168
        %v1563 = vunpack.c.0.s8 %v1562
        %v1564 = vlaneseq
        %v1565 = vshrl.u32 %v1564, 7
        %v1566 = vsub.s32 %v1563, %v1565
        %v1567 = vrot.slane %v1560, %v1566
        %v1569 = vsel %vm1550, %v1567, 0.0
        %s1570 = sld [smem:[#allocation4 + $0x26]]
        %v1571 = vstv %s1570
        %v1572 = vmul.f32 %v1571, %v1569
        %v1573 = vadd.f32 %v1542, %v1572
        %1574 = vrot.lane.b32.xlu0 %v321, 95
        %v1575 = vpop.permute.xlu0 %1574
        %1576 = vrot.lane.b32.xlu0 %v322, 95
        %v1577 = vpop.permute.xlu0 %1576
        %vm1578 = vcmp.lt.s32.totalorder %v375, 95
        %v1579 = vsel %vm1578, %v1575, %v1577
        %v1580 = vsel %vm1578, %v1577, %v1575
        %vm1581 = vmand %vm364, %vm340
        %v1584 = vcombine.low %v1579, %v1580
        %v1586 = vunpack.c.l.s4 1966171168
        %v1587 = vunpack.c.0.s8 %v1586
        %v1588 = vlaneseq
        %v1589 = vshrl.u32 %v1588, 7
        %v1590 = vsub.s32 %v1587, %v1589
        %v1591 = vrot.slane %v1584, %v1590
        %v1593 = vunpack.c.l.s4 1966171168
        %v1594 = vunpack.c.0.s8 %v1593
        %v1595 = vlaneseq
        %v1596 = vshrl.u32 %v1595, 7
        %v1597 = vsub.s32 %v1594, %v1596
        %v1598 = vrot.slane %v1591, %v1597
        %v1600 = vsel %vm1581, %v1598, 0.0
        %s1601 = sld [smem:[#allocation4 + $0x27]]
        %v1602 = vstv %s1601
        %v1603 = vmul.f32 %v1602, %v1600
        %v1604 = vadd.f32 %v1573, %v1603
        %1605 = vrot.lane.b32.xlu0 %v321, 94
        %v1606 = vpop.permute.xlu0 %1605
        %1607 = vrot.lane.b32.xlu0 %v322, 94
        %v1608 = vpop.permute.xlu0 %1607
        %vm1609 = vcmp.lt.s32.totalorder %v375, 94
        %v1610 = vsel %vm1609, %v1606, %v1608
        %v1611 = vsel %vm1609, %v1608, %v1606
        %vm1612 = vmand %vm364, %vm343
        %v1615 = vcombine.low %v1610, %v1611
        %v1617 = vunpack.c.l.s4 1966171168
        %v1618 = vunpack.c.0.s8 %v1617
        %v1619 = vlaneseq
        %v1620 = vshrl.u32 %v1619, 7
        %v1621 = vsub.s32 %v1618, %v1620
        %v1622 = vrot.slane %v1615, %v1621
        %v1624 = vunpack.c.l.s4 1966171168
        %v1625 = vunpack.c.0.s8 %v1624
        %v1626 = vlaneseq
        %v1627 = vshrl.u32 %v1626, 7
        %v1628 = vsub.s32 %v1625, %v1627
        %v1629 = vrot.slane %v1622, %v1628
        %v1631 = vsel %vm1612, %v1629, 0.0
        %s1632 = sld [smem:[#allocation4 + $0x28]]
        %v1633 = vstv %s1632
        %v1634 = vmul.f32 %v1633, %v1631
        %v1635 = vadd.f32 %v1604, %v1634
        %1636 = vrot.lane.b32.xlu0 %v321, 93
        %v1637 = vpop.permute.xlu0 %1636
        %1638 = vrot.lane.b32.xlu0 %v322, 93
        %v1639 = vpop.permute.xlu0 %1638
        %vm1640 = vcmp.lt.s32.totalorder %v375, 93
        %v1641 = vsel %vm1640, %v1637, %v1639
        %v1642 = vsel %vm1640, %v1639, %v1637
        %vm1643 = vmand %vm364, %vm346
        %v1646 = vcombine.low %v1641, %v1642
        %v1648 = vunpack.c.l.s4 1966171168
        %v1649 = vunpack.c.0.s8 %v1648
        %v1650 = vlaneseq
        %v1651 = vshrl.u32 %v1650, 7
        %v1652 = vsub.s32 %v1649, %v1651
        %v1653 = vrot.slane %v1646, %v1652
        %v1655 = vunpack.c.l.s4 1966171168
        %v1656 = vunpack.c.0.s8 %v1655
        %v1657 = vlaneseq
        %v1658 = vshrl.u32 %v1657, 7
        %v1659 = vsub.s32 %v1656, %v1658
        %v1660 = vrot.slane %v1653, %v1659
        %v1662 = vsel %vm1643, %v1660, 0.0
        %s1663 = sld [smem:[#allocation4 + $0x29]]
        %v1664 = vstv %s1663
        %v1665 = vmul.f32 %v1664, %v1662
        %v1666 = vadd.f32 %v1635, %v1665
        %1667 = vrot.lane.b32.xlu0 %v321, 83
        %v1668 = vpop.permute.xlu0 %1667
        %1669 = vrot.lane.b32.xlu0 %v322, 83
        %v1670 = vpop.permute.xlu0 %1669
        %vm1671 = vcmp.lt.s32.totalorder %v375, 83
        %v1672 = vsel %vm1671, %v1668, %v1670
        %v1673 = vsel %vm1671, %v1670, %v1668
        %vm1674 = vmand %vm367, %vm328
        %v1677 = vcombine.low %v1672, %v1673
        %v1679 = vunpack.c.l.s4 1966171168
        %v1680 = vunpack.c.0.s8 %v1679
        %v1681 = vlaneseq
        %v1682 = vshrl.u32 %v1681, 7
        %v1683 = vsub.s32 %v1680, %v1682
        %v1684 = vrot.slane %v1677, %v1683
        %v1686 = vunpack.c.l.s4 1966171168
        %v1687 = vunpack.c.0.s8 %v1686
        %v1688 = vlaneseq
        %v1689 = vshrl.u32 %v1688, 7
        %v1690 = vsub.s32 %v1687, %v1689
        %v1691 = vrot.slane %v1684, %v1690
        %v1693 = vsel %vm1674, %v1691, 0.0
        %s1694 = sld [smem:[#allocation4 + $0x2a]]
        %v1695 = vstv %s1694
        %v1696 = vmul.f32 %v1695, %v1693
        %v1697 = vadd.f32 %v1666, %v1696
        %1698 = vrot.lane.b32.xlu0 %v321, 82
        %v1699 = vpop.permute.xlu0 %1698
        %1700 = vrot.lane.b32.xlu0 %v322, 82
        %v1701 = vpop.permute.xlu0 %1700
        %vm1702 = vcmp.lt.s32.totalorder %v375, 82
        %v1703 = vsel %vm1702, %v1699, %v1701
        %v1704 = vsel %vm1702, %v1701, %v1699
        %vm1705 = vmand %vm367, %vm331
        %v1708 = vcombine.low %v1703, %v1704
        %v1710 = vunpack.c.l.s4 1966171168
        %v1711 = vunpack.c.0.s8 %v1710
        %v1712 = vlaneseq
        %v1713 = vshrl.u32 %v1712, 7
        %v1714 = vsub.s32 %v1711, %v1713
        %v1715 = vrot.slane %v1708, %v1714
        %v1717 = vunpack.c.l.s4 1966171168
        %v1718 = vunpack.c.0.s8 %v1717
        %v1719 = vlaneseq
        %v1720 = vshrl.u32 %v1719, 7
        %v1721 = vsub.s32 %v1718, %v1720
        %v1722 = vrot.slane %v1715, %v1721
        %v1724 = vsel %vm1705, %v1722, 0.0
        %s1725 = sld [smem:[#allocation4 + $0x2b]]
        %v1726 = vstv %s1725
        %v1727 = vmul.f32 %v1726, %v1724
        %v1728 = vadd.f32 %v1697, %v1727
        %1729 = vrot.lane.b32.xlu0 %v321, 81
        %v1730 = vpop.permute.xlu0 %1729
        %1731 = vrot.lane.b32.xlu0 %v322, 81
        %v1732 = vpop.permute.xlu0 %1731
        %vm1733 = vcmp.lt.s32.totalorder %v375, 81
        %v1734 = vsel %vm1733, %v1730, %v1732
        %v1735 = vsel %vm1733, %v1732, %v1730
        %vm1736 = vmand %vm367, %vm334
        %v1739 = vcombine.low %v1734, %v1735
        %v1741 = vunpack.c.l.s4 1966171168
        %v1742 = vunpack.c.0.s8 %v1741
        %v1743 = vlaneseq
        %v1744 = vshrl.u32 %v1743, 7
        %v1745 = vsub.s32 %v1742, %v1744
        %v1746 = vrot.slane %v1739, %v1745
        %v1748 = vunpack.c.l.s4 1966171168
        %v1749 = vunpack.c.0.s8 %v1748
        %v1750 = vlaneseq
        %v1751 = vshrl.u32 %v1750, 7
        %v1752 = vsub.s32 %v1749, %v1751
        %v1753 = vrot.slane %v1746, %v1752
        %v1755 = vsel %vm1736, %v1753, 0.0
        %s1756 = sld [smem:[#allocation4 + $0x2c]]
        %v1757 = vstv %s1756
        %v1758 = vmul.f32 %v1757, %v1755
        %v1759 = vadd.f32 %v1728, %v1758
        %1760 = vrot.lane.b32.xlu0 %v321, 80
        %v1761 = vpop.permute.xlu0 %1760
        %1762 = vrot.lane.b32.xlu0 %v322, 80
        %v1763 = vpop.permute.xlu0 %1762
        %vm1764 = vcmp.lt.s32.totalorder %v375, 80
        %v1765 = vsel %vm1764, %v1761, %v1763
        %v1766 = vsel %vm1764, %v1763, %v1761
        %vm1767 = vmand %vm367, %vm337
        %v1770 = vcombine.low %v1765, %v1766
        %v1772 = vunpack.c.l.s4 1966171168
        %v1773 = vunpack.c.0.s8 %v1772
        %v1774 = vlaneseq
        %v1775 = vshrl.u32 %v1774, 7
        %v1776 = vsub.s32 %v1773, %v1775
        %v1777 = vrot.slane %v1770, %v1776
        %v1779 = vunpack.c.l.s4 1966171168
        %v1780 = vunpack.c.0.s8 %v1779
        %v1781 = vlaneseq
        %v1782 = vshrl.u32 %v1781, 7
        %v1783 = vsub.s32 %v1780, %v1782
        %v1784 = vrot.slane %v1777, %v1783
        %v1786 = vsel %vm1767, %v1784, 0.0
        %s1787 = sld [smem:[#allocation4 + $0x2d]]
        %v1788 = vstv %s1787
        %v1789 = vmul.f32 %v1788, %v1786
        %v1790 = vadd.f32 %v1759, %v1789
        %1791 = vrot.lane.b32.xlu0 %v321, 79
        %v1792 = vpop.permute.xlu0 %1791
        %1793 = vrot.lane.b32.xlu0 %v322, 79
        %v1794 = vpop.permute.xlu0 %1793
        %vm1795 = vcmp.lt.s32.totalorder %v375, 79
        %v1796 = vsel %vm1795, %v1792, %v1794
        %v1797 = vsel %vm1795, %v1794, %v1792
        %vm1798 = vmand %vm367, %vm340
        %v1801 = vcombine.low %v1796, %v1797
        %v1803 = vunpack.c.l.s4 1966171168
        %v1804 = vunpack.c.0.s8 %v1803
        %v1805 = vlaneseq
        %v1806 = vshrl.u32 %v1805, 7
        %v1807 = vsub.s32 %v1804, %v1806
        %v1808 = vrot.slane %v1801, %v1807
        %v1810 = vunpack.c.l.s4 1966171168
        %v1811 = vunpack.c.0.s8 %v1810
        %v1812 = vlaneseq
        %v1813 = vshrl.u32 %v1812, 7
        %v1814 = vsub.s32 %v1811, %v1813
        %v1815 = vrot.slane %v1808, %v1814
        %v1817 = vsel %vm1798, %v1815, 0.0
        %s1818 = sld [smem:[#allocation4 + $0x2e]]
        %v1819 = vstv %s1818
        %v1820 = vmul.f32 %v1819, %v1817
        %v1821 = vadd.f32 %v1790, %v1820
        %1822 = vrot.lane.b32.xlu0 %v321, 78
        %v1823 = vpop.permute.xlu0 %1822
        %1824 = vrot.lane.b32.xlu0 %v322, 78
        %v1825 = vpop.permute.xlu0 %1824
        %vm1826 = vcmp.lt.s32.totalorder %v375, 78
        %v1827 = vsel %vm1826, %v1823, %v1825
        %v1828 = vsel %vm1826, %v1825, %v1823
        %vm1829 = vmand %vm367, %vm343
        %v1832 = vcombine.low %v1827, %v1828
        %v1834 = vunpack.c.l.s4 1966171168
        %v1835 = vunpack.c.0.s8 %v1834
        %v1836 = vlaneseq
        %v1837 = vshrl.u32 %v1836, 7
        %v1838 = vsub.s32 %v1835, %v1837
        %v1839 = vrot.slane %v1832, %v1838
        %v1841 = vunpack.c.l.s4 1966171168
        %v1842 = vunpack.c.0.s8 %v1841
        %v1843 = vlaneseq
        %v1844 = vshrl.u32 %v1843, 7
        %v1845 = vsub.s32 %v1842, %v1844
        %v1846 = vrot.slane %v1839, %v1845
        %v1848 = vsel %vm1829, %v1846, 0.0
        %s1849 = sld [smem:[#allocation4 + $0x2f]]
        %v1850 = vstv %s1849
        %v1851 = vmul.f32 %v1850, %v1848
        %v1852 = vadd.f32 %v1821, %v1851
        %1853 = vrot.lane.b32.xlu0 %v321, 77
        %v1854 = vpop.permute.xlu0 %1853
        %1855 = vrot.lane.b32.xlu0 %v322, 77
        %v1856 = vpop.permute.xlu0 %1855
        %vm1857 = vcmp.lt.s32.totalorder %v375, 77
        %v1858 = vsel %vm1857, %v1854, %v1856
        %v1859 = vsel %vm1857, %v1856, %v1854
        %vm1860 = vmand %vm367, %vm346
        %v1863 = vcombine.low %v1858, %v1859
        %v1865 = vunpack.c.l.s4 1966171168
        %v1866 = vunpack.c.0.s8 %v1865
        %v1867 = vlaneseq
        %v1868 = vshrl.u32 %v1867, 7
        %v1869 = vsub.s32 %v1866, %v1868
        %v1870 = vrot.slane %v1863, %v1869
        %v1872 = vunpack.c.l.s4 1966171168
        %v1873 = vunpack.c.0.s8 %v1872
        %v1874 = vlaneseq
        %v1875 = vshrl.u32 %v1874, 7
        %v1876 = vsub.s32 %v1873, %v1875
        %v1877 = vrot.slane %v1870, %v1876
        %v1879 = vsel %vm1860, %v1877, 0.0
        %s1880 = sld [smem:[#allocation4 + $0x30]]
        %v1881 = vstv %s1880
        %v1882 = vmul.f32 %v1881, %v1879
        %v1883 = vadd.f32 %v1852, %v1882
        %v1884 = vmax.f32 %v1883, 0.0
        %s1885 = sld [smem:[#allocation3]]
        %v1886 = vstv %s1885
        %v1888 = vlaneseq
        %v1889 = vshrl.u32 %v1888, 7
        %v1890 = vsub.s32 0, %v1889
        %v1891 = vrot.slane %v1884, %v1890
        %v1892 = vlaneseq
        %v1893 = vshrl.u32 %v1892, 7
        %v1894 = vsub.s32 1, %v1893
        %v1895 = vrot.slane %v1884, %v1894
        %1898 = vrot.lane.b32.xlu0 %v1891, 51
        %v1899 = vpop.permute.xlu0 %1898
        %1900 = vrot.lane.b32.xlu0 %v1895, 51
        %v1901 = vpop.permute.xlu0 %1900
        %v1902 = vsel %vm376, %v1899, %v1901
        %v1903 = vsel %vm376, %v1901, %v1899
        %v1906 = vcombine.low %v1903, %v1902
        %v1908 = vunpack.c.l.s4 1966171168
        %v1909 = vunpack.c.0.s8 %v1908
        %v1910 = vlaneseq
        %v1911 = vshrl.u32 %v1910, 7
        %v1912 = vsub.s32 %v1909, %v1911
        %v1913 = vrot.slane %v1906, %v1912
        %v1915 = vunpack.c.l.s4 1966171168
        %v1916 = vunpack.c.0.s8 %v1915
        %v1917 = vlaneseq
        %v1918 = vshrl.u32 %v1917, 7
        %v1919 = vsub.s32 %v1916, %v1918
        %v1920 = vrot.slane %v1913, %v1919
        %v1922 = vsel %vm379, %v1920, 0.0
        %s1923 = sld [smem:[#allocation8]]
        %v1924 = vstv %s1923
        %v1925 = vmul.f32 %v1924, %v1922
        %v1926 = vadd.f32 %v1886, %v1925
        %1927 = vrot.lane.b32.xlu0 %v1891, 50
        %v1928 = vpop.permute.xlu0 %1927
        %1929 = vrot.lane.b32.xlu0 %v1895, 50
        %v1930 = vpop.permute.xlu0 %1929
        %v1931 = vsel %vm407, %v1928, %v1930
        %v1932 = vsel %vm407, %v1930, %v1928
        %v1935 = vcombine.low %v1932, %v1931
        %v1937 = vunpack.c.l.s4 1966171168
        %v1938 = vunpack.c.0.s8 %v1937
        %v1939 = vlaneseq
        %v1940 = vshrl.u32 %v1939, 7
        %v1941 = vsub.s32 %v1938, %v1940
        %v1942 = vrot.slane %v1935, %v1941
        %v1944 = vunpack.c.l.s4 1966171168
        %v1945 = vunpack.c.0.s8 %v1944
        %v1946 = vlaneseq
        %v1947 = vshrl.u32 %v1946, 7
        %v1948 = vsub.s32 %v1945, %v1947
        %v1949 = vrot.slane %v1942, %v1948
        %v1951 = vsel %vm410, %v1949, 0.0
        %s1952 = sld [smem:[#allocation8 + $0x1]]
        %v1953 = vstv %s1952
        %v1954 = vmul.f32 %v1953, %v1951
        %v1955 = vadd.f32 %v1926, %v1954
        %1956 = vrot.lane.b32.xlu0 %v1891, 49
        %v1957 = vpop.permute.xlu0 %1956
        %1958 = vrot.lane.b32.xlu0 %v1895, 49
        %v1959 = vpop.permute.xlu0 %1958
        %v1960 = vsel %vm438, %v1957, %v1959
        %v1961 = vsel %vm438, %v1959, %v1957
        %v1964 = vcombine.low %v1961, %v1960
        %v1966 = vunpack.c.l.s4 1966171168
        %v1967 = vunpack.c.0.s8 %v1966
        %v1968 = vlaneseq
        %v1969 = vshrl.u32 %v1968, 7
        %v1970 = vsub.s32 %v1967, %v1969
        %v1971 = vrot.slane %v1964, %v1970
        %v1973 = vunpack.c.l.s4 1966171168
        %v1974 = vunpack.c.0.s8 %v1973
        %v1975 = vlaneseq
        %v1976 = vshrl.u32 %v1975, 7
        %v1977 = vsub.s32 %v1974, %v1976
        %v1978 = vrot.slane %v1971, %v1977
        %v1980 = vsel %vm441, %v1978, 0.0
        %s1981 = sld [smem:[#allocation8 + $0x2]]
        %v1982 = vstv %s1981
        %v1983 = vmul.f32 %v1982, %v1980
        %v1984 = vadd.f32 %v1955, %v1983
        %1985 = vrot.lane.b32.xlu0 %v1891, 48
        %v1986 = vpop.permute.xlu0 %1985
        %1987 = vrot.lane.b32.xlu0 %v1895, 48
        %v1988 = vpop.permute.xlu0 %1987
        %v1989 = vsel %vm469, %v1986, %v1988
        %v1990 = vsel %vm469, %v1988, %v1986
        %v1993 = vcombine.low %v1990, %v1989
        %v1995 = vunpack.c.l.s4 1966171168
        %v1996 = vunpack.c.0.s8 %v1995
        %v1997 = vlaneseq
        %v1998 = vshrl.u32 %v1997, 7
        %v1999 = vsub.s32 %v1996, %v1998
        %v2000 = vrot.slane %v1993, %v1999
        %v2002 = vunpack.c.l.s4 1966171168
        %v2003 = vunpack.c.0.s8 %v2002
        %v2004 = vlaneseq
        %v2005 = vshrl.u32 %v2004, 7
        %v2006 = vsub.s32 %v2003, %v2005
        %v2007 = vrot.slane %v2000, %v2006
        %v2009 = vsel %vm472, %v2007, 0.0
        %s2010 = sld [smem:[#allocation8 + $0x3]]
        %v2011 = vstv %s2010
        %v2012 = vmul.f32 %v2011, %v2009
        %v2013 = vadd.f32 %v1984, %v2012
        %2014 = vrot.lane.b32.xlu0 %v1891, 47
        %v2015 = vpop.permute.xlu0 %2014
        %2016 = vrot.lane.b32.xlu0 %v1895, 47
        %v2017 = vpop.permute.xlu0 %2016
        %v2018 = vsel %vm500, %v2015, %v2017
        %v2019 = vsel %vm500, %v2017, %v2015
        %v2022 = vcombine.low %v2019, %v2018
        %v2024 = vunpack.c.l.s4 1966171168
        %v2025 = vunpack.c.0.s8 %v2024
        %v2026 = vlaneseq
        %v2027 = vshrl.u32 %v2026, 7
        %v2028 = vsub.s32 %v2025, %v2027
        %v2029 = vrot.slane %v2022, %v2028
        %v2031 = vunpack.c.l.s4 1966171168
        %v2032 = vunpack.c.0.s8 %v2031
        %v2033 = vlaneseq
        %v2034 = vshrl.u32 %v2033, 7
        %v2035 = vsub.s32 %v2032, %v2034
        %v2036 = vrot.slane %v2029, %v2035
        %v2038 = vsel %vm503, %v2036, 0.0
        %s2039 = sld [smem:[#allocation8 + $0x4]]
        %v2040 = vstv %s2039
        %v2041 = vmul.f32 %v2040, %v2038
        %v2042 = vadd.f32 %v2013, %v2041
        %2043 = vrot.lane.b32.xlu0 %v1891, 46
        %v2044 = vpop.permute.xlu0 %2043
        %2045 = vrot.lane.b32.xlu0 %v1895, 46
        %v2046 = vpop.permute.xlu0 %2045
        %v2047 = vsel %vm531, %v2044, %v2046
        %v2048 = vsel %vm531, %v2046, %v2044
        %v2051 = vcombine.low %v2048, %v2047
        %v2053 = vunpack.c.l.s4 1966171168
        %v2054 = vunpack.c.0.s8 %v2053
        %v2055 = vlaneseq
        %v2056 = vshrl.u32 %v2055, 7
        %v2057 = vsub.s32 %v2054, %v2056
        %v2058 = vrot.slane %v2051, %v2057
        %v2060 = vunpack.c.l.s4 1966171168
        %v2061 = vunpack.c.0.s8 %v2060
        %v2062 = vlaneseq
        %v2063 = vshrl.u32 %v2062, 7
        %v2064 = vsub.s32 %v2061, %v2063
        %v2065 = vrot.slane %v2058, %v2064
        %v2067 = vsel %vm534, %v2065, 0.0
        %s2068 = sld [smem:[#allocation8 + $0x5]]
        %v2069 = vstv %s2068
        %v2070 = vmul.f32 %v2069, %v2067
        %v2071 = vadd.f32 %v2042, %v2070
        %2072 = vrot.lane.b32.xlu0 %v1891, 45
        %v2073 = vpop.permute.xlu0 %2072
        %2074 = vrot.lane.b32.xlu0 %v1895, 45
        %v2075 = vpop.permute.xlu0 %2074
        %v2076 = vsel %vm562, %v2073, %v2075
        %v2077 = vsel %vm562, %v2075, %v2073
        %v2080 = vcombine.low %v2077, %v2076
        %v2082 = vunpack.c.l.s4 1966171168
        %v2083 = vunpack.c.0.s8 %v2082
        %v2084 = vlaneseq
        %v2085 = vshrl.u32 %v2084, 7
        %v2086 = vsub.s32 %v2083, %v2085
        %v2087 = vrot.slane %v2080, %v2086
        %v2089 = vunpack.c.l.s4 1966171168
        %v2090 = vunpack.c.0.s8 %v2089
        %v2091 = vlaneseq
        %v2092 = vshrl.u32 %v2091, 7
        %v2093 = vsub.s32 %v2090, %v2092
        %v2094 = vrot.slane %v2087, %v2093
        %v2096 = vsel %vm565, %v2094, 0.0
        %s2097 = sld [smem:[#allocation8 + $0x6]]
        %v2098 = vstv %s2097
        %v2099 = vmul.f32 %v2098, %v2096
        %v2100 = vadd.f32 %v2071, %v2099
        %2101 = vrot.lane.b32.xlu0 %v1891, 35
        %v2102 = vpop.permute.xlu0 %2101
        %2103 = vrot.lane.b32.xlu0 %v1895, 35
        %v2104 = vpop.permute.xlu0 %2103
        %v2105 = vsel %vm593, %v2102, %v2104
        %v2106 = vsel %vm593, %v2104, %v2102
        %v2109 = vcombine.low %v2106, %v2105
        %v2111 = vunpack.c.l.s4 1966171168
        %v2112 = vunpack.c.0.s8 %v2111
        %v2113 = vlaneseq
        %v2114 = vshrl.u32 %v2113, 7
        %v2115 = vsub.s32 %v2112, %v2114
        %v2116 = vrot.slane %v2109, %v2115
        %v2118 = vunpack.c.l.s4 1966171168
        %v2119 = vunpack.c.0.s8 %v2118
        %v2120 = vlaneseq
        %v2121 = vshrl.u32 %v2120, 7
        %v2122 = vsub.s32 %v2119, %v2121
        %v2123 = vrot.slane %v2116, %v2122
        %v2125 = vsel %vm596, %v2123, 0.0
        %s2126 = sld [smem:[#allocation8 + $0x7]]
        %v2127 = vstv %s2126
        %v2128 = vmul.f32 %v2127, %v2125
        %v2129 = vadd.f32 %v2100, %v2128
        %2130 = vrot.lane.b32.xlu0 %v1891, 34
        %v2131 = vpop.permute.xlu0 %2130
        %2132 = vrot.lane.b32.xlu0 %v1895, 34
        %v2133 = vpop.permute.xlu0 %2132
        %v2134 = vsel %vm624, %v2131, %v2133
        %v2135 = vsel %vm624, %v2133, %v2131
        %v2138 = vcombine.low %v2135, %v2134
        %v2140 = vunpack.c.l.s4 1966171168
        %v2141 = vunpack.c.0.s8 %v2140
        %v2142 = vlaneseq
        %v2143 = vshrl.u32 %v2142, 7
        %v2144 = vsub.s32 %v2141, %v2143
        %v2145 = vrot.slane %v2138, %v2144
        %v2147 = vunpack.c.l.s4 1966171168
        %v2148 = vunpack.c.0.s8 %v2147
        %v2149 = vlaneseq
        %v2150 = vshrl.u32 %v2149, 7
        %v2151 = vsub.s32 %v2148, %v2150
        %v2152 = vrot.slane %v2145, %v2151
        %v2154 = vsel %vm627, %v2152, 0.0
        %s2155 = sld [smem:[#allocation8 + $0x8]]
        %v2156 = vstv %s2155
        %v2157 = vmul.f32 %v2156, %v2154
        %v2158 = vadd.f32 %v2129, %v2157
        %2159 = vrot.lane.b32.xlu0 %v1891, 33
        %v2160 = vpop.permute.xlu0 %2159
        %2161 = vrot.lane.b32.xlu0 %v1895, 33
        %v2162 = vpop.permute.xlu0 %2161
        %v2163 = vsel %vm655, %v2160, %v2162
        %v2164 = vsel %vm655, %v2162, %v2160
        %v2167 = vcombine.low %v2164, %v2163
        %v2169 = vunpack.c.l.s4 1966171168
        %v2170 = vunpack.c.0.s8 %v2169
        %v2171 = vlaneseq
        %v2172 = vshrl.u32 %v2171, 7
        %v2173 = vsub.s32 %v2170, %v2172
        %v2174 = vrot.slane %v2167, %v2173
        %v2176 = vunpack.c.l.s4 1966171168
        %v2177 = vunpack.c.0.s8 %v2176
        %v2178 = vlaneseq
        %v2179 = vshrl.u32 %v2178, 7
        %v2180 = vsub.s32 %v2177, %v2179
        %v2181 = vrot.slane %v2174, %v2180
        %v2183 = vsel %vm658, %v2181, 0.0
        %s2184 = sld [smem:[#allocation8 + $0x9]]
        %v2185 = vstv %s2184
        %v2186 = vmul.f32 %v2185, %v2183
        %v2187 = vadd.f32 %v2158, %v2186
        %2188 = vrot.lane.b32.xlu0 %v1891, 32
        %v2189 = vpop.permute.xlu0 %2188
        %2190 = vrot.lane.b32.xlu0 %v1895, 32
        %v2191 = vpop.permute.xlu0 %2190
        %v2192 = vsel %vm686, %v2189, %v2191
        %v2193 = vsel %vm686, %v2191, %v2189
        %v2196 = vcombine.low %v2193, %v2192
        %v2198 = vunpack.c.l.s4 1966171168
        %v2199 = vunpack.c.0.s8 %v2198
        %v2200 = vlaneseq
        %v2201 = vshrl.u32 %v2200, 7
        %v2202 = vsub.s32 %v2199, %v2201
        %v2203 = vrot.slane %v2196, %v2202
        %v2205 = vunpack.c.l.s4 1966171168
        %v2206 = vunpack.c.0.s8 %v2205
        %v2207 = vlaneseq
        %v2208 = vshrl.u32 %v2207, 7
        %v2209 = vsub.s32 %v2206, %v2208
        %v2210 = vrot.slane %v2203, %v2209
        %v2212 = vsel %vm689, %v2210, 0.0
        %s2213 = sld [smem:[#allocation8 + $0xa]]
        %v2214 = vstv %s2213
        %v2215 = vmul.f32 %v2214, %v2212
        %v2216 = vadd.f32 %v2187, %v2215
        %2217 = vrot.lane.b32.xlu0 %v1891, 31
        %v2218 = vpop.permute.xlu0 %2217
        %2219 = vrot.lane.b32.xlu0 %v1895, 31
        %v2220 = vpop.permute.xlu0 %2219
        %v2221 = vsel %vm717, %v2218, %v2220
        %v2222 = vsel %vm717, %v2220, %v2218
        %v2225 = vcombine.low %v2222, %v2221
        %v2227 = vunpack.c.l.s4 1966171168
        %v2228 = vunpack.c.0.s8 %v2227
        %v2229 = vlaneseq
        %v2230 = vshrl.u32 %v2229, 7
        %v2231 = vsub.s32 %v2228, %v2230
        %v2232 = vrot.slane %v2225, %v2231
        %v2234 = vunpack.c.l.s4 1966171168
        %v2235 = vunpack.c.0.s8 %v2234
        %v2236 = vlaneseq
        %v2237 = vshrl.u32 %v2236, 7
        %v2238 = vsub.s32 %v2235, %v2237
        %v2239 = vrot.slane %v2232, %v2238
        %v2241 = vsel %vm720, %v2239, 0.0
        %s2242 = sld [smem:[#allocation8 + $0xb]]
        %v2243 = vstv %s2242
        %v2244 = vmul.f32 %v2243, %v2241
        %v2245 = vadd.f32 %v2216, %v2244
        %2246 = vrot.lane.b32.xlu0 %v1891, 30
        %v2247 = vpop.permute.xlu0 %2246
        %2248 = vrot.lane.b32.xlu0 %v1895, 30
        %v2249 = vpop.permute.xlu0 %2248
        %v2250 = vsel %vm748, %v2247, %v2249
        %v2251 = vsel %vm748, %v2249, %v2247
        %v2254 = vcombine.low %v2251, %v2250
        %v2256 = vunpack.c.l.s4 1966171168
        %v2257 = vunpack.c.0.s8 %v2256
        %v2258 = vlaneseq
        %v2259 = vshrl.u32 %v2258, 7
        %v2260 = vsub.s32 %v2257, %v2259
        %v2261 = vrot.slane %v2254, %v2260
        %v2263 = vunpack.c.l.s4 1966171168
        %v2264 = vunpack.c.0.s8 %v2263
        %v2265 = vlaneseq
        %v2266 = vshrl.u32 %v2265, 7
        %v2267 = vsub.s32 %v2264, %v2266
        %v2268 = vrot.slane %v2261, %v2267
        %v2270 = vsel %vm751, %v2268, 0.0
        %s2271 = sld [smem:[#allocation8 + $0xc]]
        %v2272 = vstv %s2271
        %v2273 = vmul.f32 %v2272, %v2270
        %v2274 = vadd.f32 %v2245, %v2273
        %2275 = vrot.lane.b32.xlu0 %v1891, 29
        %v2276 = vpop.permute.xlu0 %2275
        %2277 = vrot.lane.b32.xlu0 %v1895, 29
        %v2278 = vpop.permute.xlu0 %2277
        %v2279 = vsel %vm779, %v2276, %v2278
        %v2280 = vsel %vm779, %v2278, %v2276
        %v2283 = vcombine.low %v2280, %v2279
        %v2285 = vunpack.c.l.s4 1966171168
        %v2286 = vunpack.c.0.s8 %v2285
        %v2287 = vlaneseq
        %v2288 = vshrl.u32 %v2287, 7
        %v2289 = vsub.s32 %v2286, %v2288
        %v2290 = vrot.slane %v2283, %v2289
        %v2292 = vunpack.c.l.s4 1966171168
        %v2293 = vunpack.c.0.s8 %v2292
        %v2294 = vlaneseq
        %v2295 = vshrl.u32 %v2294, 7
        %v2296 = vsub.s32 %v2293, %v2295
        %v2297 = vrot.slane %v2290, %v2296
        %v2299 = vsel %vm782, %v2297, 0.0
        %s2300 = sld [smem:[#allocation8 + $0xd]]
        %v2301 = vstv %s2300
        %v2302 = vmul.f32 %v2301, %v2299
        %v2303 = vadd.f32 %v2274, %v2302
        %2304 = vrot.lane.b32.xlu0 %v1891, 19
        %v2305 = vpop.permute.xlu0 %2304
        %2306 = vrot.lane.b32.xlu0 %v1895, 19
        %v2307 = vpop.permute.xlu0 %2306
        %v2308 = vsel %vm810, %v2305, %v2307
        %v2309 = vsel %vm810, %v2307, %v2305
        %v2312 = vcombine.low %v2309, %v2308
        %v2314 = vunpack.c.l.s4 1966171168
        %v2315 = vunpack.c.0.s8 %v2314
        %v2316 = vlaneseq
        %v2317 = vshrl.u32 %v2316, 7
        %v2318 = vsub.s32 %v2315, %v2317
        %v2319 = vrot.slane %v2312, %v2318
        %v2321 = vunpack.c.l.s4 1966171168
        %v2322 = vunpack.c.0.s8 %v2321
        %v2323 = vlaneseq
        %v2324 = vshrl.u32 %v2323, 7
        %v2325 = vsub.s32 %v2322, %v2324
        %v2326 = vrot.slane %v2319, %v2325
        %v2328 = vsel %vm813, %v2326, 0.0
        %s2329 = sld [smem:[#allocation8 + $0xe]]
        %v2330 = vstv %s2329
        %v2331 = vmul.f32 %v2330, %v2328
        %v2332 = vadd.f32 %v2303, %v2331
        %2333 = vrot.lane.b32.xlu0 %v1891, 18
        %v2334 = vpop.permute.xlu0 %2333
        %2335 = vrot.lane.b32.xlu0 %v1895, 18
        %v2336 = vpop.permute.xlu0 %2335
        %v2337 = vsel %vm841, %v2334, %v2336
        %v2338 = vsel %vm841, %v2336, %v2334
        %v2341 = vcombine.low %v2338, %v2337
        %v2343 = vunpack.c.l.s4 1966171168
        %v2344 = vunpack.c.0.s8 %v2343
        %v2345 = vlaneseq
        %v2346 = vshrl.u32 %v2345, 7
        %v2347 = vsub.s32 %v2344, %v2346
        %v2348 = vrot.slane %v2341, %v2347
        %v2350 = vunpack.c.l.s4 1966171168
        %v2351 = vunpack.c.0.s8 %v2350
        %v2352 = vlaneseq
        %v2353 = vshrl.u32 %v2352, 7
        %v2354 = vsub.s32 %v2351, %v2353
        %v2355 = vrot.slane %v2348, %v2354
        %v2357 = vsel %vm844, %v2355, 0.0
        %s2358 = sld [smem:[#allocation8 + $0xf]]
        %v2359 = vstv %s2358
        %v2360 = vmul.f32 %v2359, %v2357
        %v2361 = vadd.f32 %v2332, %v2360
        %2362 = vrot.lane.b32.xlu0 %v1891, 17
        %v2363 = vpop.permute.xlu0 %2362
        %2364 = vrot.lane.b32.xlu0 %v1895, 17
        %v2365 = vpop.permute.xlu0 %2364
        %v2366 = vsel %vm872, %v2363, %v2365
        %v2367 = vsel %vm872, %v2365, %v2363
        %v2370 = vcombine.low %v2367, %v2366
        %v2372 = vunpack.c.l.s4 1966171168
        %v2373 = vunpack.c.0.s8 %v2372
        %v2374 = vlaneseq
        %v2375 = vshrl.u32 %v2374, 7
        %v2376 = vsub.s32 %v2373, %v2375
        %v2377 = vrot.slane %v2370, %v2376
        %v2379 = vunpack.c.l.s4 1966171168
        %v2380 = vunpack.c.0.s8 %v2379
        %v2381 = vlaneseq
        %v2382 = vshrl.u32 %v2381, 7
        %v2383 = vsub.s32 %v2380, %v2382
        %v2384 = vrot.slane %v2377, %v2383
        %v2386 = vsel %vm875, %v2384, 0.0
        %s2387 = sld [smem:[#allocation8 + $0x10]]
        %v2388 = vstv %s2387
        %v2389 = vmul.f32 %v2388, %v2386
        %v2390 = vadd.f32 %v2361, %v2389
        %2391 = vrot.lane.b32.xlu0 %v1891, 16
        %v2392 = vpop.permute.xlu0 %2391
        %2393 = vrot.lane.b32.xlu0 %v1895, 16
        %v2394 = vpop.permute.xlu0 %2393
        %v2395 = vsel %vm903, %v2392, %v2394
        %v2396 = vsel %vm903, %v2394, %v2392
        %v2399 = vcombine.low %v2396, %v2395
        %v2401 = vunpack.c.l.s4 1966171168
        %v2402 = vunpack.c.0.s8 %v2401
        %v2403 = vlaneseq
        %v2404 = vshrl.u32 %v2403, 7
        %v2405 = vsub.s32 %v2402, %v2404
        %v2406 = vrot.slane %v2399, %v2405
        %v2408 = vunpack.c.l.s4 1966171168
        %v2409 = vunpack.c.0.s8 %v2408
        %v2410 = vlaneseq
        %v2411 = vshrl.u32 %v2410, 7
        %v2412 = vsub.s32 %v2409, %v2411
        %v2413 = vrot.slane %v2406, %v2412
        %v2415 = vsel %vm906, %v2413, 0.0
        %s2416 = sld [smem:[#allocation8 + $0x11]]
        %v2417 = vstv %s2416
        %v2418 = vmul.f32 %v2417, %v2415
        %v2419 = vadd.f32 %v2390, %v2418
        %2420 = vrot.lane.b32.xlu0 %v1891, 15
        %v2421 = vpop.permute.xlu0 %2420
        %2422 = vrot.lane.b32.xlu0 %v1895, 15
        %v2423 = vpop.permute.xlu0 %2422
        %v2424 = vsel %vm934, %v2421, %v2423
        %v2425 = vsel %vm934, %v2423, %v2421
        %v2428 = vcombine.low %v2425, %v2424
        %v2430 = vunpack.c.l.s4 1966171168
        %v2431 = vunpack.c.0.s8 %v2430
        %v2432 = vlaneseq
        %v2433 = vshrl.u32 %v2432, 7
        %v2434 = vsub.s32 %v2431, %v2433
        %v2435 = vrot.slane %v2428, %v2434
        %v2437 = vunpack.c.l.s4 1966171168
        %v2438 = vunpack.c.0.s8 %v2437
        %v2439 = vlaneseq
        %v2440 = vshrl.u32 %v2439, 7
        %v2441 = vsub.s32 %v2438, %v2440
        %v2442 = vrot.slane %v2435, %v2441
        %v2444 = vsel %vm937, %v2442, 0.0
        %s2445 = sld [smem:[#allocation8 + $0x12]]
        %v2446 = vstv %s2445
        %v2447 = vmul.f32 %v2446, %v2444
        %v2448 = vadd.f32 %v2419, %v2447
        %2449 = vrot.lane.b32.xlu0 %v1891, 14
        %v2450 = vpop.permute.xlu0 %2449
        %2451 = vrot.lane.b32.xlu0 %v1895, 14
        %v2452 = vpop.permute.xlu0 %2451
        %v2453 = vsel %vm965, %v2450, %v2452
        %v2454 = vsel %vm965, %v2452, %v2450
        %v2457 = vcombine.low %v2454, %v2453
        %v2459 = vunpack.c.l.s4 1966171168
        %v2460 = vunpack.c.0.s8 %v2459
        %v2461 = vlaneseq
        %v2462 = vshrl.u32 %v2461, 7
        %v2463 = vsub.s32 %v2460, %v2462
        %v2464 = vrot.slane %v2457, %v2463
        %v2466 = vunpack.c.l.s4 1966171168
        %v2467 = vunpack.c.0.s8 %v2466
        %v2468 = vlaneseq
        %v2469 = vshrl.u32 %v2468, 7
        %v2470 = vsub.s32 %v2467, %v2469
        %v2471 = vrot.slane %v2464, %v2470
        %v2473 = vsel %vm968, %v2471, 0.0
        %s2474 = sld [smem:[#allocation8 + $0x13]]
        %v2475 = vstv %s2474
        %v2476 = vmul.f32 %v2475, %v2473
        %v2477 = vadd.f32 %v2448, %v2476
        %2478 = vrot.lane.b32.xlu0 %v1891, 13
        %v2479 = vpop.permute.xlu0 %2478
        %2480 = vrot.lane.b32.xlu0 %v1895, 13
        %v2481 = vpop.permute.xlu0 %2480
        %v2482 = vsel %vm996, %v2479, %v2481
        %v2483 = vsel %vm996, %v2481, %v2479
        %v2486 = vcombine.low %v2483, %v2482
        %v2488 = vunpack.c.l.s4 1966171168
        %v2489 = vunpack.c.0.s8 %v2488
        %v2490 = vlaneseq
        %v2491 = vshrl.u32 %v2490, 7
        %v2492 = vsub.s32 %v2489, %v2491
        %v2493 = vrot.slane %v2486, %v2492
        %v2495 = vunpack.c.l.s4 1966171168
        %v2496 = vunpack.c.0.s8 %v2495
        %v2497 = vlaneseq
        %v2498 = vshrl.u32 %v2497, 7
        %v2499 = vsub.s32 %v2496, %v2498
        %v2500 = vrot.slane %v2493, %v2499
        %v2502 = vsel %vm999, %v2500, 0.0
        %s2503 = sld [smem:[#allocation8 + $0x14]]
        %v2504 = vstv %s2503
        %v2505 = vmul.f32 %v2504, %v2502
        %v2506 = vadd.f32 %v2477, %v2505
        %2507 = vrot.lane.b32.xlu0 %v1891, 3
        %v2508 = vpop.permute.xlu0 %2507
        %2509 = vrot.lane.b32.xlu0 %v1895, 3
        %v2510 = vpop.permute.xlu0 %2509
        %v2511 = vsel %vm1027, %v2508, %v2510
        %v2512 = vsel %vm1027, %v2510, %v2508
        %v2515 = vcombine.low %v2512, %v2511
        %v2517 = vunpack.c.l.s4 1966171168
        %v2518 = vunpack.c.0.s8 %v2517
        %v2519 = vlaneseq
        %v2520 = vshrl.u32 %v2519, 7
        %v2521 = vsub.s32 %v2518, %v2520
        %v2522 = vrot.slane %v2515, %v2521
        %v2524 = vunpack.c.l.s4 1966171168
        %v2525 = vunpack.c.0.s8 %v2524
        %v2526 = vlaneseq
        %v2527 = vshrl.u32 %v2526, 7
        %v2528 = vsub.s32 %v2525, %v2527
        %v2529 = vrot.slane %v2522, %v2528
        %v2531 = vsel %vm1030, %v2529, 0.0
        %s2532 = sld [smem:[#allocation8 + $0x15]]
        %v2533 = vstv %s2532
        %v2534 = vmul.f32 %v2533, %v2531
        %v2535 = vadd.f32 %v2506, %v2534
        %2536 = vrot.lane.b32.xlu0 %v1891, 2
        %v2537 = vpop.permute.xlu0 %2536
        %2538 = vrot.lane.b32.xlu0 %v1895, 2
        %v2539 = vpop.permute.xlu0 %2538
        %v2540 = vsel %vm1058, %v2537, %v2539
        %v2541 = vsel %vm1058, %v2539, %v2537
        %v2544 = vcombine.low %v2541, %v2540
        %v2546 = vunpack.c.l.s4 1966171168
        %v2547 = vunpack.c.0.s8 %v2546
        %v2548 = vlaneseq
        %v2549 = vshrl.u32 %v2548, 7
        %v2550 = vsub.s32 %v2547, %v2549
        %v2551 = vrot.slane %v2544, %v2550
        %v2553 = vunpack.c.l.s4 1966171168
        %v2554 = vunpack.c.0.s8 %v2553
        %v2555 = vlaneseq
        %v2556 = vshrl.u32 %v2555, 7
        %v2557 = vsub.s32 %v2554, %v2556
        %v2558 = vrot.slane %v2551, %v2557
        %v2560 = vsel %vm1061, %v2558, 0.0
        %s2561 = sld [smem:[#allocation8 + $0x16]]
        %v2562 = vstv %s2561
        %v2563 = vmul.f32 %v2562, %v2560
        %v2564 = vadd.f32 %v2535, %v2563
        %2565 = vrot.lane.b32.xlu0 %v1891, 1
        %v2566 = vpop.permute.xlu0 %2565
        %2567 = vrot.lane.b32.xlu0 %v1895, 1
        %v2568 = vpop.permute.xlu0 %2567
        %v2569 = vsel %vm1089, %v2566, %v2568
        %v2570 = vsel %vm1089, %v2568, %v2566
        %v2573 = vcombine.low %v2570, %v2569
        %v2575 = vunpack.c.l.s4 1966171168
        %v2576 = vunpack.c.0.s8 %v2575
        %v2577 = vlaneseq
        %v2578 = vshrl.u32 %v2577, 7
        %v2579 = vsub.s32 %v2576, %v2578
        %v2580 = vrot.slane %v2573, %v2579
        %v2582 = vunpack.c.l.s4 1966171168
        %v2583 = vunpack.c.0.s8 %v2582
        %v2584 = vlaneseq
        %v2585 = vshrl.u32 %v2584, 7
        %v2586 = vsub.s32 %v2583, %v2585
        %v2587 = vrot.slane %v2580, %v2586
        %v2589 = vsel %vm1092, %v2587, 0.0
        %s2590 = sld [smem:[#allocation8 + $0x17]]
        %v2591 = vstv %s2590
        %v2592 = vmul.f32 %v2591, %v2589
        %v2593 = vadd.f32 %v2564, %v2592
        %v2594 = vsel %vm1116, %v1884, 0.0
        %s2595 = sld [smem:[#allocation8 + $0x18]]
        %v2596 = vstv %s2595
        %v2597 = vmul.f32 %v2596, %v2594
        %v2598 = vadd.f32 %v2593, %v2597
        %2599 = vrot.lane.b32.xlu0 %v1891, 127
        %v2600 = vpop.permute.xlu0 %2599
        %2601 = vrot.lane.b32.xlu0 %v1895, 127
        %v2602 = vpop.permute.xlu0 %2601
        %v2603 = vsel %vm1144, %v2600, %v2602
        %v2604 = vsel %vm1144, %v2602, %v2600
        %v2607 = vcombine.low %v2603, %v2604
        %v2609 = vunpack.c.l.s4 1966171168
        %v2610 = vunpack.c.0.s8 %v2609
        %v2611 = vlaneseq
        %v2612 = vshrl.u32 %v2611, 7
        %v2613 = vsub.s32 %v2610, %v2612
        %v2614 = vrot.slane %v2607, %v2613
        %v2616 = vunpack.c.l.s4 1966171168
        %v2617 = vunpack.c.0.s8 %v2616
        %v2618 = vlaneseq
        %v2619 = vshrl.u32 %v2618, 7
        %v2620 = vsub.s32 %v2617, %v2619
        %v2621 = vrot.slane %v2614, %v2620
        %v2623 = vsel %vm1147, %v2621, 0.0
        %s2624 = sld [smem:[#allocation8 + $0x19]]
        %v2625 = vstv %s2624
        %v2626 = vmul.f32 %v2625, %v2623
        %v2627 = vadd.f32 %v2598, %v2626
        %2628 = vrot.lane.b32.xlu0 %v1891, 126
        %v2629 = vpop.permute.xlu0 %2628
        %2630 = vrot.lane.b32.xlu0 %v1895, 126
        %v2631 = vpop.permute.xlu0 %2630
        %v2632 = vsel %vm1175, %v2629, %v2631
        %v2633 = vsel %vm1175, %v2631, %v2629
        %v2636 = vcombine.low %v2632, %v2633
        %v2638 = vunpack.c.l.s4 1966171168
        %v2639 = vunpack.c.0.s8 %v2638
        %v2640 = vlaneseq
        %v2641 = vshrl.u32 %v2640, 7
        %v2642 = vsub.s32 %v2639, %v2641
        %v2643 = vrot.slane %v2636, %v2642
        %v2645 = vunpack.c.l.s4 1966171168
        %v2646 = vunpack.c.0.s8 %v2645
        %v2647 = vlaneseq
        %v2648 = vshrl.u32 %v2647, 7
        %v2649 = vsub.s32 %v2646, %v2648
        %v2650 = vrot.slane %v2643, %v2649
        %v2652 = vsel %vm1178, %v2650, 0.0
        %s2653 = sld [smem:[#allocation8 + $0x1a]]
        %v2654 = vstv %s2653
        %v2655 = vmul.f32 %v2654, %v2652
        %v2656 = vadd.f32 %v2627, %v2655
        %2657 = vrot.lane.b32.xlu0 %v1891, 125
        %v2658 = vpop.permute.xlu0 %2657
        %2659 = vrot.lane.b32.xlu0 %v1895, 125
        %v2660 = vpop.permute.xlu0 %2659
        %v2661 = vsel %vm1206, %v2658, %v2660
        %v2662 = vsel %vm1206, %v2660, %v2658
        %v2665 = vcombine.low %v2661, %v2662
        %v2667 = vunpack.c.l.s4 1966171168
        %v2668 = vunpack.c.0.s8 %v2667
        %v2669 = vlaneseq
        %v2670 = vshrl.u32 %v2669, 7
        %v2671 = vsub.s32 %v2668, %v2670
        %v2672 = vrot.slane %v2665, %v2671
        %v2674 = vunpack.c.l.s4 1966171168
        %v2675 = vunpack.c.0.s8 %v2674
        %v2676 = vlaneseq
        %v2677 = vshrl.u32 %v2676, 7
        %v2678 = vsub.s32 %v2675, %v2677
        %v2679 = vrot.slane %v2672, %v2678
        %v2681 = vsel %vm1209, %v2679, 0.0
        %s2682 = sld [smem:[#allocation8 + $0x1b]]
        %v2683 = vstv %s2682
        %v2684 = vmul.f32 %v2683, %v2681
        %v2685 = vadd.f32 %v2656, %v2684
        %2686 = vrot.lane.b32.xlu0 %v1891, 115
        %v2687 = vpop.permute.xlu0 %2686
        %2688 = vrot.lane.b32.xlu0 %v1895, 115
        %v2689 = vpop.permute.xlu0 %2688
        %v2690 = vsel %vm1237, %v2687, %v2689
        %v2691 = vsel %vm1237, %v2689, %v2687
        %v2694 = vcombine.low %v2690, %v2691
        %v2696 = vunpack.c.l.s4 1966171168
        %v2697 = vunpack.c.0.s8 %v2696
        %v2698 = vlaneseq
        %v2699 = vshrl.u32 %v2698, 7
        %v2700 = vsub.s32 %v2697, %v2699
        %v2701 = vrot.slane %v2694, %v2700
        %v2703 = vunpack.c.l.s4 1966171168
        %v2704 = vunpack.c.0.s8 %v2703
        %v2705 = vlaneseq
        %v2706 = vshrl.u32 %v2705, 7
        %v2707 = vsub.s32 %v2704, %v2706
        %v2708 = vrot.slane %v2701, %v2707
        %v2710 = vsel %vm1240, %v2708, 0.0
        %s2711 = sld [smem:[#allocation8 + $0x1c]]
        %v2712 = vstv %s2711
        %v2713 = vmul.f32 %v2712, %v2710
        %v2714 = vadd.f32 %v2685, %v2713
        %2715 = vrot.lane.b32.xlu0 %v1891, 114
        %v2716 = vpop.permute.xlu0 %2715
        %2717 = vrot.lane.b32.xlu0 %v1895, 114
        %v2718 = vpop.permute.xlu0 %2717
        %v2719 = vsel %vm1268, %v2716, %v2718
        %v2720 = vsel %vm1268, %v2718, %v2716
        %v2723 = vcombine.low %v2719, %v2720
        %v2725 = vunpack.c.l.s4 1966171168
        %v2726 = vunpack.c.0.s8 %v2725
        %v2727 = vlaneseq
        %v2728 = vshrl.u32 %v2727, 7
        %v2729 = vsub.s32 %v2726, %v2728
        %v2730 = vrot.slane %v2723, %v2729
        %v2732 = vunpack.c.l.s4 1966171168
        %v2733 = vunpack.c.0.s8 %v2732
        %v2734 = vlaneseq
        %v2735 = vshrl.u32 %v2734, 7
        %v2736 = vsub.s32 %v2733, %v2735
        %v2737 = vrot.slane %v2730, %v2736
        %v2739 = vsel %vm1271, %v2737, 0.0
        %s2740 = sld [smem:[#allocation8 + $0x1d]]
        %v2741 = vstv %s2740
        %v2742 = vmul.f32 %v2741, %v2739
        %v2743 = vadd.f32 %v2714, %v2742
        %2744 = vrot.lane.b32.xlu0 %v1891, 113
        %v2745 = vpop.permute.xlu0 %2744
        %2746 = vrot.lane.b32.xlu0 %v1895, 113
        %v2747 = vpop.permute.xlu0 %2746
        %v2748 = vsel %vm1299, %v2745, %v2747
        %v2749 = vsel %vm1299, %v2747, %v2745
        %v2752 = vcombine.low %v2748, %v2749
        %v2754 = vunpack.c.l.s4 1966171168
        %v2755 = vunpack.c.0.s8 %v2754
        %v2756 = vlaneseq
        %v2757 = vshrl.u32 %v2756, 7
        %v2758 = vsub.s32 %v2755, %v2757
        %v2759 = vrot.slane %v2752, %v2758
        %v2761 = vunpack.c.l.s4 1966171168
        %v2762 = vunpack.c.0.s8 %v2761
        %v2763 = vlaneseq
        %v2764 = vshrl.u32 %v2763, 7
        %v2765 = vsub.s32 %v2762, %v2764
        %v2766 = vrot.slane %v2759, %v2765
        %v2768 = vsel %vm1302, %v2766, 0.0
        %s2769 = sld [smem:[#allocation8 + $0x1e]]
        %v2770 = vstv %s2769
        %v2771 = vmul.f32 %v2770, %v2768
        %v2772 = vadd.f32 %v2743, %v2771
        %2773 = vrot.lane.b32.xlu0 %v1891, 112
        %v2774 = vpop.permute.xlu0 %2773
        %2775 = vrot.lane.b32.xlu0 %v1895, 112
        %v2776 = vpop.permute.xlu0 %2775
        %v2777 = vsel %vm1330, %v2774, %v2776
        %v2778 = vsel %vm1330, %v2776, %v2774
        %v2781 = vcombine.low %v2777, %v2778
        %v2783 = vunpack.c.l.s4 1966171168
        %v2784 = vunpack.c.0.s8 %v2783
        %v2785 = vlaneseq
        %v2786 = vshrl.u32 %v2785, 7
        %v2787 = vsub.s32 %v2784, %v2786
        %v2788 = vrot.slane %v2781, %v2787
        %v2790 = vunpack.c.l.s4 1966171168
        %v2791 = vunpack.c.0.s8 %v2790
        %v2792 = vlaneseq
        %v2793 = vshrl.u32 %v2792, 7
        %v2794 = vsub.s32 %v2791, %v2793
        %v2795 = vrot.slane %v2788, %v2794
        %v2797 = vsel %vm1333, %v2795, 0.0
        %s2798 = sld [smem:[#allocation8 + $0x1f]]
        %v2799 = vstv %s2798
        %v2800 = vmul.f32 %v2799, %v2797
        %v2801 = vadd.f32 %v2772, %v2800
        %2802 = vrot.lane.b32.xlu0 %v1891, 111
        %v2803 = vpop.permute.xlu0 %2802
        %2804 = vrot.lane.b32.xlu0 %v1895, 111
        %v2805 = vpop.permute.xlu0 %2804
        %v2806 = vsel %vm1361, %v2803, %v2805
        %v2807 = vsel %vm1361, %v2805, %v2803
        %v2810 = vcombine.low %v2806, %v2807
        %v2812 = vunpack.c.l.s4 1966171168
        %v2813 = vunpack.c.0.s8 %v2812
        %v2814 = vlaneseq
        %v2815 = vshrl.u32 %v2814, 7
        %v2816 = vsub.s32 %v2813, %v2815
        %v2817 = vrot.slane %v2810, %v2816
        %v2819 = vunpack.c.l.s4 1966171168
        %v2820 = vunpack.c.0.s8 %v2819
        %v2821 = vlaneseq
        %v2822 = vshrl.u32 %v2821, 7
        %v2823 = vsub.s32 %v2820, %v2822
        %v2824 = vrot.slane %v2817, %v2823
        %v2826 = vsel %vm1364, %v2824, 0.0
        %s2827 = sld [smem:[#allocation8 + $0x20]]
        %v2828 = vstv %s2827
        %v2829 = vmul.f32 %v2828, %v2826
        %v2830 = vadd.f32 %v2801, %v2829
        %2831 = vrot.lane.b32.xlu0 %v1891, 110
        %v2832 = vpop.permute.xlu0 %2831
        %2833 = vrot.lane.b32.xlu0 %v1895, 110
        %v2834 = vpop.permute.xlu0 %2833
        %v2835 = vsel %vm1392, %v2832, %v2834
        %v2836 = vsel %vm1392, %v2834, %v2832
        %v2839 = vcombine.low %v2835, %v2836
        %v2841 = vunpack.c.l.s4 1966171168
        %v2842 = vunpack.c.0.s8 %v2841
        %v2843 = vlaneseq
        %v2844 = vshrl.u32 %v2843, 7
        %v2845 = vsub.s32 %v2842, %v2844
        %v2846 = vrot.slane %v2839, %v2845
        %v2848 = vunpack.c.l.s4 1966171168
        %v2849 = vunpack.c.0.s8 %v2848
        %v2850 = vlaneseq
        %v2851 = vshrl.u32 %v2850, 7
        %v2852 = vsub.s32 %v2849, %v2851
        %v2853 = vrot.slane %v2846, %v2852
        %v2855 = vsel %vm1395, %v2853, 0.0
        %s2856 = sld [smem:[#allocation8 + $0x21]]
        %v2857 = vstv %s2856
        %v2858 = vmul.f32 %v2857, %v2855
        %v2859 = vadd.f32 %v2830, %v2858
        %2860 = vrot.lane.b32.xlu0 %v1891, 109
        %v2861 = vpop.permute.xlu0 %2860
        %2862 = vrot.lane.b32.xlu0 %v1895, 109
        %v2863 = vpop.permute.xlu0 %2862
        %v2864 = vsel %vm1423, %v2861, %v2863
        %v2865 = vsel %vm1423, %v2863, %v2861
        %v2868 = vcombine.low %v2864, %v2865
        %v2870 = vunpack.c.l.s4 1966171168
        %v2871 = vunpack.c.0.s8 %v2870
        %v2872 = vlaneseq
        %v2873 = vshrl.u32 %v2872, 7
        %v2874 = vsub.s32 %v2871, %v2873
        %v2875 = vrot.slane %v2868, %v2874
        %v2877 = vunpack.c.l.s4 1966171168
        %v2878 = vunpack.c.0.s8 %v2877
        %v2879 = vlaneseq
        %v2880 = vshrl.u32 %v2879, 7
        %v2881 = vsub.s32 %v2878, %v2880
        %v2882 = vrot.slane %v2875, %v2881
        %v2884 = vsel %vm1426, %v2882, 0.0
        %s2885 = sld [smem:[#allocation8 + $0x22]]
        %v2886 = vstv %s2885
        %v2887 = vmul.f32 %v2886, %v2884
        %v2888 = vadd.f32 %v2859, %v2887
        %2889 = vrot.lane.b32.xlu0 %v1891, 99
        %v2890 = vpop.permute.xlu0 %2889
        %2891 = vrot.lane.b32.xlu0 %v1895, 99
        %v2892 = vpop.permute.xlu0 %2891
        %v2893 = vsel %vm1454, %v2890, %v2892
        %v2894 = vsel %vm1454, %v2892, %v2890
        %v2897 = vcombine.low %v2893, %v2894
        %v2899 = vunpack.c.l.s4 1966171168
        %v2900 = vunpack.c.0.s8 %v2899
        %v2901 = vlaneseq
        %v2902 = vshrl.u32 %v2901, 7
        %v2903 = vsub.s32 %v2900, %v2902
        %v2904 = vrot.slane %v2897, %v2903
        %v2906 = vunpack.c.l.s4 1966171168
        %v2907 = vunpack.c.0.s8 %v2906
        %v2908 = vlaneseq
        %v2909 = vshrl.u32 %v2908, 7
        %v2910 = vsub.s32 %v2907, %v2909
        %v2911 = vrot.slane %v2904, %v2910
        %v2913 = vsel %vm1457, %v2911, 0.0
        %s2914 = sld [smem:[#allocation8 + $0x23]]
        %v2915 = vstv %s2914
        %v2916 = vmul.f32 %v2915, %v2913
        %v2917 = vadd.f32 %v2888, %v2916
        %2918 = vrot.lane.b32.xlu0 %v1891, 98
        %v2919 = vpop.permute.xlu0 %2918
        %2920 = vrot.lane.b32.xlu0 %v1895, 98
        %v2921 = vpop.permute.xlu0 %2920
        %v2922 = vsel %vm1485, %v2919, %v2921
        %v2923 = vsel %vm1485, %v2921, %v2919
        %v2926 = vcombine.low %v2922, %v2923
        %v2928 = vunpack.c.l.s4 1966171168
        %v2929 = vunpack.c.0.s8 %v2928
        %v2930 = vlaneseq
        %v2931 = vshrl.u32 %v2930, 7
        %v2932 = vsub.s32 %v2929, %v2931
        %v2933 = vrot.slane %v2926, %v2932
        %v2935 = vunpack.c.l.s4 1966171168
        %v2936 = vunpack.c.0.s8 %v2935
        %v2937 = vlaneseq
        %v2938 = vshrl.u32 %v2937, 7
        %v2939 = vsub.s32 %v2936, %v2938
        %v2940 = vrot.slane %v2933, %v2939
        %v2942 = vsel %vm1488, %v2940, 0.0
        %s2943 = sld [smem:[#allocation8 + $0x24]]
        %v2944 = vstv %s2943
        %v2945 = vmul.f32 %v2944, %v2942
        %v2946 = vadd.f32 %v2917, %v2945
        %2947 = vrot.lane.b32.xlu0 %v1891, 97
        %v2948 = vpop.permute.xlu0 %2947
        %2949 = vrot.lane.b32.xlu0 %v1895, 97
        %v2950 = vpop.permute.xlu0 %2949
        %v2951 = vsel %vm1516, %v2948, %v2950
        %v2952 = vsel %vm1516, %v2950, %v2948
        %v2955 = vcombine.low %v2951, %v2952
        %v2957 = vunpack.c.l.s4 1966171168
        %v2958 = vunpack.c.0.s8 %v2957
        %v2959 = vlaneseq
        %v2960 = vshrl.u32 %v2959, 7
        %v2961 = vsub.s32 %v2958, %v2960
        %v2962 = vrot.slane %v2955, %v2961
        %v2964 = vunpack.c.l.s4 1966171168
        %v2965 = vunpack.c.0.s8 %v2964
        %v2966 = vlaneseq
        %v2967 = vshrl.u32 %v2966, 7
        %v2968 = vsub.s32 %v2965, %v2967
        %v2969 = vrot.slane %v2962, %v2968
        %v2971 = vsel %vm1519, %v2969, 0.0
        %s2972 = sld [smem:[#allocation8 + $0x25]]
        %v2973 = vstv %s2972
        %v2974 = vmul.f32 %v2973, %v2971
        %v2975 = vadd.f32 %v2946, %v2974
        %2976 = vrot.lane.b32.xlu0 %v1891, 96
        %v2977 = vpop.permute.xlu0 %2976
        %2978 = vrot.lane.b32.xlu0 %v1895, 96
        %v2979 = vpop.permute.xlu0 %2978
        %v2980 = vsel %vm1547, %v2977, %v2979
        %v2981 = vsel %vm1547, %v2979, %v2977
        %v2984 = vcombine.low %v2980, %v2981
        %v2986 = vunpack.c.l.s4 1966171168
        %v2987 = vunpack.c.0.s8 %v2986
        %v2988 = vlaneseq
        %v2989 = vshrl.u32 %v2988, 7
        %v2990 = vsub.s32 %v2987, %v2989
        %v2991 = vrot.slane %v2984, %v2990
        %v2993 = vunpack.c.l.s4 1966171168
        %v2994 = vunpack.c.0.s8 %v2993
        %v2995 = vlaneseq
        %v2996 = vshrl.u32 %v2995, 7
        %v2997 = vsub.s32 %v2994, %v2996
        %v2998 = vrot.slane %v2991, %v2997
        %v3000 = vsel %vm1550, %v2998, 0.0
        %s3001 = sld [smem:[#allocation8 + $0x26]]
        %v3002 = vstv %s3001
        %v3003 = vmul.f32 %v3002, %v3000
        %v3004 = vadd.f32 %v2975, %v3003
        %3005 = vrot.lane.b32.xlu0 %v1891, 95
        %v3006 = vpop.permute.xlu0 %3005
        %3007 = vrot.lane.b32.xlu0 %v1895, 95
        %v3008 = vpop.permute.xlu0 %3007
        %v3009 = vsel %vm1578, %v3006, %v3008
        %v3010 = vsel %vm1578, %v3008, %v3006
        %v3013 = vcombine.low %v3009, %v3010
        %v3015 = vunpack.c.l.s4 1966171168
        %v3016 = vunpack.c.0.s8 %v3015
        %v3017 = vlaneseq
        %v3018 = vshrl.u32 %v3017, 7
        %v3019 = vsub.s32 %v3016, %v3018
        %v3020 = vrot.slane %v3013, %v3019
        %v3022 = vunpack.c.l.s4 1966171168
        %v3023 = vunpack.c.0.s8 %v3022
        %v3024 = vlaneseq
        %v3025 = vshrl.u32 %v3024, 7
        %v3026 = vsub.s32 %v3023, %v3025
        %v3027 = vrot.slane %v3020, %v3026
        %v3029 = vsel %vm1581, %v3027, 0.0
        %s3030 = sld [smem:[#allocation8 + $0x27]]
        %v3031 = vstv %s3030
        %v3032 = vmul.f32 %v3031, %v3029
        %v3033 = vadd.f32 %v3004, %v3032
        %3034 = vrot.lane.b32.xlu0 %v1891, 94
        %v3035 = vpop.permute.xlu0 %3034
        %3036 = vrot.lane.b32.xlu0 %v1895, 94
        %v3037 = vpop.permute.xlu0 %3036
        %v3038 = vsel %vm1609, %v3035, %v3037
        %v3039 = vsel %vm1609, %v3037, %v3035
        %v3042 = vcombine.low %v3038, %v3039
        %v3044 = vunpack.c.l.s4 1966171168
        %v3045 = vunpack.c.0.s8 %v3044
        %v3046 = vlaneseq
        %v3047 = vshrl.u32 %v3046, 7
        %v3048 = vsub.s32 %v3045, %v3047
        %v3049 = vrot.slane %v3042, %v3048
        %v3051 = vunpack.c.l.s4 1966171168
        %v3052 = vunpack.c.0.s8 %v3051
        %v3053 = vlaneseq
        %v3054 = vshrl.u32 %v3053, 7
        %v3055 = vsub.s32 %v3052, %v3054
        %v3056 = vrot.slane %v3049, %v3055
        %v3058 = vsel %vm1612, %v3056, 0.0
        %s3059 = sld [smem:[#allocation8 + $0x28]]
        %v3060 = vstv %s3059
        %v3061 = vmul.f32 %v3060, %v3058
        %v3062 = vadd.f32 %v3033, %v3061
        %3063 = vrot.lane.b32.xlu0 %v1891, 93
        %v3064 = vpop.permute.xlu0 %3063
        %3065 = vrot.lane.b32.xlu0 %v1895, 93
        %v3066 = vpop.permute.xlu0 %3065
        %v3067 = vsel %vm1640, %v3064, %v3066
        %v3068 = vsel %vm1640, %v3066, %v3064
        %v3071 = vcombine.low %v3067, %v3068
        %v3073 = vunpack.c.l.s4 1966171168
        %v3074 = vunpack.c.0.s8 %v3073
        %v3075 = vlaneseq
        %v3076 = vshrl.u32 %v3075, 7
        %v3077 = vsub.s32 %v3074, %v3076
        %v3078 = vrot.slane %v3071, %v3077
        %v3080 = vunpack.c.l.s4 1966171168
        %v3081 = vunpack.c.0.s8 %v3080
        %v3082 = vlaneseq
        %v3083 = vshrl.u32 %v3082, 7
        %v3084 = vsub.s32 %v3081, %v3083
        %v3085 = vrot.slane %v3078, %v3084
        %v3087 = vsel %vm1643, %v3085, 0.0
        %s3088 = sld [smem:[#allocation8 + $0x29]]
        %v3089 = vstv %s3088
        %v3090 = vmul.f32 %v3089, %v3087
        %v3091 = vadd.f32 %v3062, %v3090
        %3092 = vrot.lane.b32.xlu0 %v1891, 83
        %v3093 = vpop.permute.xlu0 %3092
        %3094 = vrot.lane.b32.xlu0 %v1895, 83
        %v3095 = vpop.permute.xlu0 %3094
        %v3096 = vsel %vm1671, %v3093, %v3095
        %v3097 = vsel %vm1671, %v3095, %v3093
        %v3100 = vcombine.low %v3096, %v3097
        %v3102 = vunpack.c.l.s4 1966171168
        %v3103 = vunpack.c.0.s8 %v3102
        %v3104 = vlaneseq
        %v3105 = vshrl.u32 %v3104, 7
        %v3106 = vsub.s32 %v3103, %v3105
        %v3107 = vrot.slane %v3100, %v3106
        %v3109 = vunpack.c.l.s4 1966171168
        %v3110 = vunpack.c.0.s8 %v3109
        %v3111 = vlaneseq
        %v3112 = vshrl.u32 %v3111, 7
        %v3113 = vsub.s32 %v3110, %v3112
        %v3114 = vrot.slane %v3107, %v3113
        %v3116 = vsel %vm1674, %v3114, 0.0
        %s3117 = sld [smem:[#allocation8 + $0x2a]]
        %v3118 = vstv %s3117
        %v3119 = vmul.f32 %v3118, %v3116
        %v3120 = vadd.f32 %v3091, %v3119
        %3121 = vrot.lane.b32.xlu0 %v1891, 82
        %v3122 = vpop.permute.xlu0 %3121
        %3123 = vrot.lane.b32.xlu0 %v1895, 82
        %v3124 = vpop.permute.xlu0 %3123
        %v3125 = vsel %vm1702, %v3122, %v3124
        %v3126 = vsel %vm1702, %v3124, %v3122
        %v3129 = vcombine.low %v3125, %v3126
        %v3131 = vunpack.c.l.s4 1966171168
        %v3132 = vunpack.c.0.s8 %v3131
        %v3133 = vlaneseq
        %v3134 = vshrl.u32 %v3133, 7
        %v3135 = vsub.s32 %v3132, %v3134
        %v3136 = vrot.slane %v3129, %v3135
        %v3138 = vunpack.c.l.s4 1966171168
        %v3139 = vunpack.c.0.s8 %v3138
        %v3140 = vlaneseq
        %v3141 = vshrl.u32 %v3140, 7
        %v3142 = vsub.s32 %v3139, %v3141
        %v3143 = vrot.slane %v3136, %v3142
        %v3145 = vsel %vm1705, %v3143, 0.0
        %s3146 = sld [smem:[#allocation8 + $0x2b]]
        %v3147 = vstv %s3146
        %v3148 = vmul.f32 %v3147, %v3145
        %v3149 = vadd.f32 %v3120, %v3148
        %3150 = vrot.lane.b32.xlu0 %v1891, 81
        %v3151 = vpop.permute.xlu0 %3150
        %3152 = vrot.lane.b32.xlu0 %v1895, 81
        %v3153 = vpop.permute.xlu0 %3152
        %v3154 = vsel %vm1733, %v3151, %v3153
        %v3155 = vsel %vm1733, %v3153, %v3151
        %v3158 = vcombine.low %v3154, %v3155
        %v3160 = vunpack.c.l.s4 1966171168
        %v3161 = vunpack.c.0.s8 %v3160
        %v3162 = vlaneseq
        %v3163 = vshrl.u32 %v3162, 7
        %v3164 = vsub.s32 %v3161, %v3163
        %v3165 = vrot.slane %v3158, %v3164
        %v3167 = vunpack.c.l.s4 1966171168
        %v3168 = vunpack.c.0.s8 %v3167
        %v3169 = vlaneseq
        %v3170 = vshrl.u32 %v3169, 7
        %v3171 = vsub.s32 %v3168, %v3170
        %v3172 = vrot.slane %v3165, %v3171
        %v3174 = vsel %vm1736, %v3172, 0.0
        %s3175 = sld [smem:[#allocation8 + $0x2c]]
        %v3176 = vstv %s3175
        %v3177 = vmul.f32 %v3176, %v3174
        %v3178 = vadd.f32 %v3149, %v3177
        %3179 = vrot.lane.b32.xlu0 %v1891, 80
        %v3180 = vpop.permute.xlu0 %3179
        %3181 = vrot.lane.b32.xlu0 %v1895, 80
        %v3182 = vpop.permute.xlu0 %3181
        %v3183 = vsel %vm1764, %v3180, %v3182
        %v3184 = vsel %vm1764, %v3182, %v3180
        %v3187 = vcombine.low %v3183, %v3184
        %v3189 = vunpack.c.l.s4 1966171168
        %v3190 = vunpack.c.0.s8 %v3189
        %v3191 = vlaneseq
        %v3192 = vshrl.u32 %v3191, 7
        %v3193 = vsub.s32 %v3190, %v3192
        %v3194 = vrot.slane %v3187, %v3193
        %v3196 = vunpack.c.l.s4 1966171168
        %v3197 = vunpack.c.0.s8 %v3196
        %v3198 = vlaneseq
        %v3199 = vshrl.u32 %v3198, 7
        %v3200 = vsub.s32 %v3197, %v3199
        %v3201 = vrot.slane %v3194, %v3200
        %v3203 = vsel %vm1767, %v3201, 0.0
        %s3204 = sld [smem:[#allocation8 + $0x2d]]
        %v3205 = vstv %s3204
        %v3206 = vmul.f32 %v3205, %v3203
        %v3207 = vadd.f32 %v3178, %v3206
        %3208 = vrot.lane.b32.xlu0 %v1891, 79
        %v3209 = vpop.permute.xlu0 %3208
        %3210 = vrot.lane.b32.xlu0 %v1895, 79
        %v3211 = vpop.permute.xlu0 %3210
        %v3212 = vsel %vm1795, %v3209, %v3211
        %v3213 = vsel %vm1795, %v3211, %v3209
        %v3216 = vcombine.low %v3212, %v3213
        %v3218 = vunpack.c.l.s4 1966171168
        %v3219 = vunpack.c.0.s8 %v3218
        %v3220 = vlaneseq
        %v3221 = vshrl.u32 %v3220, 7
        %v3222 = vsub.s32 %v3219, %v3221
        %v3223 = vrot.slane %v3216, %v3222
        %v3225 = vunpack.c.l.s4 1966171168
        %v3226 = vunpack.c.0.s8 %v3225
        %v3227 = vlaneseq
        %v3228 = vshrl.u32 %v3227, 7
        %v3229 = vsub.s32 %v3226, %v3228
        %v3230 = vrot.slane %v3223, %v3229
        %v3232 = vsel %vm1798, %v3230, 0.0
        %s3233 = sld [smem:[#allocation8 + $0x2e]]
        %v3234 = vstv %s3233
        %v3235 = vmul.f32 %v3234, %v3232
        %v3236 = vadd.f32 %v3207, %v3235
        %3237 = vrot.lane.b32.xlu0 %v1891, 78
        %v3238 = vpop.permute.xlu0 %3237
        %3239 = vrot.lane.b32.xlu0 %v1895, 78
        %v3240 = vpop.permute.xlu0 %3239
        %v3241 = vsel %vm1826, %v3238, %v3240
        %v3242 = vsel %vm1826, %v3240, %v3238
        %v3245 = vcombine.low %v3241, %v3242
        %v3247 = vunpack.c.l.s4 1966171168
        %v3248 = vunpack.c.0.s8 %v3247
        %v3249 = vlaneseq
        %v3250 = vshrl.u32 %v3249, 7
        %v3251 = vsub.s32 %v3248, %v3250
        %v3252 = vrot.slane %v3245, %v3251
        %v3254 = vunpack.c.l.s4 1966171168
        %v3255 = vunpack.c.0.s8 %v3254
        %v3256 = vlaneseq
        %v3257 = vshrl.u32 %v3256, 7
        %v3258 = vsub.s32 %v3255, %v3257
        %v3259 = vrot.slane %v3252, %v3258
        %v3261 = vsel %vm1829, %v3259, 0.0
        %s3262 = sld [smem:[#allocation8 + $0x2f]]
        %v3263 = vstv %s3262
        %v3264 = vmul.f32 %v3263, %v3261
        %v3265 = vadd.f32 %v3236, %v3264
        %3266 = vrot.lane.b32.xlu0 %v1891, 77
        %v3267 = vpop.permute.xlu0 %3266
        %3268 = vrot.lane.b32.xlu0 %v1895, 77
        %v3269 = vpop.permute.xlu0 %3268
        %v3270 = vsel %vm1857, %v3267, %v3269
        %v3271 = vsel %vm1857, %v3269, %v3267
        %v3274 = vcombine.low %v3270, %v3271
        %v3276 = vunpack.c.l.s4 1966171168
        %v3277 = vunpack.c.0.s8 %v3276
        %v3278 = vlaneseq
        %v3279 = vshrl.u32 %v3278, 7
        %v3280 = vsub.s32 %v3277, %v3279
        %v3281 = vrot.slane %v3274, %v3280
        %v3283 = vunpack.c.l.s4 1966171168
        %v3284 = vunpack.c.0.s8 %v3283
        %v3285 = vlaneseq
        %v3286 = vshrl.u32 %v3285, 7
        %v3287 = vsub.s32 %v3284, %v3286
        %v3288 = vrot.slane %v3281, %v3287
        %v3290 = vsel %vm1860, %v3288, 0.0
        %s3291 = sld [smem:[#allocation8 + $0x30]]
        %v3292 = vstv %s3291
        %v3293 = vmul.f32 %v3292, %v3290
        %v3294 = vadd.f32 %v3265, %v3293
        %v3295 = vxor.u32 %v3294, 2147483648
        %v3296 = vmul.f32 %v3295, 1.442695
        %v3297 = vpow.pop %v3296
        %v3298 = vadd.f32 %v3297, 1.0
        %v3299 = vrcp.pop %v3298
        %v3300 = vmul.f32 1.0, %v3299
        %v3301 = vadd.f32 %v3300, 1.0
        %v3303 = vlaneseq
        %v3304 = vshrl.u32 %v3303, 7
        %v3305 = vsub.s32 0, %v3304
        %v3306 = vrot.slane %v3301, %v3305
        %v3307 = vlaneseq
        %v3308 = vshrl.u32 %v3307, 7
        %v3309 = vsub.s32 1, %v3308
        %v3310 = vrot.slane %v3301, %v3309
        %v3311 = vcombine.low %v3306, %v3310
        %v3313 = vmul.f32 %v300, %v3311
        %s3314 = smul.addr %s297, 4
        %s3315 = scalar_lea.vmem %s296, %s3314 [#allocation11]
        %3316 = vst [vmem:[%s3315] sm:$0xff] %v3313
        %s3317 = sand.u32 %s166, 1
        %s3318 = scalar_lea.sflag [#allocation6], %s3317
        %s3319 = sand.u32 %s166, 1
        %s3320 = smul.addr %s3319, 8
        %s3321 = scalar_lea.vmem [#allocation11], %s3320
        // Predicated region
        $region57: #{tpu_custom_call.1} parent=43 // pred_check
          %p3322 = pneg %p176
        $region58: #{tpu_custom_call.1} parent=43 // pred_check_branch
          %3324 = sbr.rel (%p3322) target = $region60
        $region59: #{tpu_custom_call.1} parent=43 // pred_region
          %s3326 = ssub.s32 128, 128
          %3327 = vsyncadd %s3318, %s3326
          %s3328 = smul.addr %s27, 2
          %s3329 = smul.addr %s3328, 64
          %s3330 = scalar_lea.hbm %s6, %s3329
          %s3332 = sshll.u32 %s3321, 4
          %s3333 = int_to_ptr.vmem [resolvable:$true] %s3332
          %3335 = dma.vmem_to_hbm [thread:$0]  %s3333, 128, %s3330, %s3318
        $region60: #{tpu_custom_call.1} parent=43 // pred_fallthru
          _
      $region44: #{tpu_custom_call.1} parent=5 // pred_fallthru
        _
      %p3336 = scmp.le.s32.totalorder 2, %s22
      // Predicated region
      $region61: #{tpu_custom_call.1} parent=5 // pred_check
        %p3337 = pneg %p3336
      $region62: #{tpu_custom_call.1} parent=5 // pred_check_branch
        %3339 = sbr.rel (%p3337) target = $region64
      $region63: #{tpu_custom_call.1} parent=5 // pred_region
        %s3340 = ssub.s32 %s22, 2
        // Predicated region
        $region65: #{tpu_custom_call.1} parent=63 // pred_check
          %p3341 = pneg %p182
        $region66: #{tpu_custom_call.1} parent=63 // pred_check_branch
          %3343 = sbr.rel (%p3341) target = $region68
        $region67: #{tpu_custom_call.1} parent=63 // pred_region
          %s3344 = sand.u32 %s167, 1
          %s3345 = scalar_lea.sflag [#allocation6], %s3344
          %s3346 = sand.u32 %s167, 1
          %s3347 = smul.addr %s3346, 8
          %s3348 = scalar_lea.vmem [#allocation11], %s3347
          %3349 = dma.done %s3345, 128
        $region68: #{tpu_custom_call.1} parent=63 // pred_fallthru
          _
      $region64: #{tpu_custom_call.1} parent=5 // pred_fallthru
        _
    $region6: #{tpu_custom_call.1} parent=1 // loop_footer
      %s26 = sadd.s32 1, %s22
    $region7: #{tpu_custom_call.1} parent=1 // loop_footer_branch
      %21 = sbr.rel target = $region3
    $region8: #{tpu_custom_call.1} parent=1 // loop_exit
      _
    %3350 = vsyncpa [#allocation5], 1
    %s3351 = scalar_lea.sflag [#allocation5], 1
    %3352 = vsyncpa %s3351, 1
    %3353 = vsyncpa [#allocation6], 1
    %s3354 = scalar_lea.sflag [#allocation6], 1
    %3355 = vsyncpa %s3354, 1
    %3356 = vsyncpa [#allocation7], 1
    %s3357 = scalar_lea.sflag [#allocation7], 1
    %3358 = vsyncpa %s3357, 1
    %3359 = vsyncpa [#allocation9], 1

</llo_original>
